<compile_context>
chip_gen: v7x
topology: tpu7x:2x2x1
jax: 0.10.0
libtpu: 0.0.40
codegen_flags: <defaults>
</compile_context>

<pallas_src>
import functools
import math

import numpy as np
import jax
import jax.numpy as jnp
from jax.experimental import pallas as pl
from jax.experimental.pallas import tpu as pltpu


class NestedTensor:
    def __init__(self, tensors, mask):
        self.tensors = tensors
        self.mask = mask


def _round_up(x, m):
    return ((x + m - 1) // m) * m


def _default_vmem_limit_bytes():
    # ~75% of physical VMEM: 48 MiB on v7x (64 MiB), 96 MiB on v5e/v6e (128 MiB).
    try:
        cap = int(pltpu.get_tpu_info().vmem_capacity_bytes)
    except Exception:
        cap = 64 * 1024 * 1024
    return min((cap * 3) // 4, 100 * 1024 * 1024)


_VMEM_LIMIT_BYTES = _default_vmem_limit_bytes()


# ---------------------------------------------------------------------------
# Pallas kernel: one output row of a 3x3 / stride-2 / pad-1 conv + bias + ReLU.
# Inputs are the 4 parity-split ("space-to-depth") quarter images, so every
# filter tap is a contiguous slice — no strided reads, no HBM im2col.
#
#   qXY_ref : (1, Ho+1, Wo+1, Cin) bf16   full quarter image for batch n (resident)
#   w_ref   : (9, Cin, Coutp)      bf16   per-tap weights, kidx = kh*3 + kw
#   b_ref   : (1, Coutp)           f32
#   o_ref   : (1, 1, Wo, Coutp)    bf16   one output row (lane-dense, Coutp % 128 == 0)
# ---------------------------------------------------------------------------
def _conv3x3s2_relu_kernel(q00_ref, q01_ref, q10_ref, q11_ref, w_ref, b_ref, o_ref):
    Wo = o_ref.shape[2]
    r = pl.program_id(1)                       # output row within the image

    # The 6 distinct quarter rows needed by output row r.
    # key = (row parity kh%2, col parity kw%2, dh = kh//2)
    rows = {
        (0, 0, 0): q00_ref[0, r],
        (0, 1, 0): q01_ref[0, r],
        (0, 0, 1): q00_ref[0, r + 1],
        (0, 1, 1): q01_ref[0, r + 1],
        (1, 0, 0): q10_ref[0, r],
        (1, 1, 0): q11_ref[0, r],
    }

    acc = None
    for kh in range(3):
        for kw in range(3):
            row = rows[(kh % 2, kw % 2, kh // 2)]            # (Wo+1, Cin) bf16
            tap = row[kw // 2: kw // 2 + Wo, :]              # (Wo, Cin), contiguous
            part = jnp.dot(tap, w_ref[kh * 3 + kw],
                           preferred_element_type=jnp.float32)  # (Wo, Coutp) f32
            acc = part if acc is None else acc + part

    o_ref[0, 0] = jnp.maximum(acc + b_ref[...], 0.0).astype(o_ref.dtype)


def conv3x3s2_relu(x_nhwc, w_hwio, b):
    """3x3 conv, stride 2, pad 1, fused bias + ReLU.  x_nhwc must be bf16, H/W even.

    Wrapper work is only: spatial pad + parity split (~1x activation bytes) and the
    per-tap weight reshape; all 9 taps are formed in-kernel from VMEM-resident data.
    """
    N, H, W, Cin = x_nhwc.shape
    KH, KW, wc_in, Cout = w_hwio.shape
    assert (KH, KW) == (3, 3) and wc_in == Cin and H % 2 == 0 and W % 2 == 0
    assert x_nhwc.dtype == jnp.bfloat16
    Ho, Wo = H // 2, W // 2

    # 256-wide lane tiles once Cout can feed the 256-wide v6e/v7x MXU; 128 otherwise
    # (matches the v5e MXU and avoids 2x padding of small channel counts).
    Coutp = _round_up(Cout, 256) if Cout >= 128 else _round_up(Cout, 128)

    xp = jnp.pad(x_nhwc, ((0, 0), (1, 1), (1, 1), (0, 0)))           # (N, H+2, W+2, Cin) bf16
    # Stride-2 parity split: quarter[ph][pw][n,i,j,c] = xp[n, 2i+ph, 2j+pw, c]
    quarters = [xp[:, ph::2, pw::2, :] for ph in (0, 1) for pw in (0, 1)]
    Hq, Wq = Ho + 1, Wo + 1                                          # each quarter's spatial size

    w9 = w_hwio.reshape(9, Cin, Cout).astype(jnp.bfloat16)
    w9 = jnp.pad(w9, ((0, 0), (0, 0), (0, Coutp - Cout)))
    b2 = jnp.pad(b.astype(jnp.float32).reshape(1, Cout), ((0, 0), (0, Coutp - Cout)))

    q_spec = pl.BlockSpec((1, Hq, Wq, Cin), lambda n, r: (n, 0, 0, 0))

    out = pl.pallas_call(
        _conv3x3s2_relu_kernel,
        out_shape=jax.ShapeDtypeStruct((N, Ho, Wo, Coutp), jnp.bfloat16),
        grid=(N, Ho),
        in_specs=[q_spec, q_spec, q_spec, q_spec,
                  pl.BlockSpec((9, Cin, Coutp), lambda n, r: (0, 0, 0)),   # weights resident
                  pl.BlockSpec((1, Coutp), lambda n, r: (0, 0))],          # bias resident
        out_specs=pl.BlockSpec((1, 1, Wo, Coutp), lambda n, r: (n, r, 0, 0)),
        compiler_params=pltpu.CompilerParams(
            dimension_semantics=("parallel", "parallel"),   # >= 2 steps -> both TCs on v7x
            vmem_limit_bytes=_VMEM_LIMIT_BYTES,
        ),
    )(*quarters, w9, b2)

    # Padded output channels are exact zeros; slice only when Cout < Coutp.
    return out if Coutp == Cout else out[..., :Cout]         # (N, Ho, Wo, Cout) bf16


# ---------------------------------------------------------------------------
# Mask nearest-neighbor resize (matches F.interpolate(mode='nearest')) — pure
# index selection, kept as XLA gather glue.
# ---------------------------------------------------------------------------
def interpolate_mask_nearest(mask_nhw, out_hw):
    N, H, W = mask_nhw.shape
    Ho, Wo = out_hw
    ih = (np.arange(Ho) * (H / Ho)).astype(np.int32)
    iw = (np.arange(Wo) * (W / Wo)).astype(np.int32)
    return mask_nhw[:, ih][:, :, iw].astype(bool)


# ---------------------------------------------------------------------------
# Synthetic backbone params (block1..block4), deterministic init
# ---------------------------------------------------------------------------
def init_backbone_params(key, cin, channels=(8, 16, 32, 64)):
    params = []
    c = cin
    for cout in channels:
        key, k1, k2 = jax.random.split(key, 3)
        fan_in = 3 * 3 * c
        w = jax.random.normal(k1, (3, 3, c, cout), jnp.float32) / math.sqrt(fan_in)
        b = 0.01 * jax.random.normal(k2, (cout,), jnp.float32)
        params.append((w, b))
        c = cout
    return tuple(params)


# ---------------------------------------------------------------------------
# BackboneBase.forward equivalent (whole thing jitted so glue ops fuse)
# ---------------------------------------------------------------------------
@functools.partial(jax.jit, static_argnames=("return_interm_layers",))
def _backbone_apply(params, imgs_nchw, mask_nhw, return_interm_layers=True):
    # TODO(synk): requires_grad_ freezing / IntermediateLayerGetter bookkeeping are
    # training/module plumbing with no runtime compute to translate.
    x = jnp.transpose(imgs_nchw, (0, 2, 3, 1)).astype(jnp.bfloat16)   # cast BEFORE pad/slice
    feats = {}
    for i, (w, b) in enumerate(params):
        x = conv3x3s2_relu(x, w, b)        # bf16 in -> bf16 out; no re-cast between blocks
        feats[f"block{i + 1}"] = x

    if return_interm_layers:
        return_layers = {"block1": "0", "block2": "1", "block3": "2", "block4": "3"}
    else:
        return_layers = {"block4": "0"}

    out = {}
    for name, key in return_layers.items():
        xf = feats[name]                                              # (N, Ho, Wo, C) bf16
        feat = jnp.transpose(xf, (0, 3, 1, 2)).astype(jnp.float32)    # NCHW f32 at API boundary
        m = interpolate_mask_nearest(mask_nhw, xf.shape[1:3])
        out[key] = (feat, m)
    return out


def backbone_base_forward(params, tensor_list: NestedTensor, return_interm_layers=True):
    raw = _backbone_apply(params, tensor_list.tensors, tensor_list.mask,
                          return_interm_layers=return_interm_layers)
    return {k: NestedTensor(f, m) for k, (f, m) in raw.items()}


# ---------------------------------------------------------------------------
# Pure-XLA reference with identical bf16 rounding points (weights + inter-block
# activations); only the f32 accumulation order differs.
# ---------------------------------------------------------------------------
def _conv_ref(x_nhwc_f32, w, b):
    y = jax.lax.conv_general_dilated(
        x_nhwc_f32, w.astype(jnp.bfloat16).astype(jnp.float32),
        window_strides=(2, 2), padding=((1, 1), (1, 1)),
        dimension_numbers=("NHWC", "HWIO", "NHWC"),
        precision=jax.lax.Precision.HIGHEST)
    return jnp.maximum(y + b.astype(jnp.float32), 0.0)


def _backbone_ref(params, imgs_nchw):
    x = jnp.transpose(imgs_nchw, (0, 2, 3, 1)).astype(jnp.bfloat16)
    outs = []
    for (w, b) in params:
        y = _conv_ref(x.astype(jnp.float32), w, b)
        x = y.astype(jnp.bfloat16)
        outs.append(x.astype(jnp.float32))
    return outs


if __name__ == "__main__":
    key = jax.random.PRNGKey(0)
    k_img, k_mask, k_params = jax.random.split(key, 3)

    N, Cin, H, W = 2, 4, 16, 16
    imgs = jax.random.normal(k_img, (N, Cin, H, W), jnp.float32)
    # padding mask: True where padded (DETR convention)
    mask = jax.random.uniform(k_mask, (N, H, W)) > 0.7
    tensor_list = NestedTensor(imgs, mask)

    params = init_backbone_params(k_params, Cin)              # num_channels = 64
    out = backbone_base_forward(params, tensor_list, return_interm_layers=True)

    for name, nt in out.items():
        jax.block_until_ready(nt.tensors)
        jax.block_until_ready(nt.mask)
        assert nt.tensors.shape[0] == N
        assert nt.mask.shape == (N,) + nt.tensors.shape[-2:]
        assert nt.mask.dtype == jnp.bool_
        assert bool(jnp.all(jnp.isfinite(nt.tensors)))

    # Numerical check of block1 AND block4 (4 rounds of bf16 rounding accumulate).
    refs = _backbone_ref(params, imgs)
    got1 = jnp.transpose(out["0"].tensors, (0, 2, 3, 1))
    got4 = jnp.transpose(out["3"].tensors, (0, 2, 3, 1))
    d1 = float(jnp.max(jnp.abs(refs[0] - got1)))
    d4 = float(jnp.max(jnp.abs(refs[3] - got4)))
    assert d1 < 2e-2, f"block1 mismatch, max|diff|={d1}"
    assert d4 < 5e-2, f"block4 mismatch, max|diff|={d4}"

    print("KERNEL_OK")
</pallas_src>

<mosaic_0001>
module attributes {stable_mosaic.version = 11 : i64} {
  func.func @_conv3x3s2_relu_kernel(%arg0: i32, %arg1: i32, %arg2: memref<1x9x9x4xbf16, #tpu.memory_space<vmem>>, %arg3: memref<1x9x9x4xbf16, #tpu.memory_space<vmem>>, %arg4: memref<1x9x9x4xbf16, #tpu.memory_space<vmem>>, %arg5: memref<1x9x9x4xbf16, #tpu.memory_space<vmem>>, %arg6: memref<9x4x128xbf16, #tpu.memory_space<vmem>>, %arg7: memref<1x128xf32, #tpu.memory_space<vmem>>, %arg8: memref<1x1x8x128xbf16, #tpu.memory_space<vmem>>) attributes {dimension_semantics = [#tpu.dimension_semantics<parallel>, #tpu.dimension_semantics<parallel>], iteration_bounds = array<i64: 2, 8>, scalar_prefetch = 0 : i64, scratch_operands = 0 : i64, tpu.core_type = #tpu.core_type<tc>, window_params = [{transform_indices = @transform_0, window_bounds = array<i64: 1, 9, 9, 4>}, {transform_indices = @transform_1, window_bounds = array<i64: 1, 9, 9, 4>}, {transform_indices = @transform_2, window_bounds = array<i64: 1, 9, 9, 4>}, {transform_indices = @transform_3, window_bounds = array<i64: 1, 9, 9, 4>}, {pipeline_mode = #tpu.pipeline_mode<synchronous>, transform_indices = @transform_4, window_bounds = array<i64: 9, 4, 128>}, {pipeline_mode = #tpu.pipeline_mode<synchronous>, transform_indices = @transform_5, window_bounds = array<i64: 1, 128>}, {transform_indices = @transform_6, window_bounds = array<i64: 1, 1, 8, 128>}]} {
    %c0 = arith.constant 0 : index
    %0 = arith.index_cast %arg1 : i32 to index
    %c0_0 = arith.constant 0 : index
    %c0_1 = arith.constant 0 : index
    %1 = vector.load %arg2[%c0, %0, %c0_0, %c0_1] : memref<1x9x9x4xbf16, #tpu.memory_space<vmem>>, vector<1x1x9x4xbf16>
    %2 = vector.shape_cast %1 : vector<1x1x9x4xbf16> to vector<9x4xbf16>
    %c0_2 = arith.constant 0 : index
    %3 = arith.index_cast %arg1 : i32 to index
    %c0_3 = arith.constant 0 : index
    %c0_4 = arith.constant 0 : index
    %4 = vector.load %arg3[%c0_2, %3, %c0_3, %c0_4] : memref<1x9x9x4xbf16, #tpu.memory_space<vmem>>, vector<1x1x9x4xbf16>
    %5 = vector.shape_cast %4 : vector<1x1x9x4xbf16> to vector<9x4xbf16>
    %c1_i32 = arith.constant 1 : i32
    %6 = arith.addi %arg1, %c1_i32 : i32
    %c0_5 = arith.constant 0 : index
    %7 = arith.index_cast %6 : i32 to index
    %c0_6 = arith.constant 0 : index
    %c0_7 = arith.constant 0 : index
    %8 = vector.load %arg2[%c0_5, %7, %c0_6, %c0_7] : memref<1x9x9x4xbf16, #tpu.memory_space<vmem>>, vector<1x1x9x4xbf16>
    %9 = vector.shape_cast %8 : vector<1x1x9x4xbf16> to vector<9x4xbf16>
    %c1_i32_8 = arith.constant 1 : i32
    %10 = arith.addi %arg1, %c1_i32_8 : i32
    %c0_9 = arith.constant 0 : index
    %11 = arith.index_cast %10 : i32 to index
    %c0_10 = arith.constant 0 : index
    %c0_11 = arith.constant 0 : index
    %12 = vector.load %arg3[%c0_9, %11, %c0_10, %c0_11] : memref<1x9x9x4xbf16, #tpu.memory_space<vmem>>, vector<1x1x9x4xbf16>
    %13 = vector.shape_cast %12 : vector<1x1x9x4xbf16> to vector<9x4xbf16>
    %c0_12 = arith.constant 0 : index
    %14 = arith.index_cast %arg1 : i32 to index
    %c0_13 = arith.constant 0 : index
    %c0_14 = arith.constant 0 : index
    %15 = vector.load %arg4[%c0_12, %14, %c0_13, %c0_14] : memref<1x9x9x4xbf16, #tpu.memory_space<vmem>>, vector<1x1x9x4xbf16>
    %16 = vector.shape_cast %15 : vector<1x1x9x4xbf16> to vector<9x4xbf16>
    %c0_15 = arith.constant 0 : index
    %17 = arith.index_cast %arg1 : i32 to index
    %c0_16 = arith.constant 0 : index
    %c0_17 = arith.constant 0 : index
    %18 = vector.load %arg5[%c0_15, %17, %c0_16, %c0_17] : memref<1x9x9x4xbf16, #tpu.memory_space<vmem>>, vector<1x1x9x4xbf16>
    %19 = vector.shape_cast %18 : vector<1x1x9x4xbf16> to vector<9x4xbf16>
    %20 = vector.extract_strided_slice %2 {offsets = [0, 0], sizes = [8, 4], strides = [1, 1]} : vector<9x4xbf16> to vector<8x4xbf16>
    %c0_18 = arith.constant 0 : index
    %c0_19 = arith.constant 0 : index
    %c0_20 = arith.constant 0 : index
    %21 = vector.load %arg6[%c0_18, %c0_19, %c0_20] : memref<9x4x128xbf16, #tpu.memory_space<vmem>>, vector<1x4x128xbf16>
    %22 = vector.shape_cast %21 : vector<1x4x128xbf16> to vector<4x128xbf16>
    %cst = arith.constant dense<0.000000e+00> : vector<8x128xf32>
    %23 = tpu.matmul %20, %22, %cst {dimension_numbers = #tpu.dot_dimension_numbers<[1], [0], [0], [1], [0, 0, 1, 1], [], []>} : vector<8x4xbf16>, vector<4x128xbf16>, vector<8x128xf32> -> vector<8x128xf32>
    %24 = vector.extract_strided_slice %5 {offsets = [0, 0], sizes = [8, 4], strides = [1, 1]} : vector<9x4xbf16> to vector<8x4xbf16>
    %c1 = arith.constant 1 : index
    %c0_21 = arith.constant 0 : index
    %c0_22 = arith.constant 0 : index
    %25 = vector.load %arg6[%c1, %c0_21, %c0_22] : memref<9x4x128xbf16, #tpu.memory_space<vmem>>, vector<1x4x128xbf16>
    %26 = vector.shape_cast %25 : vector<1x4x128xbf16> to vector<4x128xbf16>
    %cst_23 = arith.constant dense<0.000000e+00> : vector<8x128xf32>
    %27 = tpu.matmul %24, %26, %cst_23 {dimension_numbers = #tpu.dot_dimension_numbers<[1], [0], [0], [1], [0, 0, 1, 1], [], []>} : vector<8x4xbf16>, vector<4x128xbf16>, vector<8x128xf32> -> vector<8x128xf32>
    %28 = arith.addf %23, %27 : vector<8x128xf32>
    %29 = vector.extract_strided_slice %2 {offsets = [1, 0], sizes = [8, 4], strides = [1, 1]} : vector<9x4xbf16> to vector<8x4xbf16>
    %c2 = arith.constant 2 : index
    %c0_24 = arith.constant 0 : index
    %c0_25 = arith.constant 0 : index
    %30 = vector.load %arg6[%c2, %c0_24, %c0_25] : memref<9x4x128xbf16, #tpu.memory_space<vmem>>, vector<1x4x128xbf16>
    %31 = vector.shape_cast %30 : vector<1x4x128xbf16> to vector<4x128xbf16>
    %cst_26 = arith.constant dense<0.000000e+00> : vector<8x128xf32>
    %32 = tpu.matmul %29, %31, %cst_26 {dimension_numbers = #tpu.dot_dimension_numbers<[1], [0], [0], [1], [0, 0, 1, 1], [], []>} : vector<8x4xbf16>, vector<4x128xbf16>, vector<8x128xf32> -> vector<8x128xf32>
    %33 = arith.addf %28, %32 : vector<8x128xf32>
    %34 = vector.extract_strided_slice %16 {offsets = [0, 0], sizes = [8, 4], strides = [1, 1]} : vector<9x4xbf16> to vector<8x4xbf16>
    %c3 = arith.constant 3 : index
    %c0_27 = arith.constant 0 : index
    %c0_28 = arith.constant 0 : index
    %35 = vector.load %arg6[%c3, %c0_27, %c0_28] : memref<9x4x128xbf16, #tpu.memory_space<vmem>>, vector<1x4x128xbf16>
    %36 = vector.shape_cast %35 : vector<1x4x128xbf16> to vector<4x128xbf16>
    %cst_29 = arith.constant dense<0.000000e+00> : vector<8x128xf32>
    %37 = tpu.matmul %34, %36, %cst_29 {dimension_numbers = #tpu.dot_dimension_numbers<[1], [0], [0], [1], [0, 0, 1, 1], [], []>} : vector<8x4xbf16>, vector<4x128xbf16>, vector<8x128xf32> -> vector<8x128xf32>
    %38 = arith.addf %33, %37 : vector<8x128xf32>
    %39 = vector.extract_strided_slice %19 {offsets = [0, 0], sizes = [8, 4], strides = [1, 1]} : vector<9x4xbf16> to vector<8x4xbf16>
    %c4 = arith.constant 4 : index
    %c0_30 = arith.constant 0 : index
    %c0_31 = arith.constant 0 : index
    %40 = vector.load %arg6[%c4, %c0_30, %c0_31] : memref<9x4x128xbf16, #tpu.memory_space<vmem>>, vector<1x4x128xbf16>
    %41 = vector.shape_cast %40 : vector<1x4x128xbf16> to vector<4x128xbf16>
    %cst_32 = arith.constant dense<0.000000e+00> : vector<8x128xf32>
    %42 = tpu.matmul %39, %41, %cst_32 {dimension_numbers = #tpu.dot_dimension_numbers<[1], [0], [0], [1], [0, 0, 1, 1], [], []>} : vector<8x4xbf16>, vector<4x128xbf16>, vector<8x128xf32> -> vector<8x128xf32>
    %43 = arith.addf %38, %42 : vector<8x128xf32>
    %44 = vector.extract_strided_slice %16 {offsets = [1, 0], sizes = [8, 4], strides = [1, 1]} : vector<9x4xbf16> to vector<8x4xbf16>
    %c5 = arith.constant 5 : index
    %c0_33 = arith.constant 0 : index
    %c0_34 = arith.constant 0 : index
    %45 = vector.load %arg6[%c5, %c0_33, %c0_34] : memref<9x4x128xbf16, #tpu.memory_space<vmem>>, vector<1x4x128xbf16>
    %46 = vector.shape_cast %45 : vector<1x4x128xbf16> to vector<4x128xbf16>
    %cst_35 = arith.constant dense<0.000000e+00> : vector<8x128xf32>
    %47 = tpu.matmul %44, %46, %cst_35 {dimension_numbers = #tpu.dot_dimension_numbers<[1], [0], [0], [1], [0, 0, 1, 1], [], []>} : vector<8x4xbf16>, vector<4x128xbf16>, vector<8x128xf32> -> vector<8x128xf32>
    %48 = arith.addf %43, %47 : vector<8x128xf32>
    %49 = vector.extract_strided_slice %9 {offsets = [0, 0], sizes = [8, 4], strides = [1, 1]} : vector<9x4xbf16> to vector<8x4xbf16>
    %c6 = arith.constant 6 : index
    %c0_36 = arith.constant 0 : index
    %c0_37 = arith.constant 0 : index
    %50 = vector.load %arg6[%c6, %c0_36, %c0_37] : memref<9x4x128xbf16, #tpu.memory_space<vmem>>, vector<1x4x128xbf16>
    %51 = vector.shape_cast %50 : vector<1x4x128xbf16> to vector<4x128xbf16>
    %cst_38 = arith.constant dense<0.000000e+00> : vector<8x128xf32>
    %52 = tpu.matmul %49, %51, %cst_38 {dimension_numbers = #tpu.dot_dimension_numbers<[1], [0], [0], [1], [0, 0, 1, 1], [], []>} : vector<8x4xbf16>, vector<4x128xbf16>, vector<8x128xf32> -> vector<8x128xf32>
    %53 = arith.addf %48, %52 : vector<8x128xf32>
    %54 = vector.extract_strided_slice %13 {offsets = [0, 0], sizes = [8, 4], strides = [1, 1]} : vector<9x4xbf16> to vector<8x4xbf16>
    %c7 = arith.constant 7 : index
    %c0_39 = arith.constant 0 : index
    %c0_40 = arith.constant 0 : index
    %55 = vector.load %arg6[%c7, %c0_39, %c0_40] : memref<9x4x128xbf16, #tpu.memory_space<vmem>>, vector<1x4x128xbf16>
    %56 = vector.shape_cast %55 : vector<1x4x128xbf16> to vector<4x128xbf16>
    %cst_41 = arith.constant dense<0.000000e+00> : vector<8x128xf32>
    %57 = tpu.matmul %54, %56, %cst_41 {dimension_numbers = #tpu.dot_dimension_numbers<[1], [0], [0], [1], [0, 0, 1, 1], [], []>} : vector<8x4xbf16>, vector<4x128xbf16>, vector<8x128xf32> -> vector<8x128xf32>
    %58 = arith.addf %53, %57 : vector<8x128xf32>
    %59 = vector.extract_strided_slice %9 {offsets = [1, 0], sizes = [8, 4], strides = [1, 1]} : vector<9x4xbf16> to vector<8x4xbf16>
    %c8 = arith.constant 8 : index
    %c0_42 = arith.constant 0 : index
    %c0_43 = arith.constant 0 : index
    %60 = vector.load %arg6[%c8, %c0_42, %c0_43] : memref<9x4x128xbf16, #tpu.memory_space<vmem>>, vector<1x4x128xbf16>
    %61 = vector.shape_cast %60 : vector<1x4x128xbf16> to vector<4x128xbf16>
    %cst_44 = arith.constant dense<0.000000e+00> : vector<8x128xf32>
    %62 = tpu.matmul %59, %61, %cst_44 {dimension_numbers = #tpu.dot_dimension_numbers<[1], [0], [0], [1], [0, 0, 1, 1], [], []>} : vector<8x4xbf16>, vector<4x128xbf16>, vector<8x128xf32> -> vector<8x128xf32>
    %63 = arith.addf %58, %62 : vector<8x128xf32>
    %c0_45 = arith.constant 0 : index
    %c0_46 = arith.constant 0 : index
    %64 = vector.load %arg7[%c0_45, %c0_46] : memref<1x128xf32, #tpu.memory_space<vmem>>, vector<1x128xf32>
    %65 = vector.broadcast %64 : vector<1x128xf32> to vector<8x128xf32>
    %66 = arith.addf %63, %65 : vector<8x128xf32>
    %cst_47 = arith.constant 0.000000e+00 : f32
    %67 = vector.broadcast %cst_47 : f32 to vector<8x128xf32>
    %68 = arith.maximumf %66, %67 : vector<8x128xf32>
    %69 = arith.truncf %68 : vector<8x128xf32> to vector<8x128xbf16>
    %c0_48 = arith.constant 0 : index
    %c0_49 = arith.constant 0 : index
    %c0_50 = arith.constant 0 : index
    %c0_51 = arith.constant 0 : index
    %70 = vector.load %arg8[%c0_48, %c0_49, %c0_50, %c0_51] : memref<1x1x8x128xbf16, #tpu.memory_space<vmem>>, vector<1x1x8x128xbf16>
    %71 = vector.shape_cast %70 : vector<1x1x8x128xbf16> to vector<8x128xbf16>
    %72 = vector.shape_cast %69 : vector<8x128xbf16> to vector<1x1x8x128xbf16>
    tpu.vector_store %arg8[%c0_48, %c0_49, %c0_50, %c0_51], %72 {strides = array<i32>} : memref<1x1x8x128xbf16, #tpu.memory_space<vmem>>, vector<1x1x8x128xbf16>,
    return
  }
  func.func @transform_0(%arg0: i32, %arg1: i32) -> (i32, i32, i32, i32) {
    %c0_i32 = arith.constant 0 : i32
    %c0_i32_0 = arith.constant 0 : i32
    %c0_i32_1 = arith.constant 0 : i32
    %c0_i32_2 = arith.constant 0 : i32
    return %arg0, %c0_i32, %c0_i32_0, %c0_i32_1 : i32, i32, i32, i32
  }
  func.func @transform_1(%arg0: i32, %arg1: i32) -> (i32, i32, i32, i32) {
    %c0_i32 = arith.constant 0 : i32
    %c0_i32_0 = arith.constant 0 : i32
    %c0_i32_1 = arith.constant 0 : i32
    %c0_i32_2 = arith.constant 0 : i32
    return %arg0, %c0_i32, %c0_i32_0, %c0_i32_1 : i32, i32, i32, i32
  }
  func.func @transform_2(%arg0: i32, %arg1: i32) -> (i32, i32, i32, i32) {
    %c0_i32 = arith.constant 0 : i32
    %c0_i32_0 = arith.constant 0 : i32
    %c0_i32_1 = arith.constant 0 : i32
    %c0_i32_2 = arith.constant 0 : i32
    return %arg0, %c0_i32, %c0_i32_0, %c0_i32_1 : i32, i32, i32, i32
  }
  func.func @transform_3(%arg0: i32, %arg1: i32) -> (i32, i32, i32, i32) {
    %c0_i32 = arith.constant 0 : i32
    %c0_i32_0 = arith.constant 0 : i32
    %c0_i32_1 = arith.constant 0 : i32
    %c0_i32_2 = arith.constant 0 : i32
    return %arg0, %c0_i32, %c0_i32_0, %c0_i32_1 : i32, i32, i32, i32
  }
  func.func @transform_4(%arg0: i32, %arg1: i32) -> (i32, i32, i32) {
    %c0_i32 = arith.constant 0 : i32
    %c0_i32_0 = arith.constant 0 : i32
    %c0_i32_1 = arith.constant 0 : i32
    %c0_i32_2 = arith.constant 0 : i32
    return %c0_i32, %c0_i32_0, %c0_i32_1 : i32, i32, i32
  }
  func.func @transform_5(%arg0: i32, %arg1: i32) -> (i32, i32) {
    %c0_i32 = arith.constant 0 : i32
    %c0_i32_0 = arith.constant 0 : i32
    %c0_i32_1 = arith.constant 0 : i32
    return %c0_i32, %c0_i32_0 : i32, i32
  }
  func.func @transform_6(%arg0: i32, %arg1: i32) -> (i32, i32, i32, i32) {
    %c0_i32 = arith.constant 0 : i32
    %c0_i32_0 = arith.constant 0 : i32
    %c0_i32_1 = arith.constant 0 : i32
    return %arg0, %arg1, %c0_i32, %c0_i32_0 : i32, i32, i32, i32
  }
}

module attributes {stable_mosaic.version = 11 : i64} {
  func.func @_conv3x3s2_relu_kernel(%arg0: i32, %arg1: i32, %arg2: memref<1x5x5x8xbf16, #tpu.memory_space<vmem>>, %arg3: memref<1x5x5x8xbf16, #tpu.memory_space<vmem>>, %arg4: memref<1x5x5x8xbf16, #tpu.memory_space<vmem>>, %arg5: memref<1x5x5x8xbf16, #tpu.memory_space<vmem>>, %arg6: memref<9x8x128xbf16, #tpu.memory_space<vmem>>, %arg7: memref<1x128xf32, #tpu.memory_space<vmem>>, %arg8: memref<1x1x4x128xbf16, #tpu.memory_space<vmem>>) attributes {dimension_semantics = [#tpu.dimension_semantics<parallel>, #tpu.dimension_semantics<parallel>], iteration_bounds = array<i64: 2, 4>, scalar_prefetch = 0 : i64, scratch_operands = 0 : i64, tpu.core_type = #tpu.core_type<tc>, window_params = [{transform_indices = @transform_0, window_bounds = array<i64: 1, 5, 5, 8>}, {transform_indices = @transform_1, window_bounds = array<i64: 1, 5, 5, 8>}, {transform_indices = @transform_2, window_bounds = array<i64: 1, 5, 5, 8>}, {transform_indices = @transform_3, window_bounds = array<i64: 1, 5, 5, 8>}, {pipeline_mode = #tpu.pipeline_mode<synchronous>, transform_indices = @transform_4, window_bounds = array<i64: 9, 8, 128>}, {pipeline_mode = #tpu.pipeline_mode<synchronous>, transform_indices = @transform_5, window_bounds = array<i64: 1, 128>}, {transform_indices = @transform_6, window_bounds = array<i64: 1, 1, 4, 128>}]} {
    %c0 = arith.constant 0 : index
    %0 = arith.index_cast %arg1 : i32 to index
    %c0_0 = arith.constant 0 : index
    %c0_1 = arith.constant 0 : index
    %1 = vector.load %arg2[%c0, %0, %c0_0, %c0_1] : memref<1x5x5x8xbf16, #tpu.memory_space<vmem>>, vector<1x1x5x8xbf16>
    %2 = vector.shape_cast %1 : vector<1x1x5x8xbf16> to vector<5x8xbf16>
    %c0_2 = arith.constant 0 : index
    %3 = arith.index_cast %arg1 : i32 to index
    %c0_3 = arith.constant 0 : index
    %c0_4 = arith.constant 0 : index
    %4 = vector.load %arg3[%c0_2, %3, %c0_3, %c0_4] : memref<1x5x5x8xbf16, #tpu.memory_space<vmem>>, vector<1x1x5x8xbf16>
    %5 = vector.shape_cast %4 : vector<1x1x5x8xbf16> to vector<5x8xbf16>
    %c1_i32 = arith.constant 1 : i32
    %6 = arith.addi %arg1, %c1_i32 : i32
    %c0_5 = arith.constant 0 : index
    %7 = arith.index_cast %6 : i32 to index
    %c0_6 = arith.constant 0 : index
    %c0_7 = arith.constant 0 : index
    %8 = vector.load %arg2[%c0_5, %7, %c0_6, %c0_7] : memref<1x5x5x8xbf16, #tpu.memory_space<vmem>>, vector<1x1x5x8xbf16>
    %9 = vector.shape_cast %8 : vector<1x1x5x8xbf16> to vector<5x8xbf16>
    %c1_i32_8 = arith.constant 1 : i32
    %10 = arith.addi %arg1, %c1_i32_8 : i32
    %c0_9 = arith.constant 0 : index
    %11 = arith.index_cast %10 : i32 to index
    %c0_10 = arith.constant 0 : index
    %c0_11 = arith.constant 0 : index
    %12 = vector.load %arg3[%c0_9, %11, %c0_10, %c0_11] : memref<1x5x5x8xbf16, #tpu.memory_space<vmem>>, vector<1x1x5x8xbf16>
    %13 = vector.shape_cast %12 : vector<1x1x5x8xbf16> to vector<5x8xbf16>
    %c0_12 = arith.constant 0 : index
    %14 = arith.index_cast %arg1 : i32 to index
    %c0_13 = arith.constant 0 : index
    %c0_14 = arith.constant 0 : index
    %15 = vector.load %arg4[%c0_12, %14, %c0_13, %c0_14] : memref<1x5x5x8xbf16, #tpu.memory_space<vmem>>, vector<1x1x5x8xbf16>
    %16 = vector.shape_cast %15 : vector<1x1x5x8xbf16> to vector<5x8xbf16>
    %c0_15 = arith.constant 0 : index
    %17 = arith.index_cast %arg1 : i32 to index
    %c0_16 = arith.constant 0 : index
    %c0_17 = arith.constant 0 : index
    %18 = vector.load %arg5[%c0_15, %17, %c0_16, %c0_17] : memref<1x5x5x8xbf16, #tpu.memory_space<vmem>>, vector<1x1x5x8xbf16>
    %19 = vector.shape_cast %18 : vector<1x1x5x8xbf16> to vector<5x8xbf16>
    %20 = vector.extract_strided_slice %2 {offsets = [0, 0], sizes = [4, 8], strides = [1, 1]} : vector<5x8xbf16> to vector<4x8xbf16>
    %c0_18 = arith.constant 0 : index
    %c0_19 = arith.constant 0 : index
    %c0_20 = arith.constant 0 : index
    %21 = vector.load %arg6[%c0_18, %c0_19, %c0_20] : memref<9x8x128xbf16, #tpu.memory_space<vmem>>, vector<1x8x128xbf16>
    %22 = vector.shape_cast %21 : vector<1x8x128xbf16> to vector<8x128xbf16>
    %cst = arith.constant dense<0.000000e+00> : vector<4x128xf32>
    %23 = tpu.matmul %20, %22, %cst {dimension_numbers = #tpu.dot_dimension_numbers<[1], [0], [0], [1], [0, 0, 1, 1], [], []>} : vector<4x8xbf16>, vector<8x128xbf16>, vector<4x128xf32> -> vector<4x128xf32>
    %24 = vector.extract_strided_slice %5 {offsets = [0, 0], sizes = [4, 8], strides = [1, 1]} : vector<5x8xbf16> to vector<4x8xbf16>
    %c1 = arith.constant 1 : index
    %c0_21 = arith.constant 0 : index
    %c0_22 = arith.constant 0 : index
    %25 = vector.load %arg6[%c1, %c0_21, %c0_22] : memref<9x8x128xbf16, #tpu.memory_space<vmem>>, vector<1x8x128xbf16>
    %26 = vector.shape_cast %25 : vector<1x8x128xbf16> to vector<8x128xbf16>
    %cst_23 = arith.constant dense<0.000000e+00> : vector<4x128xf32>
    %27 = tpu.matmul %24, %26, %cst_23 {dimension_numbers = #tpu.dot_dimension_numbers<[1], [0], [0], [1], [0, 0, 1, 1], [], []>} : vector<4x8xbf16>, vector<8x128xbf16>, vector<4x128xf32> -> vector<4x128xf32>
    %28 = arith.addf %23, %27 : vector<4x128xf32>
    %29 = vector.extract_strided_slice %2 {offsets = [1, 0], sizes = [4, 8], strides = [1, 1]} : vector<5x8xbf16> to vector<4x8xbf16>
    %c2 = arith.constant 2 : index
    %c0_24 = arith.constant 0 : index
    %c0_25 = arith.constant 0 : index
    %30 = vector.load %arg6[%c2, %c0_24, %c0_25] : memref<9x8x128xbf16, #tpu.memory_space<vmem>>, vector<1x8x128xbf16>
    %31 = vector.shape_cast %30 : vector<1x8x128xbf16> to vector<8x128xbf16>
    %cst_26 = arith.constant dense<0.000000e+00> : vector<4x128xf32>
    %32 = tpu.matmul %29, %31, %cst_26 {dimension_numbers = #tpu.dot_dimension_numbers<[1], [0], [0], [1], [0, 0, 1, 1], [], []>} : vector<4x8xbf16>, vector<8x128xbf16>, vector<4x128xf32> -> vector<4x128xf32>
    %33 = arith.addf %28, %32 : vector<4x128xf32>
    %34 = vector.extract_strided_slice %16 {offsets = [0, 0], sizes = [4, 8], strides = [1, 1]} : vector<5x8xbf16> to vector<4x8xbf16>
    %c3 = arith.constant 3 : index
    %c0_27 = arith.constant 0 : index
    %c0_28 = arith.constant 0 : index
    %35 = vector.load %arg6[%c3, %c0_27, %c0_28] : memref<9x8x128xbf16, #tpu.memory_space<vmem>>, vector<1x8x128xbf16>
    %36 = vector.shape_cast %35 : vector<1x8x128xbf16> to vector<8x128xbf16>
    %cst_29 = arith.constant dense<0.000000e+00> : vector<4x128xf32>
    %37 = tpu.matmul %34, %36, %cst_29 {dimension_numbers = #tpu.dot_dimension_numbers<[1], [0], [0], [1], [0, 0, 1, 1], [], []>} : vector<4x8xbf16>, vector<8x128xbf16>, vector<4x128xf32> -> vector<4x128xf32>
    %38 = arith.addf %33, %37 : vector<4x128xf32>
    %39 = vector.extract_strided_slice %19 {offsets = [0, 0], sizes = [4, 8], strides = [1, 1]} : vector<5x8xbf16> to vector<4x8xbf16>
    %c4 = arith.constant 4 : index
    %c0_30 = arith.constant 0 : index
    %c0_31 = arith.constant 0 : index
    %40 = vector.load %arg6[%c4, %c0_30, %c0_31] : memref<9x8x128xbf16, #tpu.memory_space<vmem>>, vector<1x8x128xbf16>
    %41 = vector.shape_cast %40 : vector<1x8x128xbf16> to vector<8x128xbf16>
    %cst_32 = arith.constant dense<0.000000e+00> : vector<4x128xf32>
    %42 = tpu.matmul %39, %41, %cst_32 {dimension_numbers = #tpu.dot_dimension_numbers<[1], [0], [0], [1], [0, 0, 1, 1], [], []>} : vector<4x8xbf16>, vector<8x128xbf16>, vector<4x128xf32> -> vector<4x128xf32>
    %43 = arith.addf %38, %42 : vector<4x128xf32>
    %44 = vector.extract_strided_slice %16 {offsets = [1, 0], sizes = [4, 8], strides = [1, 1]} : vector<5x8xbf16> to vector<4x8xbf16>
    %c5 = arith.constant 5 : index
    %c0_33 = arith.constant 0 : index
    %c0_34 = arith.constant 0 : index
    %45 = vector.load %arg6[%c5, %c0_33, %c0_34] : memref<9x8x128xbf16, #tpu.memory_space<vmem>>, vector<1x8x128xbf16>
    %46 = vector.shape_cast %45 : vector<1x8x128xbf16> to vector<8x128xbf16>
    %cst_35 = arith.constant dense<0.000000e+00> : vector<4x128xf32>
    %47 = tpu.matmul %44, %46, %cst_35 {dimension_numbers = #tpu.dot_dimension_numbers<[1], [0], [0], [1], [0, 0, 1, 1], [], []>} : vector<4x8xbf16>, vector<8x128xbf16>, vector<4x128xf32> -> vector<4x128xf32>
    %48 = arith.addf %43, %47 : vector<4x128xf32>
    %49 = vector.extract_strided_slice %9 {offsets = [0, 0], sizes = [4, 8], strides = [1, 1]} : vector<5x8xbf16> to vector<4x8xbf16>
    %c6 = arith.constant 6 : index
    %c0_36 = arith.constant 0 : index
    %c0_37 = arith.constant 0 : index
    %50 = vector.load %arg6[%c6, %c0_36, %c0_37] : memref<9x8x128xbf16, #tpu.memory_space<vmem>>, vector<1x8x128xbf16>
    %51 = vector.shape_cast %50 : vector<1x8x128xbf16> to vector<8x128xbf16>
    %cst_38 = arith.constant dense<0.000000e+00> : vector<4x128xf32>
    %52 = tpu.matmul %49, %51, %cst_38 {dimension_numbers = #tpu.dot_dimension_numbers<[1], [0], [0], [1], [0, 0, 1, 1], [], []>} : vector<4x8xbf16>, vector<8x128xbf16>, vector<4x128xf32> -> vector<4x128xf32>
    %53 = arith.addf %48, %52 : vector<4x128xf32>
    %54 = vector.extract_strided_slice %13 {offsets = [0, 0], sizes = [4, 8], strides = [1, 1]} : vector<5x8xbf16> to vector<4x8xbf16>
    %c7 = arith.constant 7 : index
    %c0_39 = arith.constant 0 : index
    %c0_40 = arith.constant 0 : index
    %55 = vector.load %arg6[%c7, %c0_39, %c0_40] : memref<9x8x128xbf16, #tpu.memory_space<vmem>>, vector<1x8x128xbf16>
    %56 = vector.shape_cast %55 : vector<1x8x128xbf16> to vector<8x128xbf16>
    %cst_41 = arith.constant dense<0.000000e+00> : vector<4x128xf32>
    %57 = tpu.matmul %54, %56, %cst_41 {dimension_numbers = #tpu.dot_dimension_numbers<[1], [0], [0], [1], [0, 0, 1, 1], [], []>} : vector<4x8xbf16>, vector<8x128xbf16>, vector<4x128xf32> -> vector<4x128xf32>
    %58 = arith.addf %53, %57 : vector<4x128xf32>
    %59 = vector.extract_strided_slice %9 {offsets = [1, 0], sizes = [4, 8], strides = [1, 1]} : vector<5x8xbf16> to vector<4x8xbf16>
    %c8 = arith.constant 8 : index
    %c0_42 = arith.constant 0 : index
    %c0_43 = arith.constant 0 : index
    %60 = vector.load %arg6[%c8, %c0_42, %c0_43] : memref<9x8x128xbf16, #tpu.memory_space<vmem>>, vector<1x8x128xbf16>
    %61 = vector.shape_cast %60 : vector<1x8x128xbf16> to vector<8x128xbf16>
    %cst_44 = arith.constant dense<0.000000e+00> : vector<4x128xf32>
    %62 = tpu.matmul %59, %61, %cst_44 {dimension_numbers = #tpu.dot_dimension_numbers<[1], [0], [0], [1], [0, 0, 1, 1], [], []>} : vector<4x8xbf16>, vector<8x128xbf16>, vector<4x128xf32> -> vector<4x128xf32>
    %63 = arith.addf %58, %62 : vector<4x128xf32>
    %c0_45 = arith.constant 0 : index
    %c0_46 = arith.constant 0 : index
    %64 = vector.load %arg7[%c0_45, %c0_46] : memref<1x128xf32, #tpu.memory_space<vmem>>, vector<1x128xf32>
    %65 = vector.broadcast %64 : vector<1x128xf32> to vector<4x128xf32>
    %66 = arith.addf %63, %65 : vector<4x128xf32>
    %cst_47 = arith.constant 0.000000e+00 : f32
    %67 = vector.broadcast %cst_47 : f32 to vector<4x128xf32>
    %68 = arith.maximumf %66, %67 : vector<4x128xf32>
    %69 = arith.truncf %68 : vector<4x128xf32> to vector<4x128xbf16>
    %c0_48 = arith.constant 0 : index
    %c0_49 = arith.constant 0 : index
    %c0_50 = arith.constant 0 : index
    %c0_51 = arith.constant 0 : index
    %70 = vector.load %arg8[%c0_48, %c0_49, %c0_50, %c0_51] : memref<1x1x4x128xbf16, #tpu.memory_space<vmem>>, vector<1x1x4x128xbf16>
    %71 = vector.shape_cast %70 : vector<1x1x4x128xbf16> to vector<4x128xbf16>
    %72 = vector.shape_cast %69 : vector<4x128xbf16> to vector<1x1x4x128xbf16>
    tpu.vector_store %arg8[%c0_48, %c0_49, %c0_50, %c0_51], %72 {strides = array<i32>} : memref<1x1x4x128xbf16, #tpu.memory_space<vmem>>, vector<1x1x4x128xbf16>,
    return
  }
  func.func @transform_0(%arg0: i32, %arg1: i32) -> (i32, i32, i32, i32) {
    %c0_i32 = arith.constant 0 : i32
    %c0_i32_0 = arith.constant 0 : i32
    %c0_i32_1 = arith.constant 0 : i32
    %c0_i32_2 = arith.constant 0 : i32
    return %arg0, %c0_i32, %c0_i32_0, %c0_i32_1 : i32, i32, i32, i32
  }
  func.func @transform_1(%arg0: i32, %arg1: i32) -> (i32, i32, i32, i32) {
    %c0_i32 = arith.constant 0 : i32
    %c0_i32_0 = arith.constant 0 : i32
    %c0_i32_1 = arith.constant 0 : i32
    %c0_i32_2 = arith.constant 0 : i32
    return %arg0, %c0_i32, %c0_i32_0, %c0_i32_1 : i32, i32, i32, i32
  }
  func.func @transform_2(%arg0: i32, %arg1: i32) -> (i32, i32, i32, i32) {
    %c0_i32 = arith.constant 0 : i32
    %c0_i32_0 = arith.constant 0 : i32
    %c0_i32_1 = arith.constant 0 : i32
    %c0_i32_2 = arith.constant 0 : i32
    return %arg0, %c0_i32, %c0_i32_0, %c0_i32_1 : i32, i32, i32, i32
  }
  func.func @transform_3(%arg0: i32, %arg1: i32) -> (i32, i32, i32, i32) {
    %c0_i32 = arith.constant 0 : i32
    %c0_i32_0 = arith.constant 0 : i32
    %c0_i32_1 = arith.constant 0 : i32
    %c0_i32_2 = arith.constant 0 : i32
    return %arg0, %c0_i32, %c0_i32_0, %c0_i32_1 : i32, i32, i32, i32
  }
  func.func @transform_4(%arg0: i32, %arg1: i32) -> (i32, i32, i32) {
    %c0_i32 = arith.constant 0 : i32
    %c0_i32_0 = arith.constant 0 : i32
    %c0_i32_1 = arith.constant 0 : i32
    %c0_i32_2 = arith.constant 0 : i32
    return %c0_i32, %c0_i32_0, %c0_i32_1 : i32, i32, i32
  }
  func.func @transform_5(%arg0: i32, %arg1: i32) -> (i32, i32) {
    %c0_i32 = arith.constant 0 : i32
    %c0_i32_0 = arith.constant 0 : i32
    %c0_i32_1 = arith.constant 0 : i32
    return %c0_i32, %c0_i32_0 : i32, i32
  }
  func.func @transform_6(%arg0: i32, %arg1: i32) -> (i32, i32, i32, i32) {
    %c0_i32 = arith.constant 0 : i32
    %c0_i32_0 = arith.constant 0 : i32
    %c0_i32_1 = arith.constant 0 : i32
    return %arg0, %arg1, %c0_i32, %c0_i32_0 : i32, i32, i32, i32
  }
}

module attributes {stable_mosaic.version = 11 : i64} {
  func.func @_conv3x3s2_relu_kernel(%arg0: i32, %arg1: i32, %arg2: memref<1x3x3x16xbf16, #tpu.memory_space<vmem>>, %arg3: memref<1x3x3x16xbf16, #tpu.memory_space<vmem>>, %arg4: memref<1x3x3x16xbf16, #tpu.memory_space<vmem>>, %arg5: memref<1x3x3x16xbf16, #tpu.memory_space<vmem>>, %arg6: memref<9x16x128xbf16, #tpu.memory_space<vmem>>, %arg7: memref<1x128xf32, #tpu.memory_space<vmem>>, %arg8: memref<1x1x2x128xbf16, #tpu.memory_space<vmem>>) attributes {dimension_semantics = [#tpu.dimension_semantics<parallel>, #tpu.dimension_semantics<parallel>], iteration_bounds = array<i64: 2, 2>, scalar_prefetch = 0 : i64, scratch_operands = 0 : i64, tpu.core_type = #tpu.core_type<tc>, window_params = [{transform_indices = @transform_0, window_bounds = array<i64: 1, 3, 3, 16>}, {transform_indices = @transform_1, window_bounds = array<i64: 1, 3, 3, 16>}, {transform_indices = @transform_2, window_bounds = array<i64: 1, 3, 3, 16>}, {transform_indices = @transform_3, window_bounds = array<i64: 1, 3, 3, 16>}, {pipeline_mode = #tpu.pipeline_mode<synchronous>, transform_indices = @transform_4, window_bounds = array<i64: 9, 16, 128>}, {pipeline_mode = #tpu.pipeline_mode<synchronous>, transform_indices = @transform_5, window_bounds = array<i64: 1, 128>}, {transform_indices = @transform_6, window_bounds = array<i64: 1, 1, 2, 128>}]} {
    %c0 = arith.constant 0 : index
    %0 = arith.index_cast %arg1 : i32 to index
    %c0_0 = arith.constant 0 : index
    %c0_1 = arith.constant 0 : index
    %1 = vector.load %arg2[%c0, %0, %c0_0, %c0_1] : memref<1x3x3x16xbf16, #tpu.memory_space<vmem>>, vector<1x1x3x16xbf16>
    %2 = vector.shape_cast %1 : vector<1x1x3x16xbf16> to vector<3x16xbf16>
    %c0_2 = arith.constant 0 : index
    %3 = arith.index_cast %arg1 : i32 to index
    %c0_3 = arith.constant 0 : index
    %c0_4 = arith.constant 0 : index
    %4 = vector.load %arg3[%c0_2, %3, %c0_3, %c0_4] : memref<1x3x3x16xbf16, #tpu.memory_space<vmem>>, vector<1x1x3x16xbf16>
    %5 = vector.shape_cast %4 : vector<1x1x3x16xbf16> to vector<3x16xbf16>
    %c1_i32 = arith.constant 1 : i32
    %6 = arith.addi %arg1, %c1_i32 : i32
    %c0_5 = arith.constant 0 : index
    %7 = arith.index_cast %6 : i32 to index
    %c0_6 = arith.constant 0 : index
    %c0_7 = arith.constant 0 : index
    %8 = vector.load %arg2[%c0_5, %7, %c0_6, %c0_7] : memref<1x3x3x16xbf16, #tpu.memory_space<vmem>>, vector<1x1x3x16xbf16>
    %9 = vector.shape_cast %8 : vector<1x1x3x16xbf16> to vector<3x16xbf16>
    %c1_i32_8 = arith.constant 1 : i32
    %10 = arith.addi %arg1, %c1_i32_8 : i32
    %c0_9 = arith.constant 0 : index
    %11 = arith.index_cast %10 : i32 to index
    %c0_10 = arith.constant 0 : index
    %c0_11 = arith.constant 0 : index
    %12 = vector.load %arg3[%c0_9, %11, %c0_10, %c0_11] : memref<1x3x3x16xbf16, #tpu.memory_space<vmem>>, vector<1x1x3x16xbf16>
    %13 = vector.shape_cast %12 : vector<1x1x3x16xbf16> to vector<3x16xbf16>
    %c0_12 = arith.constant 0 : index
    %14 = arith.index_cast %arg1 : i32 to index
    %c0_13 = arith.constant 0 : index
    %c0_14 = arith.constant 0 : index
    %15 = vector.load %arg4[%c0_12, %14, %c0_13, %c0_14] : memref<1x3x3x16xbf16, #tpu.memory_space<vmem>>, vector<1x1x3x16xbf16>
    %16 = vector.shape_cast %15 : vector<1x1x3x16xbf16> to vector<3x16xbf16>
    %c0_15 = arith.constant 0 : index
    %17 = arith.index_cast %arg1 : i32 to index
    %c0_16 = arith.constant 0 : index
    %c0_17 = arith.constant 0 : index
    %18 = vector.load %arg5[%c0_15, %17, %c0_16, %c0_17] : memref<1x3x3x16xbf16, #tpu.memory_space<vmem>>, vector<1x1x3x16xbf16>
    %19 = vector.shape_cast %18 : vector<1x1x3x16xbf16> to vector<3x16xbf16>
    %20 = vector.extract_strided_slice %2 {offsets = [0, 0], sizes = [2, 16], strides = [1, 1]} : vector<3x16xbf16> to vector<2x16xbf16>
    %c0_18 = arith.constant 0 : index
    %c0_19 = arith.constant 0 : index
    %c0_20 = arith.constant 0 : index
    %21 = vector.load %arg6[%c0_18, %c0_19, %c0_20] : memref<9x16x128xbf16, #tpu.memory_space<vmem>>, vector<1x16x128xbf16>
    %22 = vector.shape_cast %21 : vector<1x16x128xbf16> to vector<16x128xbf16>
    %cst = arith.constant dense<0.000000e+00> : vector<2x128xf32>
    %23 = tpu.matmul %20, %22, %cst {dimension_numbers = #tpu.dot_dimension_numbers<[1], [0], [0], [1], [0, 0, 1, 1], [], []>} : vector<2x16xbf16>, vector<16x128xbf16>, vector<2x128xf32> -> vector<2x128xf32>
    %24 = vector.extract_strided_slice %5 {offsets = [0, 0], sizes = [2, 16], strides = [1, 1]} : vector<3x16xbf16> to vector<2x16xbf16>
    %c1 = arith.constant 1 : index
    %c0_21 = arith.constant 0 : index
    %c0_22 = arith.constant 0 : index
    %25 = vector.load %arg6[%c1, %c0_21, %c0_22] : memref<9x16x128xbf16, #tpu.memory_space<vmem>>, vector<1x16x128xbf16>
    %26 = vector.shape_cast %25 : vector<1x16x128xbf16> to vector<16x128xbf16>
    %cst_23 = arith.constant dense<0.000000e+00> : vector<2x128xf32>
    %27 = tpu.matmul %24, %26, %cst_23 {dimension_numbers = #tpu.dot_dimension_numbers<[1], [0], [0], [1], [0, 0, 1, 1], [], []>} : vector<2x16xbf16>, vector<16x128xbf16>, vector<2x128xf32> -> vector<2x128xf32>
    %28 = arith.addf %23, %27 : vector<2x128xf32>
    %29 = vector.extract_strided_slice %2 {offsets = [1, 0], sizes = [2, 16], strides = [1, 1]} : vector<3x16xbf16> to vector<2x16xbf16>
    %c2 = arith.constant 2 : index
    %c0_24 = arith.constant 0 : index
    %c0_25 = arith.constant 0 : index
    %30 = vector.load %arg6[%c2, %c0_24, %c0_25] : memref<9x16x128xbf16, #tpu.memory_space<vmem>>, vector<1x16x128xbf16>
    %31 = vector.shape_cast %30 : vector<1x16x128xbf16> to vector<16x128xbf16>
    %cst_26 = arith.constant dense<0.000000e+00> : vector<2x128xf32>
    %32 = tpu.matmul %29, %31, %cst_26 {dimension_numbers = #tpu.dot_dimension_numbers<[1], [0], [0], [1], [0, 0, 1, 1], [], []>} : vector<2x16xbf16>, vector<16x128xbf16>, vector<2x128xf32> -> vector<2x128xf32>
    %33 = arith.addf %28, %32 : vector<2x128xf32>
    %34 = vector.extract_strided_slice %16 {offsets = [0, 0], sizes = [2, 16], strides = [1, 1]} : vector<3x16xbf16> to vector<2x16xbf16>
    %c3 = arith.constant 3 : index
    %c0_27 = arith.constant 0 : index
    %c0_28 = arith.constant 0 : index
    %35 = vector.load %arg6[%c3, %c0_27, %c0_28] : memref<9x16x128xbf16, #tpu.memory_space<vmem>>, vector<1x16x128xbf16>
    %36 = vector.shape_cast %35 : vector<1x16x128xbf16> to vector<16x128xbf16>
    %cst_29 = arith.constant dense<0.000000e+00> : vector<2x128xf32>
    %37 = tpu.matmul %34, %36, %cst_29 {dimension_numbers = #tpu.dot_dimension_numbers<[1], [0], [0], [1], [0, 0, 1, 1], [], []>} : vector<2x16xbf16>, vector<16x128xbf16>, vector<2x128xf32> -> vector<2x128xf32>
    %38 = arith.addf %33, %37 : vector<2x128xf32>
    %39 = vector.extract_strided_slice %19 {offsets = [0, 0], sizes = [2, 16], strides = [1, 1]} : vector<3x16xbf16> to vector<2x16xbf16>
    %c4 = arith.constant 4 : index
    %c0_30 = arith.constant 0 : index
    %c0_31 = arith.constant 0 : index
    %40 = vector.load %arg6[%c4, %c0_30, %c0_31] : memref<9x16x128xbf16, #tpu.memory_space<vmem>>, vector<1x16x128xbf16>
    %41 = vector.shape_cast %40 : vector<1x16x128xbf16> to vector<16x128xbf16>
    %cst_32 = arith.constant dense<0.000000e+00> : vector<2x128xf32>
    %42 = tpu.matmul %39, %41, %cst_32 {dimension_numbers = #tpu.dot_dimension_numbers<[1], [0], [0], [1], [0, 0, 1, 1], [], []>} : vector<2x16xbf16>, vector<16x128xbf16>, vector<2x128xf32> -> vector<2x128xf32>
    %43 = arith.addf %38, %42 : vector<2x128xf32>
    %44 = vector.extract_strided_slice %16 {offsets = [1, 0], sizes = [2, 16], strides = [1, 1]} : vector<3x16xbf16> to vector<2x16xbf16>
    %c5 = arith.constant 5 : index
    %c0_33 = arith.constant 0 : index
    %c0_34 = arith.constant 0 : index
    %45 = vector.load %arg6[%c5, %c0_33, %c0_34] : memref<9x16x128xbf16, #tpu.memory_space<vmem>>, vector<1x16x128xbf16>
    %46 = vector.shape_cast %45 : vector<1x16x128xbf16> to vector<16x128xbf16>
    %cst_35 = arith.constant dense<0.000000e+00> : vector<2x128xf32>
    %47 = tpu.matmul %44, %46, %cst_35 {dimension_numbers = #tpu.dot_dimension_numbers<[1], [0], [0], [1], [0, 0, 1, 1], [], []>} : vector<2x16xbf16>, vector<16x128xbf16>, vector<2x128xf32> -> vector<2x128xf32>
    %48 = arith.addf %43, %47 : vector<2x128xf32>
    %49 = vector.extract_strided_slice %9 {offsets = [0, 0], sizes = [2, 16], strides = [1, 1]} : vector<3x16xbf16> to vector<2x16xbf16>
    %c6 = arith.constant 6 : index
    %c0_36 = arith.constant 0 : index
    %c0_37 = arith.constant 0 : index
    %50 = vector.load %arg6[%c6, %c0_36, %c0_37] : memref<9x16x128xbf16, #tpu.memory_space<vmem>>, vector<1x16x128xbf16>
    %51 = vector.shape_cast %50 : vector<1x16x128xbf16> to vector<16x128xbf16>
    %cst_38 = arith.constant dense<0.000000e+00> : vector<2x128xf32>
    %52 = tpu.matmul %49, %51, %cst_38 {dimension_numbers = #tpu.dot_dimension_numbers<[1], [0], [0], [1], [0, 0, 1, 1], [], []>} : vector<2x16xbf16>, vector<16x128xbf16>, vector<2x128xf32> -> vector<2x128xf32>
    %53 = arith.addf %48, %52 : vector<2x128xf32>
    %54 = vector.extract_strided_slice %13 {offsets = [0, 0], sizes = [2, 16], strides = [1, 1]} : vector<3x16xbf16> to vector<2x16xbf16>
    %c7 = arith.constant 7 : index
    %c0_39 = arith.constant 0 : index
    %c0_40 = arith.constant 0 : index
    %55 = vector.load %arg6[%c7, %c0_39, %c0_40] : memref<9x16x128xbf16, #tpu.memory_space<vmem>>, vector<1x16x128xbf16>
    %56 = vector.shape_cast %55 : vector<1x16x128xbf16> to vector<16x128xbf16>
    %cst_41 = arith.constant dense<0.000000e+00> : vector<2x128xf32>
    %57 = tpu.matmul %54, %56, %cst_41 {dimension_numbers = #tpu.dot_dimension_numbers<[1], [0], [0], [1], [0, 0, 1, 1], [], []>} : vector<2x16xbf16>, vector<16x128xbf16>, vector<2x128xf32> -> vector<2x128xf32>
    %58 = arith.addf %53, %57 : vector<2x128xf32>
    %59 = vector.extract_strided_slice %9 {offsets = [1, 0], sizes = [2, 16], strides = [1, 1]} : vector<3x16xbf16> to vector<2x16xbf16>
    %c8 = arith.constant 8 : index
    %c0_42 = arith.constant 0 : index
    %c0_43 = arith.constant 0 : index
    %60 = vector.load %arg6[%c8, %c0_42, %c0_43] : memref<9x16x128xbf16, #tpu.memory_space<vmem>>, vector<1x16x128xbf16>
    %61 = vector.shape_cast %60 : vector<1x16x128xbf16> to vector<16x128xbf16>
    %cst_44 = arith.constant dense<0.000000e+00> : vector<2x128xf32>
    %62 = tpu.matmul %59, %61, %cst_44 {dimension_numbers = #tpu.dot_dimension_numbers<[1], [0], [0], [1], [0, 0, 1, 1], [], []>} : vector<2x16xbf16>, vector<16x128xbf16>, vector<2x128xf32> -> vector<2x128xf32>
    %63 = arith.addf %58, %62 : vector<2x128xf32>
    %c0_45 = arith.constant 0 : index
    %c0_46 = arith.constant 0 : index
    %64 = vector.load %arg7[%c0_45, %c0_46] : memref<1x128xf32, #tpu.memory_space<vmem>>, vector<1x128xf32>
    %65 = vector.broadcast %64 : vector<1x128xf32> to vector<2x128xf32>
    %66 = arith.addf %63, %65 : vector<2x128xf32>
    %cst_47 = arith.constant 0.000000e+00 : f32
    %67 = vector.broadcast %cst_47 : f32 to vector<2x128xf32>
    %68 = arith.maximumf %66, %67 : vector<2x128xf32>
    %69 = arith.truncf %68 : vector<2x128xf32> to vector<2x128xbf16>
    %c0_48 = arith.constant 0 : index
    %c0_49 = arith.constant 0 : index
    %c0_50 = arith.constant 0 : index
    %c0_51 = arith.constant 0 : index
    %70 = vector.load %arg8[%c0_48, %c0_49, %c0_50, %c0_51] : memref<1x1x2x128xbf16, #tpu.memory_space<vmem>>, vector<1x1x2x128xbf16>
    %71 = vector.shape_cast %70 : vector<1x1x2x128xbf16> to vector<2x128xbf16>
    %72 = vector.shape_cast %69 : vector<2x128xbf16> to vector<1x1x2x128xbf16>
    tpu.vector_store %arg8[%c0_48, %c0_49, %c0_50, %c0_51], %72 {strides = array<i32>} : memref<1x1x2x128xbf16, #tpu.memory_space<vmem>>, vector<1x1x2x128xbf16>,
    return
  }
  func.func @transform_0(%arg0: i32, %arg1: i32) -> (i32, i32, i32, i32) {
    %c0_i32 = arith.constant 0 : i32
    %c0_i32_0 = arith.constant 0 : i32
    %c0_i32_1 = arith.constant 0 : i32
    %c0_i32_2 = arith.constant 0 : i32
    return %arg0, %c0_i32, %c0_i32_0, %c0_i32_1 : i32, i32, i32, i32
  }
  func.func @transform_1(%arg0: i32, %arg1: i32) -> (i32, i32, i32, i32) {
    %c0_i32 = arith.constant 0 : i32
    %c0_i32_0 = arith.constant 0 : i32
    %c0_i32_1 = arith.constant 0 : i32
    %c0_i32_2 = arith.constant 0 : i32
    return %arg0, %c0_i32, %c0_i32_0, %c0_i32_1 : i32, i32, i32, i32
  }
  func.func @transform_2(%arg0: i32, %arg1: i32) -> (i32, i32, i32, i32) {
    %c0_i32 = arith.constant 0 : i32
    %c0_i32_0 = arith.constant 0 : i32
    %c0_i32_1 = arith.constant 0 : i32
    %c0_i32_2 = arith.constant 0 : i32
    return %arg0, %c0_i32, %c0_i32_0, %c0_i32_1 : i32, i32, i32, i32
  }
  func.func @transform_3(%arg0: i32, %arg1: i32) -> (i32, i32, i32, i32) {
    %c0_i32 = arith.constant 0 : i32
    %c0_i32_0 = arith.constant 0 : i32
    %c0_i32_1 = arith.constant 0 : i32
    %c0_i32_2 = arith.constant 0 : i32
    return %arg0, %c0_i32, %c0_i32_0, %c0_i32_1 : i32, i32, i32, i32
  }
  func.func @transform_4(%arg0: i32, %arg1: i32) -> (i32, i32, i32) {
    %c0_i32 = arith.constant 0 : i32
    %c0_i32_0 = arith.constant 0 : i32
    %c0_i32_1 = arith.constant 0 : i32
    %c0_i32_2 = arith.constant 0 : i32
    return %c0_i32, %c0_i32_0, %c0_i32_1 : i32, i32, i32
  }
  func.func @transform_5(%arg0: i32, %arg1: i32) -> (i32, i32) {
    %c0_i32 = arith.constant 0 : i32
    %c0_i32_0 = arith.constant 0 : i32
    %c0_i32_1 = arith.constant 0 : i32
    return %c0_i32, %c0_i32_0 : i32, i32
  }
  func.func @transform_6(%arg0: i32, %arg1: i32) -> (i32, i32, i32, i32) {
    %c0_i32 = arith.constant 0 : i32
    %c0_i32_0 = arith.constant 0 : i32
    %c0_i32_1 = arith.constant 0 : i32
    return %arg0, %arg1, %c0_i32, %c0_i32_0 : i32, i32, i32, i32
  }
}

module attributes {stable_mosaic.version = 11 : i64} {
  func.func @_conv3x3s2_relu_kernel(%arg0: i32, %arg1: i32, %arg2: memref<1x2x2x32xbf16, #tpu.memory_space<vmem>>, %arg3: memref<1x2x2x32xbf16, #tpu.memory_space<vmem>>, %arg4: memref<1x2x2x32xbf16, #tpu.memory_space<vmem>>, %arg5: memref<1x2x2x32xbf16, #tpu.memory_space<vmem>>, %arg6: memref<9x32x128xbf16, #tpu.memory_space<vmem>>, %arg7: memref<1x128xf32, #tpu.memory_space<vmem>>, %arg8: memref<1x1x1x128xbf16, #tpu.memory_space<vmem>>) attributes {dimension_semantics = [#tpu.dimension_semantics<parallel>, #tpu.dimension_semantics<parallel>], iteration_bounds = array<i64: 2, 1>, scalar_prefetch = 0 : i64, scratch_operands = 0 : i64, tpu.core_type = #tpu.core_type<tc>, window_params = [{transform_indices = @transform_0, window_bounds = array<i64: 1, 2, 2, 32>}, {transform_indices = @transform_1, window_bounds = array<i64: 1, 2, 2, 32>}, {transform_indices = @transform_2, window_bounds = array<i64: 1, 2, 2, 32>}, {transform_indices = @transform_3, window_bounds = array<i64: 1, 2, 2, 32>}, {pipeline_mode = #tpu.pipeline_mode<synchronous>, transform_indices = @transform_4, window_bounds = array<i64: 9, 32, 128>}, {pipeline_mode = #tpu.pipeline_mode<synchronous>, transform_indices = @transform_5, window_bounds = array<i64: 1, 128>}, {transform_indices = @transform_6, window_bounds = array<i64: 1, 1, 1, 128>}]} {
    %c0 = arith.constant 0 : index
    %0 = arith.index_cast %arg1 : i32 to index
    %c0_0 = arith.constant 0 : index
    %c0_1 = arith.constant 0 : index
    %1 = vector.load %arg2[%c0, %0, %c0_0, %c0_1] : memref<1x2x2x32xbf16, #tpu.memory_space<vmem>>, vector<1x1x2x32xbf16>
    %2 = vector.shape_cast %1 : vector<1x1x2x32xbf16> to vector<2x32xbf16>
    %c0_2 = arith.constant 0 : index
    %3 = arith.index_cast %arg1 : i32 to index
    %c0_3 = arith.constant 0 : index
    %c0_4 = arith.constant 0 : index
    %4 = vector.load %arg3[%c0_2, %3, %c0_3, %c0_4] : memref<1x2x2x32xbf16, #tpu.memory_space<vmem>>, vector<1x1x2x32xbf16>
    %5 = vector.shape_cast %4 : vector<1x1x2x32xbf16> to vector<2x32xbf16>
    %c1_i32 = arith.constant 1 : i32
    %6 = arith.addi %arg1, %c1_i32 : i32
    %c0_5 = arith.constant 0 : index
    %7 = arith.index_cast %6 : i32 to index
    %c0_6 = arith.constant 0 : index
    %c0_7 = arith.constant 0 : index
    %8 = vector.load %arg2[%c0_5, %7, %c0_6, %c0_7] : memref<1x2x2x32xbf16, #tpu.memory_space<vmem>>, vector<1x1x2x32xbf16>
    %9 = vector.shape_cast %8 : vector<1x1x2x32xbf16> to vector<2x32xbf16>
    %c1_i32_8 = arith.constant 1 : i32
    %10 = arith.addi %arg1, %c1_i32_8 : i32
    %c0_9 = arith.constant 0 : index
    %11 = arith.index_cast %10 : i32 to index
    %c0_10 = arith.constant 0 : index
    %c0_11 = arith.constant 0 : index
    %12 = vector.load %arg3[%c0_9, %11, %c0_10, %c0_11] : memref<1x2x2x32xbf16, #tpu.memory_space<vmem>>, vector<1x1x2x32xbf16>
    %13 = vector.shape_cast %12 : vector<1x1x2x32xbf16> to vector<2x32xbf16>
    %c0_12 = arith.constant 0 : index
    %14 = arith.index_cast %arg1 : i32 to index
    %c0_13 = arith.constant 0 : index
    %c0_14 = arith.constant 0 : index
    %15 = vector.load %arg4[%c0_12, %14, %c0_13, %c0_14] : memref<1x2x2x32xbf16, #tpu.memory_space<vmem>>, vector<1x1x2x32xbf16>
    %16 = vector.shape_cast %15 : vector<1x1x2x32xbf16> to vector<2x32xbf16>
    %c0_15 = arith.constant 0 : index
    %17 = arith.index_cast %arg1 : i32 to index
    %c0_16 = arith.constant 0 : index
    %c0_17 = arith.constant 0 : index
    %18 = vector.load %arg5[%c0_15, %17, %c0_16, %c0_17] : memref<1x2x2x32xbf16, #tpu.memory_space<vmem>>, vector<1x1x2x32xbf16>
    %19 = vector.shape_cast %18 : vector<1x1x2x32xbf16> to vector<2x32xbf16>
    %20 = vector.extract_strided_slice %2 {offsets = [0, 0], sizes = [1, 32], strides = [1, 1]} : vector<2x32xbf16> to vector<1x32xbf16>
    %c0_18 = arith.constant 0 : index
    %c0_19 = arith.constant 0 : index
    %c0_20 = arith.constant 0 : index
    %21 = vector.load %arg6[%c0_18, %c0_19, %c0_20] : memref<9x32x128xbf16, #tpu.memory_space<vmem>>, vector<1x32x128xbf16>
    %22 = vector.shape_cast %21 : vector<1x32x128xbf16> to vector<32x128xbf16>
    %cst = arith.constant dense<0.000000e+00> : vector<1x128xf32>
    %23 = tpu.matmul %20, %22, %cst {dimension_numbers = #tpu.dot_dimension_numbers<[1], [0], [0], [1], [0, 0, 1, 1], [], []>} : vector<1x32xbf16>, vector<32x128xbf16>, vector<1x128xf32> -> vector<1x128xf32>
    %24 = vector.extract_strided_slice %5 {offsets = [0, 0], sizes = [1, 32], strides = [1, 1]} : vector<2x32xbf16> to vector<1x32xbf16>
    %c1 = arith.constant 1 : index
    %c0_21 = arith.constant 0 : index
    %c0_22 = arith.constant 0 : index
    %25 = vector.load %arg6[%c1, %c0_21, %c0_22] : memref<9x32x128xbf16, #tpu.memory_space<vmem>>, vector<1x32x128xbf16>
    %26 = vector.shape_cast %25 : vector<1x32x128xbf16> to vector<32x128xbf16>
    %cst_23 = arith.constant dense<0.000000e+00> : vector<1x128xf32>
    %27 = tpu.matmul %24, %26, %cst_23 {dimension_numbers = #tpu.dot_dimension_numbers<[1], [0], [0], [1], [0, 0, 1, 1], [], []>} : vector<1x32xbf16>, vector<32x128xbf16>, vector<1x128xf32> -> vector<1x128xf32>
    %28 = arith.addf %23, %27 : vector<1x128xf32>
    %29 = vector.extract_strided_slice %2 {offsets = [1, 0], sizes = [1, 32], strides = [1, 1]} : vector<2x32xbf16> to vector<1x32xbf16>
    %c2 = arith.constant 2 : index
    %c0_24 = arith.constant 0 : index
    %c0_25 = arith.constant 0 : index
    %30 = vector.load %arg6[%c2, %c0_24, %c0_25] : memref<9x32x128xbf16, #tpu.memory_space<vmem>>, vector<1x32x128xbf16>
    %31 = vector.shape_cast %30 : vector<1x32x128xbf16> to vector<32x128xbf16>
    %cst_26 = arith.constant dense<0.000000e+00> : vector<1x128xf32>
    %32 = tpu.matmul %29, %31, %cst_26 {dimension_numbers = #tpu.dot_dimension_numbers<[1], [0], [0], [1], [0, 0, 1, 1], [], []>} : vector<1x32xbf16>, vector<32x128xbf16>, vector<1x128xf32> -> vector<1x128xf32>
    %33 = arith.addf %28, %32 : vector<1x128xf32>
    %34 = vector.extract_strided_slice %16 {offsets = [0, 0], sizes = [1, 32], strides = [1, 1]} : vector<2x32xbf16> to vector<1x32xbf16>
    %c3 = arith.constant 3 : index
    %c0_27 = arith.constant 0 : index
    %c0_28 = arith.constant 0 : index
    %35 = vector.load %arg6[%c3, %c0_27, %c0_28] : memref<9x32x128xbf16, #tpu.memory_space<vmem>>, vector<1x32x128xbf16>
    %36 = vector.shape_cast %35 : vector<1x32x128xbf16> to vector<32x128xbf16>
    %cst_29 = arith.constant dense<0.000000e+00> : vector<1x128xf32>
    %37 = tpu.matmul %34, %36, %cst_29 {dimension_numbers = #tpu.dot_dimension_numbers<[1], [0], [0], [1], [0, 0, 1, 1], [], []>} : vector<1x32xbf16>, vector<32x128xbf16>, vector<1x128xf32> -> vector<1x128xf32>
    %38 = arith.addf %33, %37 : vector<1x128xf32>
    %39 = vector.extract_strided_slice %19 {offsets = [0, 0], sizes = [1, 32], strides = [1, 1]} : vector<2x32xbf16> to vector<1x32xbf16>
    %c4 = arith.constant 4 : index
    %c0_30 = arith.constant 0 : index
    %c0_31 = arith.constant 0 : index
    %40 = vector.load %arg6[%c4, %c0_30, %c0_31] : memref<9x32x128xbf16, #tpu.memory_space<vmem>>, vector<1x32x128xbf16>
    %41 = vector.shape_cast %40 : vector<1x32x128xbf16> to vector<32x128xbf16>
    %cst_32 = arith.constant dense<0.000000e+00> : vector<1x128xf32>
    %42 = tpu.matmul %39, %41, %cst_32 {dimension_numbers = #tpu.dot_dimension_numbers<[1], [0], [0], [1], [0, 0, 1, 1], [], []>} : vector<1x32xbf16>, vector<32x128xbf16>, vector<1x128xf32> -> vector<1x128xf32>
    %43 = arith.addf %38, %42 : vector<1x128xf32>
    %44 = vector.extract_strided_slice %16 {offsets = [1, 0], sizes = [1, 32], strides = [1, 1]} : vector<2x32xbf16> to vector<1x32xbf16>
    %c5 = arith.constant 5 : index
    %c0_33 = arith.constant 0 : index
    %c0_34 = arith.constant 0 : index
    %45 = vector.load %arg6[%c5, %c0_33, %c0_34] : memref<9x32x128xbf16, #tpu.memory_space<vmem>>, vector<1x32x128xbf16>
    %46 = vector.shape_cast %45 : vector<1x32x128xbf16> to vector<32x128xbf16>
    %cst_35 = arith.constant dense<0.000000e+00> : vector<1x128xf32>
    %47 = tpu.matmul %44, %46, %cst_35 {dimension_numbers = #tpu.dot_dimension_numbers<[1], [0], [0], [1], [0, 0, 1, 1], [], []>} : vector<1x32xbf16>, vector<32x128xbf16>, vector<1x128xf32> -> vector<1x128xf32>
    %48 = arith.addf %43, %47 : vector<1x128xf32>
    %49 = vector.extract_strided_slice %9 {offsets = [0, 0], sizes = [1, 32], strides = [1, 1]} : vector<2x32xbf16> to vector<1x32xbf16>
    %c6 = arith.constant 6 : index
    %c0_36 = arith.constant 0 : index
    %c0_37 = arith.constant 0 : index
    %50 = vector.load %arg6[%c6, %c0_36, %c0_37] : memref<9x32x128xbf16, #tpu.memory_space<vmem>>, vector<1x32x128xbf16>
    %51 = vector.shape_cast %50 : vector<1x32x128xbf16> to vector<32x128xbf16>
    %cst_38 = arith.constant dense<0.000000e+00> : vector<1x128xf32>
    %52 = tpu.matmul %49, %51, %cst_38 {dimension_numbers = #tpu.dot_dimension_numbers<[1], [0], [0], [1], [0, 0, 1, 1], [], []>} : vector<1x32xbf16>, vector<32x128xbf16>, vector<1x128xf32> -> vector<1x128xf32>
    %53 = arith.addf %48, %52 : vector<1x128xf32>
    %54 = vector.extract_strided_slice %13 {offsets = [0, 0], sizes = [1, 32], strides = [1, 1]} : vector<2x32xbf16> to vector<1x32xbf16>
    %c7 = arith.constant 7 : index
    %c0_39 = arith.constant 0 : index
    %c0_40 = arith.constant 0 : index
    %55 = vector.load %arg6[%c7, %c0_39, %c0_40] : memref<9x32x128xbf16, #tpu.memory_space<vmem>>, vector<1x32x128xbf16>
    %56 = vector.shape_cast %55 : vector<1x32x128xbf16> to vector<32x128xbf16>
    %cst_41 = arith.constant dense<0.000000e+00> : vector<1x128xf32>
    %57 = tpu.matmul %54, %56, %cst_41 {dimension_numbers = #tpu.dot_dimension_numbers<[1], [0], [0], [1], [0, 0, 1, 1], [], []>} : vector<1x32xbf16>, vector<32x128xbf16>, vector<1x128xf32> -> vector<1x128xf32>
    %58 = arith.addf %53, %57 : vector<1x128xf32>
    %59 = vector.extract_strided_slice %9 {offsets = [1, 0], sizes = [1, 32], strides = [1, 1]} : vector<2x32xbf16> to vector<1x32xbf16>
    %c8 = arith.constant 8 : index
    %c0_42 = arith.constant 0 : index
    %c0_43 = arith.constant 0 : index
    %60 = vector.load %arg6[%c8, %c0_42, %c0_43] : memref<9x32x128xbf16, #tpu.memory_space<vmem>>, vector<1x32x128xbf16>
    %61 = vector.shape_cast %60 : vector<1x32x128xbf16> to vector<32x128xbf16>
    %cst_44 = arith.constant dense<0.000000e+00> : vector<1x128xf32>
    %62 = tpu.matmul %59, %61, %cst_44 {dimension_numbers = #tpu.dot_dimension_numbers<[1], [0], [0], [1], [0, 0, 1, 1], [], []>} : vector<1x32xbf16>, vector<32x128xbf16>, vector<1x128xf32> -> vector<1x128xf32>
    %63 = arith.addf %58, %62 : vector<1x128xf32>
    %c0_45 = arith.constant 0 : index
    %c0_46 = arith.constant 0 : index
    %64 = vector.load %arg7[%c0_45, %c0_46] : memref<1x128xf32, #tpu.memory_space<vmem>>, vector<1x128xf32>
    %65 = arith.addf %63, %64 : vector<1x128xf32>
    %cst_47 = arith.constant 0.000000e+00 : f32
    %66 = vector.broadcast %cst_47 : f32 to vector<1x128xf32>
    %67 = arith.maximumf %65, %66 : vector<1x128xf32>
    %68 = arith.truncf %67 : vector<1x128xf32> to vector<1x128xbf16>
    %c0_48 = arith.constant 0 : index
    %c0_49 = arith.constant 0 : index
    %c0_50 = arith.constant 0 : index
    %c0_51 = arith.constant 0 : index
    %69 = vector.load %arg8[%c0_48, %c0_49, %c0_50, %c0_51] : memref<1x1x1x128xbf16, #tpu.memory_space<vmem>>, vector<1x1x1x128xbf16>
    %70 = vector.shape_cast %69 : vector<1x1x1x128xbf16> to vector<1x128xbf16>
    %71 = vector.shape_cast %68 : vector<1x128xbf16> to vector<1x1x1x128xbf16>
    tpu.vector_store %arg8[%c0_48, %c0_49, %c0_50, %c0_51], %71 {strides = array<i32>} : memref<1x1x1x128xbf16, #tpu.memory_space<vmem>>, vector<1x1x1x128xbf16>,
    return
  }
  func.func @transform_0(%arg0: i32, %arg1: i32) -> (i32, i32, i32, i32) {
    %c0_i32 = arith.constant 0 : i32
    %c0_i32_0 = arith.constant 0 : i32
    %c0_i32_1 = arith.constant 0 : i32
    %c0_i32_2 = arith.constant 0 : i32
    return %arg0, %c0_i32, %c0_i32_0, %c0_i32_1 : i32, i32, i32, i32
  }
  func.func @transform_1(%arg0: i32, %arg1: i32) -> (i32, i32, i32, i32) {
    %c0_i32 = arith.constant 0 : i32
    %c0_i32_0 = arith.constant 0 : i32
    %c0_i32_1 = arith.constant 0 : i32
    %c0_i32_2 = arith.constant 0 : i32
    return %arg0, %c0_i32, %c0_i32_0, %c0_i32_1 : i32, i32, i32, i32
  }
  func.func @transform_2(%arg0: i32, %arg1: i32) -> (i32, i32, i32, i32) {
    %c0_i32 = arith.constant 0 : i32
    %c0_i32_0 = arith.constant 0 : i32
    %c0_i32_1 = arith.constant 0 : i32
    %c0_i32_2 = arith.constant 0 : i32
    return %arg0, %c0_i32, %c0_i32_0, %c0_i32_1 : i32, i32, i32, i32
  }
  func.func @transform_3(%arg0: i32, %arg1: i32) -> (i32, i32, i32, i32) {
    %c0_i32 = arith.constant 0 : i32
    %c0_i32_0 = arith.constant 0 : i32
    %c0_i32_1 = arith.constant 0 : i32
    %c0_i32_2 = arith.constant 0 : i32
    return %arg0, %c0_i32, %c0_i32_0, %c0_i32_1 : i32, i32, i32, i32
  }
  func.func @transform_4(%arg0: i32, %arg1: i32) -> (i32, i32, i32) {
    %c0_i32 = arith.constant 0 : i32
    %c0_i32_0 = arith.constant 0 : i32
    %c0_i32_1 = arith.constant 0 : i32
    %c0_i32_2 = arith.constant 0 : i32
    return %c0_i32, %c0_i32_0, %c0_i32_1 : i32, i32, i32
  }
  func.func @transform_5(%arg0: i32, %arg1: i32) -> (i32, i32) {
    %c0_i32 = arith.constant 0 : i32
    %c0_i32_0 = arith.constant 0 : i32
    %c0_i32_1 = arith.constant 0 : i32
    return %c0_i32, %c0_i32_0 : i32, i32
  }
  func.func @transform_6(%arg0: i32, %arg1: i32) -> (i32, i32, i32, i32) {
    %c0_i32 = arith.constant 0 : i32
    %c0_i32_0 = arith.constant 0 : i32
    %c0_i32_1 = arith.constant 0 : i32
    return %arg0, %arg1, %c0_i32, %c0_i32_0 : i32, i32, i32, i32
  }
}

</mosaic_0001>

<llo_original>
// kernel: _backbone_apply.4
$region0: #{_backbone_apply.4}
  #allocation0 [shape = 'u32[]', space=smem, size = 0x4, offset = 0x4, fixed_abs, tag = 'smem constant byte address 0x4 - core index']
  #allocation1 [shape = 'u32[144,128]{1,0:T(1,128)}', space=vmem, size = 0x12000, scoped, tag = 'internal scratch']
  %s0 = inlined_call_operand.vmem [shape: bf16[2,9,9,4], index: 0, kind: input, shape index: {}]
  %s1 = inlined_call_operand.vmem [shape: bf16[2,9,9,4], index: 1, kind: input, shape index: {}]
  %s2 = inlined_call_operand.vmem [shape: bf16[2,9,9,4], index: 2, kind: input, shape index: {}]
  %s3 = inlined_call_operand.vmem [shape: bf16[2,9,9,4], index: 3, kind: input, shape index: {}]
  %s4 = inlined_call_operand.vmem [shape: bf16[9,4,128], index: 4, kind: input, shape index: {}]
  %s5 = inlined_call_operand.vmem [shape: f32[1,128], index: 5, kind: input, shape index: {}]
  %s6 = inlined_call_operand.vmem [shape: bf16[2,8,8,128], index: 6, kind: output, shape index: {}]
  %s7 = sld [smem:[#allocation0]]
  $region57: #{_backbone_apply.4} parent=0
    _
  %s9 = ssub.s32 1, %s7
  %s10 = scalar_select 0, %s9, %s7
  loop: start=0, step=1, limit=18
  $region2: #{_backbone_apply.4} parent=0 // loop_pre_header
    _
  $region3: #{_backbone_apply.4} parent=0 // loop_header
    %s12 = sphi 0, %s16
    %p13 = scmp.ge.s32.totalorder %s12, 18
    %s19 = sphi 0, %s31
    %s20 = sphi 0, %s27
    %s21 = sphi 0, %s19
    %s22 = sphi 0, %s20
    %s23 = sphi 0, %s21
    %s24 = sphi 0, %s22
    %s34 = sphi 0, %s36
    %s37 = sphi 0, %s34
    %s38 = sphi 0, %s37
    %s54 = sphi 0, %s38
    %s60 = sphi 0, %s62
    %s63 = sphi 0, %s60
    %s64 = sphi 0, %s63
    %s80 = sphi 0, %s64
    %s86 = sphi 0, %s88
    %s89 = sphi 0, %s86
    %s90 = sphi 0, %s89
    %s106 = sphi 0, %s90
    %s112 = sphi 0, %s114
    %s115 = sphi 0, %s112
    %s116 = sphi 0, %s115
    %s132 = sphi 0, %s116
    %s136 = sphi 0, %s136
    %s138 = sphi 0, %s136
    %s139 = sphi 0, %s138
    %s153 = sphi 0, %s139
    %s157 = sphi 0, %s157
    %s159 = sphi 0, %s157
    %s160 = sphi 0, %s159
    %s174 = sphi 0, %s160
    %s182 = sphi 0, %s184
    %s185 = sphi 0, %s182
    %s186 = sphi 0, %s185
    %s202 = sphi 0, %s186
  $region4: #{_backbone_apply.4} parent=0 // loop_header_branch
    %15 = sbr.rel (%p13) target = $region8
  $region5: #{_backbone_apply.4} parent=0 // loop_body
    %s17 = ssub.s32 %s12, 1
    %s18 = ssub.s32 %s12, 2
    %s25 = sadd.s32 1, %s20
    %p26 = scmp.ge.s32.totalorder %s25, 8
    %s27 = scalar_select %p26, 0, %s25
    %s28 = sadd.s32 1, %s19
    %s29 = scalar_select %p26, %s28, %s19
    %p30 = scmp.ge.s32.totalorder %s29, 2
    %s31 = scalar_select %p30, 0, %s29
    %s32 = ssub.s32 %s19, %s31
    %p33 = scmp.eq.s32.totalorder %s32, 0
    %s35 = sadd.s32 %s34, 1
    %s36 = scalar_select %p33, %s34, %s35
    %p39 = pneg %p33
    %p40 = scmp.eq.s32.totalorder %s12, 15
    %p41 = por %p39, %p40
    %p42 = scmp.ne.s32.totalorder %s34, %s37
    %p43 = scmp.eq.s32.totalorder %s12, 0
    %p44 = por %p42, %p43
    %p45 = scmp.ne.s32.totalorder %s34, %s37
    %p46 = scmp.eq.s32.totalorder %s17, 15
    %p47 = por %p45, %p46
    %p48 = scmp.ne.s32.totalorder %s37, %s38
    %p49 = scmp.eq.s32.totalorder %s17, 0
    %p50 = por %p48, %p49
    %p51 = scmp.ne.s32.totalorder %s37, %s38
    %p52 = scmp.eq.s32.totalorder %s18, 15
    %p53 = por %p51, %p52
    %p55 = scmp.ne.s32.totalorder %s38, %s54
    %p56 = scmp.eq.s32.totalorder %s18, 0
    %p57 = por %p55, %p56
    %s58 = ssub.s32 %s19, %s31
    %p59 = scmp.eq.s32.totalorder %s58, 0
    %s61 = sadd.s32 %s60, 1
    %s62 = scalar_select %p59, %s60, %s61
    %p65 = pneg %p59
    %p66 = scmp.eq.s32.totalorder %s12, 15
    %p67 = por %p65, %p66
    %p68 = scmp.ne.s32.totalorder %s60, %s63
    %p69 = scmp.eq.s32.totalorder %s12, 0
    %p70 = por %p68, %p69
    %p71 = scmp.ne.s32.totalorder %s60, %s63
    %p72 = scmp.eq.s32.totalorder %s17, 15
    %p73 = por %p71, %p72
    %p74 = scmp.ne.s32.totalorder %s63, %s64
    %p75 = scmp.eq.s32.totalorder %s17, 0
    %p76 = por %p74, %p75
    %p77 = scmp.ne.s32.totalorder %s63, %s64
    %p78 = scmp.eq.s32.totalorder %s18, 15
    %p79 = por %p77, %p78
    %p81 = scmp.ne.s32.totalorder %s64, %s80
    %p82 = scmp.eq.s32.totalorder %s18, 0
    %p83 = por %p81, %p82
    %s84 = ssub.s32 %s19, %s31
    %p85 = scmp.eq.s32.totalorder %s84, 0
    %s87 = sadd.s32 %s86, 1
    %s88 = scalar_select %p85, %s86, %s87
    %p91 = pneg %p85
    %p92 = scmp.eq.s32.totalorder %s12, 15
    %p93 = por %p91, %p92
    %p94 = scmp.ne.s32.totalorder %s86, %s89
    %p95 = scmp.eq.s32.totalorder %s12, 0
    %p96 = por %p94, %p95
    %p97 = scmp.ne.s32.totalorder %s86, %s89
    %p98 = scmp.eq.s32.totalorder %s17, 15
    %p99 = por %p97, %p98
    %p100 = scmp.ne.s32.totalorder %s89, %s90
    %p101 = scmp.eq.s32.totalorder %s17, 0
    %p102 = por %p100, %p101
    %p103 = scmp.ne.s32.totalorder %s89, %s90
    %p104 = scmp.eq.s32.totalorder %s18, 15
    %p105 = por %p103, %p104
    %p107 = scmp.ne.s32.totalorder %s90, %s106
    %p108 = scmp.eq.s32.totalorder %s18, 0
    %p109 = por %p107, %p108
    %s110 = ssub.s32 %s19, %s31
    %p111 = scmp.eq.s32.totalorder %s110, 0
    %s113 = sadd.s32 %s112, 1
    %s114 = scalar_select %p111, %s112, %s113
    %p117 = pneg %p111
    %p118 = scmp.eq.s32.totalorder %s12, 15
    %p119 = por %p117, %p118
    %p120 = scmp.ne.s32.totalorder %s112, %s115
    %p121 = scmp.eq.s32.totalorder %s12, 0
    %p122 = por %p120, %p121
    %p123 = scmp.ne.s32.totalorder %s112, %s115
    %p124 = scmp.eq.s32.totalorder %s17, 15
    %p125 = por %p123, %p124
    %p126 = scmp.ne.s32.totalorder %s115, %s116
    %p127 = scmp.eq.s32.totalorder %s17, 0
    %p128 = por %p126, %p127
    %p129 = scmp.ne.s32.totalorder %s115, %s116
    %p130 = scmp.eq.s32.totalorder %s18, 15
    %p131 = por %p129, %p130
    %p133 = scmp.ne.s32.totalorder %s116, %s132
    %p134 = scmp.eq.s32.totalorder %s18, 0
    %p135 = por %p133, %p134
    %s137 = sadd.s32 %s136, 1
    %p140 = scmp.eq.s32.totalorder %s12, 15
    %p141 = scmp.ne.s32.totalorder %s136, %s138
    %p142 = scmp.eq.s32.totalorder %s12, 0
    %p143 = por %p141, %p142
    %p144 = scmp.ne.s32.totalorder %s136, %s138
    %p145 = scmp.eq.s32.totalorder %s17, 15
    %p146 = por %p144, %p145
    %p147 = scmp.ne.s32.totalorder %s138, %s139
    %p148 = scmp.eq.s32.totalorder %s17, 0
    %p149 = por %p147, %p148
    %p150 = scmp.ne.s32.totalorder %s138, %s139
    %p151 = scmp.eq.s32.totalorder %s18, 15
    %p152 = por %p150, %p151
    %p154 = scmp.ne.s32.totalorder %s139, %s153
    %p155 = scmp.eq.s32.totalorder %s18, 0
    %p156 = por %p154, %p155
    %s158 = sadd.s32 %s157, 1
    %p161 = scmp.eq.s32.totalorder %s12, 15
    %p162 = scmp.ne.s32.totalorder %s157, %s159
    %p163 = scmp.eq.s32.totalorder %s12, 0
    %p164 = por %p162, %p163
    %p165 = scmp.ne.s32.totalorder %s157, %s159
    %p166 = scmp.eq.s32.totalorder %s17, 15
    %p167 = por %p165, %p166
    %p168 = scmp.ne.s32.totalorder %s159, %s160
    %p169 = scmp.eq.s32.totalorder %s17, 0
    %p170 = por %p168, %p169
    %p171 = scmp.ne.s32.totalorder %s159, %s160
    %p172 = scmp.eq.s32.totalorder %s18, 15
    %p173 = por %p171, %p172
    %p175 = scmp.ne.s32.totalorder %s160, %s174
    %p176 = scmp.eq.s32.totalorder %s18, 0
    %p177 = por %p175, %p176
    %s178 = ssub.s32 %s19, %s31
    %s179 = ssub.s32 %s20, %s27
    %s180 = sor.u32 %s178, %s179
    %p181 = scmp.eq.s32.totalorder %s180, 0
    %s183 = sadd.s32 %s182, 1
    %s184 = scalar_select %p181, %s182, %s183
    %p187 = pneg %p181
    %p188 = scmp.eq.s32.totalorder %s12, 15
    %p189 = por %p187, %p188
    %p190 = scmp.ne.s32.totalorder %s182, %s185
    %p191 = scmp.eq.s32.totalorder %s12, 0
    %p192 = por %p190, %p191
    %p193 = scmp.ne.s32.totalorder %s182, %s185
    %p194 = scmp.eq.s32.totalorder %s17, 15
    %p195 = por %p193, %p194
    %p196 = scmp.ne.s32.totalorder %s185, %s186
    %p197 = scmp.eq.s32.totalorder %s17, 0
    %p198 = por %p196, %p197
    %p199 = scmp.ne.s32.totalorder %s185, %s186
    %p200 = scmp.eq.s32.totalorder %s18, 15
    %p201 = por %p199, %p200
    %p203 = scmp.ne.s32.totalorder %s186, %s202
    %p204 = scmp.eq.s32.totalorder %s18, 0
    %p205 = por %p203, %p204
    %p206 = scmp.le.s32.totalorder 1, %s12
    %p207 = scmp.lt.s32.totalorder %s12, 17
    %p208 = pnand %p206, %p207
    %p209 = pneg %p208
    // Predicated region
    $region9: #{_backbone_apply.4} parent=5 // pred_check
      _
    $region10: #{_backbone_apply.4} parent=5 // pred_check_branch
      %211 = sbr.rel (%p208) target = $region12
    $region11: #{_backbone_apply.4} parent=5 // pred_region
      %s212 = ssub.s32 %s12, 1
      // Predicated region
      $region13: #{_backbone_apply.4} parent=11 // pred_check
        %p213 = pneg %p149
      $region14: #{_backbone_apply.4} parent=11 // pred_check_branch
        %215 = sbr.rel (%p213) target = $region16
      $region15: #{_backbone_apply.4} parent=11 // pred_region
        _
      $region16: #{_backbone_apply.4} parent=11 // pred_fallthru
        _
      // Predicated region
      $region17: #{_backbone_apply.4} parent=11 // pred_check
        %p216 = pneg %p170
      $region18: #{_backbone_apply.4} parent=11 // pred_check_branch
        %218 = sbr.rel (%p216) target = $region20
      $region19: #{_backbone_apply.4} parent=11 // pred_region
        _
      $region20: #{_backbone_apply.4} parent=11 // pred_fallthru
        _
    $region12: #{_backbone_apply.4} parent=5 // pred_fallthru
      _
    %p219 = scmp.lt.s32.totalorder %s12, 16
    // Predicated region
    $region21: #{_backbone_apply.4} parent=5 // pred_check
      %p220 = pneg %p219
    $region22: #{_backbone_apply.4} parent=5 // pred_check_branch
      %222 = sbr.rel (%p220) target = $region24
    $region23: #{_backbone_apply.4} parent=5 // pred_region
      // Predicated region
      $region25: #{_backbone_apply.4} parent=23 // pred_check
        %p223 = pneg %p44
      $region26: #{_backbone_apply.4} parent=23 // pred_check_branch
        %225 = sbr.rel (%p223) target = $region28
      $region27: #{_backbone_apply.4} parent=23 // pred_region
        %p226 = scmp.lt.s32.totalorder %s19, 1
        %s227 = scalar_select %p226, %s19, 1
        %s228 = smul.addr %s227, 18
        %s229 = smul.addr %s228, 4
        %s230 = scalar_lea.vmem %s0, %s229
      $region28: #{_backbone_apply.4} parent=23 // pred_fallthru
        _
      // Predicated region
      $region29: #{_backbone_apply.4} parent=23 // pred_check
        %p231 = pneg %p70
      $region30: #{_backbone_apply.4} parent=23 // pred_check_branch
        %233 = sbr.rel (%p231) target = $region32
      $region31: #{_backbone_apply.4} parent=23 // pred_region
        %p234 = scmp.lt.s32.totalorder %s19, 1
        %s235 = scalar_select %p234, %s19, 1
        %s236 = smul.addr %s235, 18
        %s237 = smul.addr %s236, 4
        %s238 = scalar_lea.vmem %s1, %s237
      $region32: #{_backbone_apply.4} parent=23 // pred_fallthru
        _
      // Predicated region
      $region33: #{_backbone_apply.4} parent=23 // pred_check
        %p239 = pneg %p96
      $region34: #{_backbone_apply.4} parent=23 // pred_check_branch
        %241 = sbr.rel (%p239) target = $region36
      $region35: #{_backbone_apply.4} parent=23 // pred_region
        %p242 = scmp.lt.s32.totalorder %s19, 1
        %s243 = scalar_select %p242, %s19, 1
        %s244 = smul.addr %s243, 18
        %s245 = smul.addr %s244, 4
        %s246 = scalar_lea.vmem %s2, %s245
      $region36: #{_backbone_apply.4} parent=23 // pred_fallthru
        _
      // Predicated region
      $region37: #{_backbone_apply.4} parent=23 // pred_check
        %p247 = pneg %p122
      $region38: #{_backbone_apply.4} parent=23 // pred_check_branch
        %249 = sbr.rel (%p247) target = $region40
      $region39: #{_backbone_apply.4} parent=23 // pred_region
        %p250 = scmp.lt.s32.totalorder %s19, 1
        %s251 = scalar_select %p250, %s19, 1
        %s252 = smul.addr %s251, 18
        %s253 = smul.addr %s252, 4
        %s254 = scalar_lea.vmem %s3, %s253
      $region40: #{_backbone_apply.4} parent=23 // pred_fallthru
        _
    $region24: #{_backbone_apply.4} parent=5 // pred_fallthru
      _
    %p255 = scmp.le.s32.totalorder 1, %s12
    %p256 = scmp.lt.s32.totalorder %s12, 17
    %p257 = pnand %p255, %p256
    %p258 = pneg %p257
    // Predicated region
    $region41: #{_backbone_apply.4} parent=5 // pred_check
      _
    $region42: #{_backbone_apply.4} parent=5 // pred_check_branch
      %260 = sbr.rel (%p257) target = $region44
    $region43: #{_backbone_apply.4} parent=5 // pred_region
      %s261 = ssub.s32 %s12, 1
      %p262 = scmp.lt.s32.totalorder %s21, 1
      %s263 = scalar_select %p262, %s21, 1
      %s264 = smul.addr %s263, 18
      %s265 = smul.addr %s264, 4
      %s266 = scalar_lea.vmem %s0, %s265
      %p267 = pneg %p50
      %p268 = pneg %p47
      %p269 = scmp.lt.s32.totalorder %s21, 1
      %s270 = scalar_select %p269, %s21, 1
      %s271 = smul.addr %s270, 18
      %s272 = smul.addr %s271, 4
      %s273 = scalar_lea.vmem %s1, %s272
      %p274 = pneg %p76
      %p275 = pneg %p73
      %p276 = scmp.lt.s32.totalorder %s21, 1
      %s277 = scalar_select %p276, %s21, 1
      %s278 = smul.addr %s277, 18
      %s279 = smul.addr %s278, 4
      %s280 = scalar_lea.vmem %s2, %s279
      %p281 = pneg %p102
      %p282 = pneg %p99
      %p283 = scmp.lt.s32.totalorder %s21, 1
      %s284 = scalar_select %p283, %s21, 1
      %s285 = smul.addr %s284, 18
      %s286 = smul.addr %s285, 4
      %s287 = scalar_lea.vmem %s3, %s286
      %p288 = pneg %p128
      %p289 = pneg %p125
      %p290 = pneg %p149
      %p291 = pneg %p146
      %p292 = pneg %p170
      %p293 = pneg %p167
      %p294 = pneg %p198
      %p295 = pneg %p195
      %p296 = scmp.lt.s32.totalorder %s21, 1
      %s297 = scalar_select %p296, %s21, 1
      %p298 = scmp.lt.s32.totalorder %s22, 7
      %s299 = scalar_select %p298, %s22, 7
      %s300 = smul.addr %s297, 8
      %s301 = sadd.s32 %s299, %s300
      %s302 = smul.addr %s301, 4
      %s303 = scalar_lea.vmem %s6, %s302
      %p304 = scmp.lt.s32.totalorder %s21, 1
      %s305 = scalar_select %p304, %s21, 1
      %s306 = smul.addr %s305, 18
      %s307 = smul.addr %s306, 4
      %s308 = scalar_lea.vmem %s0, %s307
      %p309 = scmp.lt.s32.totalorder %s21, 1
      %s310 = scalar_select %p309, %s21, 1
      %s311 = smul.addr %s310, 18
      %s312 = smul.addr %s311, 4
      %s313 = scalar_lea.vmem %s1, %s312
      %p314 = scmp.lt.s32.totalorder %s21, 1
      %s315 = scalar_select %p314, %s21, 1
      %s316 = smul.addr %s315, 18
      %s317 = smul.addr %s316, 4
      %s318 = scalar_lea.vmem %s2, %s317
      %p319 = scmp.lt.s32.totalorder %s21, 1
      %s320 = scalar_select %p319, %s21, 1
      %s321 = smul.addr %s320, 18
      %s322 = smul.addr %s321, 4
      %s323 = scalar_lea.vmem %s3, %s322
      %p324 = scmp.lt.s32.totalorder %s21, 1
      %s325 = scalar_select %p324, %s21, 1
      %p326 = scmp.lt.s32.totalorder %s22, 7
      %s327 = scalar_select %p326, %s22, 7
      %s328 = smul.addr %s325, 8
      %s329 = sadd.s32 %s327, %s328
      %s330 = smul.addr %s329, 4
      %s331 = scalar_lea.vmem %s6, %s330
      %s333 = smul.u32 %s22, 2
      %s334 = smul.addr %s333, 4
      %s335 = scalar_lea.vmem %s308, %s334
      %v336 = vld [vmem:[%s335] sm:$0xf]
      %v337 = vld [vmem:[%s335 + $0x4] sm:$0x1]
      %s338 = smul.addr %s333, 4
      %s339 = scalar_lea.vmem %s313, %s338
      %v340 = vld [vmem:[%s339] sm:$0xf]
      %s341 = sadd.s32 %s22, 1
      %s342 = smul.u32 %s341, 2
      %s343 = smul.addr %s342, 4
      %s344 = scalar_lea.vmem %s308, %s343
      %v345 = vld [vmem:[%s344] sm:$0xf]
      %v346 = vld [vmem:[%s344 + $0x4] sm:$0x1]
      %s347 = smul.addr %s342, 4
      %s348 = scalar_lea.vmem %s313, %s347
      %v349 = vld [vmem:[%s348] sm:$0xf]
      %s350 = smul.addr %s333, 4
      %s351 = scalar_lea.vmem %s318, %s350
      %v352 = vld [vmem:[%s351] sm:$0xf]
      %v353 = vld [vmem:[%s351 + $0x4] sm:$0x1]
      %s354 = smul.addr %s333, 4
      %s355 = scalar_lea.vmem %s323, %s354
      %v356 = vld [vmem:[%s355] sm:$0xf]
      %v357 = vld [vmem:[%s4] sm:$0x3]
      %s358 = scalar_lea.vmem %s4, 2
      %v359 = vld [vmem:[%s358] sm:$0x3]
      %vm360 = vcmask 31744
      %v362 = vsel %vm360, %v340, 0
      %vm364 = vcmask 1041408
      %v366 = vsel %vm364, %v359, 0
      %368 = vmatprep.subr.bf16.mxu0 0
      %369 = vmatpush1.bf16.msra.mxu0 %v366
      %370 = vmatprep.subr.bf16.mxu0 0
      %371 = vmatpush1.bf16.msra.mxu0 0
      %372 = vmatprep.subr.bf16.mxu0 0
      %373 = vmatpush1.bf16.msra.mxu0 0
      %374 = vmatprep.subr.bf16.mxu0 0
      %375 = vmatpush1.bf16.msra.mxu0 0
      %376 = vmatprep.subr.bf16.mxu0 0
      %377 = vmatpush1.bf16.msra.mxu0 0
      %378 = vmatprep.subr.bf16.mxu0 0
      %379 = vmatpush1.bf16.msra.mxu0 0
      %380 = vmatprep.subr.bf16.mxu0 0
      %381 = vmatpush1.bf16.msra.mxu0 0
      %382 = vmatprep.subr.bf16.mxu0 0
      %383 = vmatpush1.bf16.msra.mxu0 0
      %384 = vmatprep.subr.bf16.mxu0 0
      %385 = vmatpush1.bf16.msra.mxu0 0
      %386 = vmatprep.subr.bf16.mxu0 0
      %387 = vmatpush1.bf16.msra.mxu0 0
      %388 = vmatprep.subr.bf16.mxu0 0
      %389 = vmatpush1.bf16.msra.mxu0 0
      %390 = vmatprep.subr.bf16.mxu0 0
      %391 = vmatpush1.bf16.msra.mxu0 0
      %392 = vmatprep.subr.bf16.mxu0 0
      %393 = vmatpush1.bf16.msra.mxu0 0
      %394 = vmatprep.subr.bf16.mxu0 0
      %395 = vmatpush1.bf16.msra.mxu0 0
      %396 = vmatprep.subr.bf16.mxu0 0
      %397 = vmatpush1.bf16.msra.mxu0 0
      %398 = vmatprep.subr.bf16.mxu0 0
      %399 = vmatpush1.bf16.msra.mxu0 0
      %400 = vmatprep.mubr.bf16.mxu0 0
      %401 = vmatmul.mubr.bf16.gmra.mrb[0].mxu0 %v362
      %v402 = vpop.f32.mrb[0].mxu0
      %v403 = vadd.f32 0.0, %v402
      %v404 = vpop.f32.mrb[0].mxu0
      %v405 = vpop.f32.mrb[0].mxu0
      %v406 = vpop.f32.mrb[0].mxu0
      %407 = vdwg.mxu0
      %v409 = vsel %vm360, %v336, 0
      %v412 = vsel %vm364, %v357, 0
      %414 = vmatprep.subr.bf16.mxu0 0
      %415 = vmatpush1.bf16.msra.mxu0 %v412
      %416 = vmatprep.subr.bf16.mxu0 0
      %417 = vmatpush1.bf16.msra.mxu0 0
      %418 = vmatprep.subr.bf16.mxu0 0
      %419 = vmatpush1.bf16.msra.mxu0 0
      %420 = vmatprep.subr.bf16.mxu0 0
      %421 = vmatpush1.bf16.msra.mxu0 0
      %422 = vmatprep.subr.bf16.mxu0 0
      %423 = vmatpush1.bf16.msra.mxu0 0
      %424 = vmatprep.subr.bf16.mxu0 0
      %425 = vmatpush1.bf16.msra.mxu0 0
      %426 = vmatprep.subr.bf16.mxu0 0
      %427 = vmatpush1.bf16.msra.mxu0 0
      %428 = vmatprep.subr.bf16.mxu0 0
      %429 = vmatpush1.bf16.msra.mxu0 0
      %430 = vmatprep.subr.bf16.mxu0 0
      %431 = vmatpush1.bf16.msra.mxu0 0
      %432 = vmatprep.subr.bf16.mxu0 0
      %433 = vmatpush1.bf16.msra.mxu0 0
      %434 = vmatprep.subr.bf16.mxu0 0
      %435 = vmatpush1.bf16.msra.mxu0 0
      %436 = vmatprep.subr.bf16.mxu0 0
      %437 = vmatpush1.bf16.msra.mxu0 0
      %438 = vmatprep.subr.bf16.mxu0 0
      %439 = vmatpush1.bf16.msra.mxu0 0
      %440 = vmatprep.subr.bf16.mxu0 0
      %441 = vmatpush1.bf16.msra.mxu0 0
      %442 = vmatprep.subr.bf16.mxu0 0
      %443 = vmatpush1.bf16.msra.mxu0 0
      %444 = vmatprep.subr.bf16.mxu0 0
      %445 = vmatpush1.bf16.msra.mxu0 0
      %446 = vmatprep.mubr.bf16.mxu0 0
      %447 = vmatmul.mubr.bf16.gmra.mrb[0].mxu0 %v409
      %v448 = vpop.f32.mrb[0].mxu0
      %v449 = vadd.f32 %v403, %v448
      %v450 = vpop.f32.mrb[0].mxu0
      %v451 = vpop.f32.mrb[0].mxu0
      %v452 = vpop.f32.mrb[0].mxu0
      %453 = vdwg.mxu0
      %s454 = scalar_lea.vmem %s4, 4
      %v455 = vld [vmem:[%s454] sm:$0x3]
      %v458 = vunpack.c.l.b16 %v336
      %v459 = vunpack.c.l.b16 %v337
      %v460 = vpack.c.b16 %v459, %v458
      %v462 = vshrl.u32 %v460, 16
      %v464 = vshll.u32 %v460, 16
      %v466 = vrot.slane %v464, 1
      %v467 = vor.u32 %v462, %v466
      %v469 = vsel %vm360, %v467, 0
      %v472 = vsel %vm364, %v455, 0
      %474 = vmatprep.subr.bf16.mxu0 0
      %475 = vmatpush1.bf16.msra.mxu0 %v472
      %476 = vmatprep.subr.bf16.mxu0 0
      %477 = vmatpush1.bf16.msra.mxu0 0
      %478 = vmatprep.subr.bf16.mxu0 0
      %479 = vmatpush1.bf16.msra.mxu0 0
      %480 = vmatprep.subr.bf16.mxu0 0
      %481 = vmatpush1.bf16.msra.mxu0 0
      %482 = vmatprep.subr.bf16.mxu0 0
      %483 = vmatpush1.bf16.msra.mxu0 0
      %484 = vmatprep.subr.bf16.mxu0 0
      %485 = vmatpush1.bf16.msra.mxu0 0
      %486 = vmatprep.subr.bf16.mxu0 0
      %487 = vmatpush1.bf16.msra.mxu0 0
      %488 = vmatprep.subr.bf16.mxu0 0
      %489 = vmatpush1.bf16.msra.mxu0 0
      %490 = vmatprep.subr.bf16.mxu0 0
      %491 = vmatpush1.bf16.msra.mxu0 0
      %492 = vmatprep.subr.bf16.mxu0 0
      %493 = vmatpush1.bf16.msra.mxu0 0
      %494 = vmatprep.subr.bf16.mxu0 0
      %495 = vmatpush1.bf16.msra.mxu0 0
      %496 = vmatprep.subr.bf16.mxu0 0
      %497 = vmatpush1.bf16.msra.mxu0 0
      %498 = vmatprep.subr.bf16.mxu0 0
      %499 = vmatpush1.bf16.msra.mxu0 0
      %500 = vmatprep.subr.bf16.mxu0 0
      %501 = vmatpush1.bf16.msra.mxu0 0
      %502 = vmatprep.subr.bf16.mxu0 0
      %503 = vmatpush1.bf16.msra.mxu0 0
      %504 = vmatprep.subr.bf16.mxu0 0
      %505 = vmatpush1.bf16.msra.mxu0 0
      %506 = vmatprep.mubr.bf16.mxu0 0
      %507 = vmatmul.mubr.bf16.gmra.mrb[0].mxu0 %v469
      %v508 = vpop.f32.mrb[0].mxu0
      %v509 = vadd.f32 0.0, %v508
      %v510 = vpop.f32.mrb[0].mxu0
      %v511 = vpop.f32.mrb[0].mxu0
      %v512 = vpop.f32.mrb[0].mxu0
      %513 = vdwg.mxu0
      %v514 = vadd.f32 %v449, %v509
      %s515 = scalar_lea.vmem %s4, 6
      %v516 = vld [vmem:[%s515] sm:$0x3]
      %v518 = vsel %vm360, %v352, 0
      %v521 = vsel %vm364, %v516, 0
      %523 = vmatprep.subr.bf16.mxu0 0
      %524 = vmatpush1.bf16.msra.mxu0 %v521
      %525 = vmatprep.subr.bf16.mxu0 0
      %526 = vmatpush1.bf16.msra.mxu0 0
      %527 = vmatprep.subr.bf16.mxu0 0
      %528 = vmatpush1.bf16.msra.mxu0 0
      %529 = vmatprep.subr.bf16.mxu0 0
      %530 = vmatpush1.bf16.msra.mxu0 0
      %531 = vmatprep.subr.bf16.mxu0 0
      %532 = vmatpush1.bf16.msra.mxu0 0
      %533 = vmatprep.subr.bf16.mxu0 0
      %534 = vmatpush1.bf16.msra.mxu0 0
      %535 = vmatprep.subr.bf16.mxu0 0
      %536 = vmatpush1.bf16.msra.mxu0 0
      %537 = vmatprep.subr.bf16.mxu0 0
      %538 = vmatpush1.bf16.msra.mxu0 0
      %539 = vmatprep.subr.bf16.mxu0 0
      %540 = vmatpush1.bf16.msra.mxu0 0
      %541 = vmatprep.subr.bf16.mxu0 0
      %542 = vmatpush1.bf16.msra.mxu0 0
      %543 = vmatprep.subr.bf16.mxu0 0
      %544 = vmatpush1.bf16.msra.mxu0 0
      %545 = vmatprep.subr.bf16.mxu0 0
      %546 = vmatpush1.bf16.msra.mxu0 0
      %547 = vmatprep.subr.bf16.mxu0 0
      %548 = vmatpush1.bf16.msra.mxu0 0
      %549 = vmatprep.subr.bf16.mxu0 0
      %550 = vmatpush1.bf16.msra.mxu0 0
      %551 = vmatprep.subr.bf16.mxu0 0
      %552 = vmatpush1.bf16.msra.mxu0 0
      %553 = vmatprep.subr.bf16.mxu0 0
      %554 = vmatpush1.bf16.msra.mxu0 0
      %555 = vmatprep.mubr.bf16.mxu0 0
      %556 = vmatmul.mubr.bf16.gmra.mrb[0].mxu0 %v518
      %v557 = vpop.f32.mrb[0].mxu0
      %v558 = vadd.f32 0.0, %v557
      %v559 = vpop.f32.mrb[0].mxu0
      %v560 = vpop.f32.mrb[0].mxu0
      %v561 = vpop.f32.mrb[0].mxu0
      %562 = vdwg.mxu0
      %v563 = vadd.f32 %v514, %v558
      %s564 = scalar_lea.vmem %s4, 8
      %v565 = vld [vmem:[%s564] sm:$0x3]
      %v567 = vsel %vm360, %v356, 0
      %v570 = vsel %vm364, %v565, 0
      %572 = vmatprep.subr.bf16.mxu0 0
      %573 = vmatpush1.bf16.msra.mxu0 %v570
      %574 = vmatprep.subr.bf16.mxu0 0
      %575 = vmatpush1.bf16.msra.mxu0 0
      %576 = vmatprep.subr.bf16.mxu0 0
      %577 = vmatpush1.bf16.msra.mxu0 0
      %578 = vmatprep.subr.bf16.mxu0 0
      %579 = vmatpush1.bf16.msra.mxu0 0
      %580 = vmatprep.subr.bf16.mxu0 0
      %581 = vmatpush1.bf16.msra.mxu0 0
      %582 = vmatprep.subr.bf16.mxu0 0
      %583 = vmatpush1.bf16.msra.mxu0 0
      %584 = vmatprep.subr.bf16.mxu0 0
      %585 = vmatpush1.bf16.msra.mxu0 0
      %586 = vmatprep.subr.bf16.mxu0 0
      %587 = vmatpush1.bf16.msra.mxu0 0
      %588 = vmatprep.subr.bf16.mxu0 0
      %589 = vmatpush1.bf16.msra.mxu0 0
      %590 = vmatprep.subr.bf16.mxu0 0
      %591 = vmatpush1.bf16.msra.mxu0 0
      %592 = vmatprep.subr.bf16.mxu0 0
      %593 = vmatpush1.bf16.msra.mxu0 0
      %594 = vmatprep.subr.bf16.mxu0 0
      %595 = vmatpush1.bf16.msra.mxu0 0
      %596 = vmatprep.subr.bf16.mxu0 0
      %597 = vmatpush1.bf16.msra.mxu0 0
      %598 = vmatprep.subr.bf16.mxu0 0
      %599 = vmatpush1.bf16.msra.mxu0 0
      %600 = vmatprep.subr.bf16.mxu0 0
      %601 = vmatpush1.bf16.msra.mxu0 0
      %602 = vmatprep.subr.bf16.mxu0 0
      %603 = vmatpush1.bf16.msra.mxu0 0
      %604 = vmatprep.mubr.bf16.mxu0 0
      %605 = vmatmul.mubr.bf16.gmra.mrb[0].mxu0 %v567
      %v606 = vpop.f32.mrb[0].mxu0
      %v607 = vadd.f32 0.0, %v606
      %v608 = vpop.f32.mrb[0].mxu0
      %v609 = vpop.f32.mrb[0].mxu0
      %v610 = vpop.f32.mrb[0].mxu0
      %611 = vdwg.mxu0
      %v612 = vadd.f32 %v563, %v607
      %s613 = scalar_lea.vmem %s4, 10
      %v614 = vld [vmem:[%s613] sm:$0x3]
      %v617 = vunpack.c.l.b16 %v352
      %v618 = vunpack.c.l.b16 %v353
      %v619 = vpack.c.b16 %v618, %v617
      %v621 = vshrl.u32 %v619, 16
      %v623 = vshll.u32 %v619, 16
      %v625 = vrot.slane %v623, 1
      %v626 = vor.u32 %v621, %v625
      %v628 = vsel %vm360, %v626, 0
      %v631 = vsel %vm364, %v614, 0
      %633 = vmatprep.subr.bf16.mxu0 0
      %634 = vmatpush1.bf16.msra.mxu0 %v631
      %635 = vmatprep.subr.bf16.mxu0 0
      %636 = vmatpush1.bf16.msra.mxu0 0
      %637 = vmatprep.subr.bf16.mxu0 0
      %638 = vmatpush1.bf16.msra.mxu0 0
      %639 = vmatprep.subr.bf16.mxu0 0
      %640 = vmatpush1.bf16.msra.mxu0 0
      %641 = vmatprep.subr.bf16.mxu0 0
      %642 = vmatpush1.bf16.msra.mxu0 0
      %643 = vmatprep.subr.bf16.mxu0 0
      %644 = vmatpush1.bf16.msra.mxu0 0
      %645 = vmatprep.subr.bf16.mxu0 0
      %646 = vmatpush1.bf16.msra.mxu0 0
      %647 = vmatprep.subr.bf16.mxu0 0
      %648 = vmatpush1.bf16.msra.mxu0 0
      %649 = vmatprep.subr.bf16.mxu0 0
      %650 = vmatpush1.bf16.msra.mxu0 0
      %651 = vmatprep.subr.bf16.mxu0 0
      %652 = vmatpush1.bf16.msra.mxu0 0
      %653 = vmatprep.subr.bf16.mxu0 0
      %654 = vmatpush1.bf16.msra.mxu0 0
      %655 = vmatprep.subr.bf16.mxu0 0
      %656 = vmatpush1.bf16.msra.mxu0 0
      %657 = vmatprep.subr.bf16.mxu0 0
      %658 = vmatpush1.bf16.msra.mxu0 0
      %659 = vmatprep.subr.bf16.mxu0 0
      %660 = vmatpush1.bf16.msra.mxu0 0
      %661 = vmatprep.subr.bf16.mxu0 0
      %662 = vmatpush1.bf16.msra.mxu0 0
      %663 = vmatprep.subr.bf16.mxu0 0
      %664 = vmatpush1.bf16.msra.mxu0 0
      %665 = vmatprep.mubr.bf16.mxu0 0
      %666 = vmatmul.mubr.bf16.gmra.mrb[0].mxu0 %v628
      %v667 = vpop.f32.mrb[0].mxu0
      %v668 = vadd.f32 0.0, %v667
      %v669 = vpop.f32.mrb[0].mxu0
      %v670 = vpop.f32.mrb[0].mxu0
      %v671 = vpop.f32.mrb[0].mxu0
      %672 = vdwg.mxu0
      %v673 = vadd.f32 %v612, %v668
      %s674 = scalar_lea.vmem %s4, 12
      %v675 = vld [vmem:[%s674] sm:$0x3]
      %v677 = vsel %vm360, %v345, 0
      %v680 = vsel %vm364, %v675, 0
      %682 = vmatprep.subr.bf16.mxu0 0
      %683 = vmatpush1.bf16.msra.mxu0 %v680
      %684 = vmatprep.subr.bf16.mxu0 0
      %685 = vmatpush1.bf16.msra.mxu0 0
      %686 = vmatprep.subr.bf16.mxu0 0
      %687 = vmatpush1.bf16.msra.mxu0 0
      %688 = vmatprep.subr.bf16.mxu0 0
      %689 = vmatpush1.bf16.msra.mxu0 0
      %690 = vmatprep.subr.bf16.mxu0 0
      %691 = vmatpush1.bf16.msra.mxu0 0
      %692 = vmatprep.subr.bf16.mxu0 0
      %693 = vmatpush1.bf16.msra.mxu0 0
      %694 = vmatprep.subr.bf16.mxu0 0
      %695 = vmatpush1.bf16.msra.mxu0 0
      %696 = vmatprep.subr.bf16.mxu0 0
      %697 = vmatpush1.bf16.msra.mxu0 0
      %698 = vmatprep.subr.bf16.mxu0 0
      %699 = vmatpush1.bf16.msra.mxu0 0
      %700 = vmatprep.subr.bf16.mxu0 0
      %701 = vmatpush1.bf16.msra.mxu0 0
      %702 = vmatprep.subr.bf16.mxu0 0
      %703 = vmatpush1.bf16.msra.mxu0 0
      %704 = vmatprep.subr.bf16.mxu0 0
      %705 = vmatpush1.bf16.msra.mxu0 0
      %706 = vmatprep.subr.bf16.mxu0 0
      %707 = vmatpush1.bf16.msra.mxu0 0
      %708 = vmatprep.subr.bf16.mxu0 0
      %709 = vmatpush1.bf16.msra.mxu0 0
      %710 = vmatprep.subr.bf16.mxu0 0
      %711 = vmatpush1.bf16.msra.mxu0 0
      %712 = vmatprep.subr.bf16.mxu0 0
      %713 = vmatpush1.bf16.msra.mxu0 0
      %714 = vmatprep.mubr.bf16.mxu0 0
      %715 = vmatmul.mubr.bf16.gmra.mrb[0].mxu0 %v677
      %v716 = vpop.f32.mrb[0].mxu0
      %v717 = vadd.f32 0.0, %v716
      %v718 = vpop.f32.mrb[0].mxu0
      %v719 = vpop.f32.mrb[0].mxu0
      %v720 = vpop.f32.mrb[0].mxu0
      %721 = vdwg.mxu0
      %v722 = vadd.f32 %v673, %v717
      %s723 = scalar_lea.vmem %s4, 14
      %v724 = vld [vmem:[%s723] sm:$0x3]
      %v726 = vsel %vm360, %v349, 0
      %v729 = vsel %vm364, %v724, 0
      %731 = vmatprep.subr.bf16.mxu0 0
      %732 = vmatpush1.bf16.msra.mxu0 %v729
      %733 = vmatprep.subr.bf16.mxu0 0
      %734 = vmatpush1.bf16.msra.mxu0 0
      %735 = vmatprep.subr.bf16.mxu0 0
      %736 = vmatpush1.bf16.msra.mxu0 0
      %737 = vmatprep.subr.bf16.mxu0 0
      %738 = vmatpush1.bf16.msra.mxu0 0
      %739 = vmatprep.subr.bf16.mxu0 0
      %740 = vmatpush1.bf16.msra.mxu0 0
      %741 = vmatprep.subr.bf16.mxu0 0
      %742 = vmatpush1.bf16.msra.mxu0 0
      %743 = vmatprep.subr.bf16.mxu0 0
      %744 = vmatpush1.bf16.msra.mxu0 0
      %745 = vmatprep.subr.bf16.mxu0 0
      %746 = vmatpush1.bf16.msra.mxu0 0
      %747 = vmatprep.subr.bf16.mxu0 0
      %748 = vmatpush1.bf16.msra.mxu0 0
      %749 = vmatprep.subr.bf16.mxu0 0
      %750 = vmatpush1.bf16.msra.mxu0 0
      %751 = vmatprep.subr.bf16.mxu0 0
      %752 = vmatpush1.bf16.msra.mxu0 0
      %753 = vmatprep.subr.bf16.mxu0 0
      %754 = vmatpush1.bf16.msra.mxu0 0
      %755 = vmatprep.subr.bf16.mxu0 0
      %756 = vmatpush1.bf16.msra.mxu0 0
      %757 = vmatprep.subr.bf16.mxu0 0
      %758 = vmatpush1.bf16.msra.mxu0 0
      %759 = vmatprep.subr.bf16.mxu0 0
      %760 = vmatpush1.bf16.msra.mxu0 0
      %761 = vmatprep.subr.bf16.mxu0 0
      %762 = vmatpush1.bf16.msra.mxu0 0
      %763 = vmatprep.mubr.bf16.mxu0 0
      %764 = vmatmul.mubr.bf16.gmra.mrb[0].mxu0 %v726
      %v765 = vpop.f32.mrb[0].mxu0
      %v766 = vadd.f32 0.0, %v765
      %v767 = vpop.f32.mrb[0].mxu0
      %v768 = vpop.f32.mrb[0].mxu0
      %v769 = vpop.f32.mrb[0].mxu0
      %770 = vdwg.mxu0
      %v771 = vadd.f32 %v722, %v766
      %s772 = scalar_lea.vmem %s4, 16
      %v773 = vld [vmem:[%s772] sm:$0x3]
      %v776 = vunpack.c.l.b16 %v345
      %v777 = vunpack.c.l.b16 %v346
      %v778 = vpack.c.b16 %v777, %v776
      %v780 = vshrl.u32 %v778, 16
      %v782 = vshll.u32 %v778, 16
      %v784 = vrot.slane %v782, 1
      %v785 = vor.u32 %v780, %v784
      %v787 = vsel %vm360, %v785, 0
      %v790 = vsel %vm364, %v773, 0
      %792 = vmatprep.subr.bf16.mxu0 0
      %793 = vmatpush1.bf16.msra.mxu0 %v790
      %794 = vmatprep.subr.bf16.mxu0 0
      %795 = vmatpush1.bf16.msra.mxu0 0
      %796 = vmatprep.subr.bf16.mxu0 0
      %797 = vmatpush1.bf16.msra.mxu0 0
      %798 = vmatprep.subr.bf16.mxu0 0
      %799 = vmatpush1.bf16.msra.mxu0 0
      %800 = vmatprep.subr.bf16.mxu0 0
      %801 = vmatpush1.bf16.msra.mxu0 0
      %802 = vmatprep.subr.bf16.mxu0 0
      %803 = vmatpush1.bf16.msra.mxu0 0
      %804 = vmatprep.subr.bf16.mxu0 0
      %805 = vmatpush1.bf16.msra.mxu0 0
      %806 = vmatprep.subr.bf16.mxu0 0
      %807 = vmatpush1.bf16.msra.mxu0 0
      %808 = vmatprep.subr.bf16.mxu0 0
      %809 = vmatpush1.bf16.msra.mxu0 0
      %810 = vmatprep.subr.bf16.mxu0 0
      %811 = vmatpush1.bf16.msra.mxu0 0
      %812 = vmatprep.subr.bf16.mxu0 0
      %813 = vmatpush1.bf16.msra.mxu0 0
      %814 = vmatprep.subr.bf16.mxu0 0
      %815 = vmatpush1.bf16.msra.mxu0 0
      %816 = vmatprep.subr.bf16.mxu0 0
      %817 = vmatpush1.bf16.msra.mxu0 0
      %818 = vmatprep.subr.bf16.mxu0 0
      %819 = vmatpush1.bf16.msra.mxu0 0
      %820 = vmatprep.subr.bf16.mxu0 0
      %821 = vmatpush1.bf16.msra.mxu0 0
      %822 = vmatprep.subr.bf16.mxu0 0
      %823 = vmatpush1.bf16.msra.mxu0 0
      %824 = vmatprep.mubr.bf16.mxu0 0
      %825 = vmatmul.mubr.bf16.gmra.mrb[0].mxu0 %v787
      %v826 = vpop.f32.mrb[0].mxu0
      %v827 = vadd.f32 0.0, %v826
      %v828 = vpop.f32.mrb[0].mxu0
      %v829 = vpop.f32.mrb[0].mxu0
      %v830 = vpop.f32.mrb[0].mxu0
      %831 = vdwg.mxu0
      %v832 = vadd.f32 %v771, %v827
      %v833 = vld [vmem:[%s5] sm:$0x1]
      %v835 = vlaneseq
      %v836 = vshrl.u32 %v835, 7
      %v837 = vsub.s32 0, %v836
      %v838 = vrot.slane %v833, %v837
      %v840 = vadd.f32 %v832, %v838
      %v841 = vmax.f32 %v840, 0.0
      %v842 = vpack.c.bf16 %v841, %v841
      %843 = vst [vmem:[%s331] sm:$0xf] %v842
      %p844 = scmp.lt.s32.totalorder %s21, 1
      %s845 = scalar_select %p844, %s21, 1
      %p846 = scmp.lt.s32.totalorder %s22, 7
      %s847 = scalar_select %p846, %s22, 7
      %s848 = smul.addr %s845, 8
      %s849 = sadd.s32 %s847, %s848
      %s850 = smul.addr %s849, 4
      %s851 = scalar_lea.vmem %s6, %s850
      // Predicated region
      $region45: #{_backbone_apply.4} parent=43 // pred_check
        %p852 = pneg %p195
      $region46: #{_backbone_apply.4} parent=43 // pred_check_branch
        %854 = sbr.rel (%p852) target = $region48
      $region47: #{_backbone_apply.4} parent=43 // pred_region
        _
      $region48: #{_backbone_apply.4} parent=43 // pred_fallthru
        _
    $region44: #{_backbone_apply.4} parent=5 // pred_fallthru
      _
    %p855 = scmp.le.s32.totalorder 2, %s12
    // Predicated region
    $region49: #{_backbone_apply.4} parent=5 // pred_check
      %p856 = pneg %p855
    $region50: #{_backbone_apply.4} parent=5 // pred_check_branch
      %858 = sbr.rel (%p856) target = $region52
    $region51: #{_backbone_apply.4} parent=5 // pred_region
      %s859 = ssub.s32 %s12, 2
      // Predicated region
      $region53: #{_backbone_apply.4} parent=51 // pred_check
        %p860 = pneg %p201
      $region54: #{_backbone_apply.4} parent=51 // pred_check_branch
        %862 = sbr.rel (%p860) target = $region56
      $region55: #{_backbone_apply.4} parent=51 // pred_region
        %p863 = scmp.lt.s32.totalorder %s23, 1
        %s864 = scalar_select %p863, %s23, 1
        %p865 = scmp.lt.s32.totalorder %s24, 7
        %s866 = scalar_select %p865, %s24, 7
        %s867 = smul.addr %s864, 8
        %s868 = sadd.s32 %s866, %s867
        %s869 = smul.addr %s868, 4
        %s870 = scalar_lea.vmem %s6, %s869
      $region56: #{_backbone_apply.4} parent=51 // pred_fallthru
        _
    $region52: #{_backbone_apply.4} parent=5 // pred_fallthru
      _
  $region6: #{_backbone_apply.4} parent=0 // loop_footer
    %s16 = sadd.s32 1, %s12
  $region7: #{_backbone_apply.4} parent=0 // loop_footer_branch
    %11 = sbr.rel target = $region3
  $region8: #{_backbone_apply.4} parent=0 // loop_exit
    _

// kernel: _backbone_apply.5
$region0: #{_backbone_apply.5}
  #allocation0 [shape = 'u32[]', space=smem, size = 0x4, offset = 0x4, fixed_abs, tag = 'smem constant byte address 0x4 - core index']
  #allocation1 [shape = 'u32[144,128]{1,0:T(1,128)}', space=vmem, size = 0x12000, scoped, tag = 'internal scratch']
  %s0 = inlined_call_operand.vmem [shape: bf16[2,5,5,8], index: 0, kind: input, shape index: {}]
  %s1 = inlined_call_operand.vmem [shape: bf16[2,5,5,8], index: 1, kind: input, shape index: {}]
  %s2 = inlined_call_operand.vmem [shape: bf16[2,5,5,8], index: 2, kind: input, shape index: {}]
  %s3 = inlined_call_operand.vmem [shape: bf16[2,5,5,8], index: 3, kind: input, shape index: {}]
  %s4 = inlined_call_operand.vmem [shape: bf16[9,8,128], index: 4, kind: input, shape index: {}]
  %s5 = inlined_call_operand.vmem [shape: f32[1,128], index: 5, kind: input, shape index: {}]
  %s6 = inlined_call_operand.vmem [shape: bf16[2,4,4,128], index: 6, kind: output, shape index: {}]
  %s7 = sld [smem:[#allocation0]]
  $region57: #{_backbone_apply.5} parent=0
    _
  %s9 = ssub.s32 1, %s7
  %s10 = scalar_select 0, %s9, %s7
  loop: start=0, step=1, limit=10
  $region2: #{_backbone_apply.5} parent=0 // loop_pre_header
    _
  $region3: #{_backbone_apply.5} parent=0 // loop_header
    %s12 = sphi 0, %s16
    %p13 = scmp.ge.s32.totalorder %s12, 10
    %s19 = sphi 0, %s31
    %s20 = sphi 0, %s27
    %s21 = sphi 0, %s19
    %s22 = sphi 0, %s20
    %s23 = sphi 0, %s21
    %s24 = sphi 0, %s22
    %s34 = sphi 0, %s36
    %s37 = sphi 0, %s34
    %s38 = sphi 0, %s37
    %s54 = sphi 0, %s38
    %s60 = sphi 0, %s62
    %s63 = sphi 0, %s60
    %s64 = sphi 0, %s63
    %s80 = sphi 0, %s64
    %s86 = sphi 0, %s88
    %s89 = sphi 0, %s86
    %s90 = sphi 0, %s89
    %s106 = sphi 0, %s90
    %s112 = sphi 0, %s114
    %s115 = sphi 0, %s112
    %s116 = sphi 0, %s115
    %s132 = sphi 0, %s116
    %s136 = sphi 0, %s136
    %s138 = sphi 0, %s136
    %s139 = sphi 0, %s138
    %s153 = sphi 0, %s139
    %s157 = sphi 0, %s157
    %s159 = sphi 0, %s157
    %s160 = sphi 0, %s159
    %s174 = sphi 0, %s160
    %s182 = sphi 0, %s184
    %s185 = sphi 0, %s182
    %s186 = sphi 0, %s185
    %s202 = sphi 0, %s186
  $region4: #{_backbone_apply.5} parent=0 // loop_header_branch
    %15 = sbr.rel (%p13) target = $region8
  $region5: #{_backbone_apply.5} parent=0 // loop_body
    %s17 = ssub.s32 %s12, 1
    %s18 = ssub.s32 %s12, 2
    %s25 = sadd.s32 1, %s20
    %p26 = scmp.ge.s32.totalorder %s25, 4
    %s27 = scalar_select %p26, 0, %s25
    %s28 = sadd.s32 1, %s19
    %s29 = scalar_select %p26, %s28, %s19
    %p30 = scmp.ge.s32.totalorder %s29, 2
    %s31 = scalar_select %p30, 0, %s29
    %s32 = ssub.s32 %s19, %s31
    %p33 = scmp.eq.s32.totalorder %s32, 0
    %s35 = sadd.s32 %s34, 1
    %s36 = scalar_select %p33, %s34, %s35
    %p39 = pneg %p33
    %p40 = scmp.eq.s32.totalorder %s12, 7
    %p41 = por %p39, %p40
    %p42 = scmp.ne.s32.totalorder %s34, %s37
    %p43 = scmp.eq.s32.totalorder %s12, 0
    %p44 = por %p42, %p43
    %p45 = scmp.ne.s32.totalorder %s34, %s37
    %p46 = scmp.eq.s32.totalorder %s17, 7
    %p47 = por %p45, %p46
    %p48 = scmp.ne.s32.totalorder %s37, %s38
    %p49 = scmp.eq.s32.totalorder %s17, 0
    %p50 = por %p48, %p49
    %p51 = scmp.ne.s32.totalorder %s37, %s38
    %p52 = scmp.eq.s32.totalorder %s18, 7
    %p53 = por %p51, %p52
    %p55 = scmp.ne.s32.totalorder %s38, %s54
    %p56 = scmp.eq.s32.totalorder %s18, 0
    %p57 = por %p55, %p56
    %s58 = ssub.s32 %s19, %s31
    %p59 = scmp.eq.s32.totalorder %s58, 0
    %s61 = sadd.s32 %s60, 1
    %s62 = scalar_select %p59, %s60, %s61
    %p65 = pneg %p59
    %p66 = scmp.eq.s32.totalorder %s12, 7
    %p67 = por %p65, %p66
    %p68 = scmp.ne.s32.totalorder %s60, %s63
    %p69 = scmp.eq.s32.totalorder %s12, 0
    %p70 = por %p68, %p69
    %p71 = scmp.ne.s32.totalorder %s60, %s63
    %p72 = scmp.eq.s32.totalorder %s17, 7
    %p73 = por %p71, %p72
    %p74 = scmp.ne.s32.totalorder %s63, %s64
    %p75 = scmp.eq.s32.totalorder %s17, 0
    %p76 = por %p74, %p75
    %p77 = scmp.ne.s32.totalorder %s63, %s64
    %p78 = scmp.eq.s32.totalorder %s18, 7
    %p79 = por %p77, %p78
    %p81 = scmp.ne.s32.totalorder %s64, %s80
    %p82 = scmp.eq.s32.totalorder %s18, 0
    %p83 = por %p81, %p82
    %s84 = ssub.s32 %s19, %s31
    %p85 = scmp.eq.s32.totalorder %s84, 0
    %s87 = sadd.s32 %s86, 1
    %s88 = scalar_select %p85, %s86, %s87
    %p91 = pneg %p85
    %p92 = scmp.eq.s32.totalorder %s12, 7
    %p93 = por %p91, %p92
    %p94 = scmp.ne.s32.totalorder %s86, %s89
    %p95 = scmp.eq.s32.totalorder %s12, 0
    %p96 = por %p94, %p95
    %p97 = scmp.ne.s32.totalorder %s86, %s89
    %p98 = scmp.eq.s32.totalorder %s17, 7
    %p99 = por %p97, %p98
    %p100 = scmp.ne.s32.totalorder %s89, %s90
    %p101 = scmp.eq.s32.totalorder %s17, 0
    %p102 = por %p100, %p101
    %p103 = scmp.ne.s32.totalorder %s89, %s90
    %p104 = scmp.eq.s32.totalorder %s18, 7
    %p105 = por %p103, %p104
    %p107 = scmp.ne.s32.totalorder %s90, %s106
    %p108 = scmp.eq.s32.totalorder %s18, 0
    %p109 = por %p107, %p108
    %s110 = ssub.s32 %s19, %s31
    %p111 = scmp.eq.s32.totalorder %s110, 0
    %s113 = sadd.s32 %s112, 1
    %s114 = scalar_select %p111, %s112, %s113
    %p117 = pneg %p111
    %p118 = scmp.eq.s32.totalorder %s12, 7
    %p119 = por %p117, %p118
    %p120 = scmp.ne.s32.totalorder %s112, %s115
    %p121 = scmp.eq.s32.totalorder %s12, 0
    %p122 = por %p120, %p121
    %p123 = scmp.ne.s32.totalorder %s112, %s115
    %p124 = scmp.eq.s32.totalorder %s17, 7
    %p125 = por %p123, %p124
    %p126 = scmp.ne.s32.totalorder %s115, %s116
    %p127 = scmp.eq.s32.totalorder %s17, 0
    %p128 = por %p126, %p127
    %p129 = scmp.ne.s32.totalorder %s115, %s116
    %p130 = scmp.eq.s32.totalorder %s18, 7
    %p131 = por %p129, %p130
    %p133 = scmp.ne.s32.totalorder %s116, %s132
    %p134 = scmp.eq.s32.totalorder %s18, 0
    %p135 = por %p133, %p134
    %s137 = sadd.s32 %s136, 1
    %p140 = scmp.eq.s32.totalorder %s12, 7
    %p141 = scmp.ne.s32.totalorder %s136, %s138
    %p142 = scmp.eq.s32.totalorder %s12, 0
    %p143 = por %p141, %p142
    %p144 = scmp.ne.s32.totalorder %s136, %s138
    %p145 = scmp.eq.s32.totalorder %s17, 7
    %p146 = por %p144, %p145
    %p147 = scmp.ne.s32.totalorder %s138, %s139
    %p148 = scmp.eq.s32.totalorder %s17, 0
    %p149 = por %p147, %p148
    %p150 = scmp.ne.s32.totalorder %s138, %s139
    %p151 = scmp.eq.s32.totalorder %s18, 7
    %p152 = por %p150, %p151
    %p154 = scmp.ne.s32.totalorder %s139, %s153
    %p155 = scmp.eq.s32.totalorder %s18, 0
    %p156 = por %p154, %p155
    %s158 = sadd.s32 %s157, 1
    %p161 = scmp.eq.s32.totalorder %s12, 7
    %p162 = scmp.ne.s32.totalorder %s157, %s159
    %p163 = scmp.eq.s32.totalorder %s12, 0
    %p164 = por %p162, %p163
    %p165 = scmp.ne.s32.totalorder %s157, %s159
    %p166 = scmp.eq.s32.totalorder %s17, 7
    %p167 = por %p165, %p166
    %p168 = scmp.ne.s32.totalorder %s159, %s160
    %p169 = scmp.eq.s32.totalorder %s17, 0
    %p170 = por %p168, %p169
    %p171 = scmp.ne.s32.totalorder %s159, %s160
    %p172 = scmp.eq.s32.totalorder %s18, 7
    %p173 = por %p171, %p172
    %p175 = scmp.ne.s32.totalorder %s160, %s174
    %p176 = scmp.eq.s32.totalorder %s18, 0
    %p177 = por %p175, %p176
    %s178 = ssub.s32 %s19, %s31
    %s179 = ssub.s32 %s20, %s27
    %s180 = sor.u32 %s178, %s179
    %p181 = scmp.eq.s32.totalorder %s180, 0
    %s183 = sadd.s32 %s182, 1
    %s184 = scalar_select %p181, %s182, %s183
    %p187 = pneg %p181
    %p188 = scmp.eq.s32.totalorder %s12, 7
    %p189 = por %p187, %p188
    %p190 = scmp.ne.s32.totalorder %s182, %s185
    %p191 = scmp.eq.s32.totalorder %s12, 0
    %p192 = por %p190, %p191
    %p193 = scmp.ne.s32.totalorder %s182, %s185
    %p194 = scmp.eq.s32.totalorder %s17, 7
    %p195 = por %p193, %p194
    %p196 = scmp.ne.s32.totalorder %s185, %s186
    %p197 = scmp.eq.s32.totalorder %s17, 0
    %p198 = por %p196, %p197
    %p199 = scmp.ne.s32.totalorder %s185, %s186
    %p200 = scmp.eq.s32.totalorder %s18, 7
    %p201 = por %p199, %p200
    %p203 = scmp.ne.s32.totalorder %s186, %s202
    %p204 = scmp.eq.s32.totalorder %s18, 0
    %p205 = por %p203, %p204
    %p206 = scmp.le.s32.totalorder 1, %s12
    %p207 = scmp.lt.s32.totalorder %s12, 9
    %p208 = pnand %p206, %p207
    %p209 = pneg %p208
    // Predicated region
    $region9: #{_backbone_apply.5} parent=5 // pred_check
      _
    $region10: #{_backbone_apply.5} parent=5 // pred_check_branch
      %211 = sbr.rel (%p208) target = $region12
    $region11: #{_backbone_apply.5} parent=5 // pred_region
      %s212 = ssub.s32 %s12, 1
      // Predicated region
      $region13: #{_backbone_apply.5} parent=11 // pred_check
        %p213 = pneg %p149
      $region14: #{_backbone_apply.5} parent=11 // pred_check_branch
        %215 = sbr.rel (%p213) target = $region16
      $region15: #{_backbone_apply.5} parent=11 // pred_region
        _
      $region16: #{_backbone_apply.5} parent=11 // pred_fallthru
        _
      // Predicated region
      $region17: #{_backbone_apply.5} parent=11 // pred_check
        %p216 = pneg %p170
      $region18: #{_backbone_apply.5} parent=11 // pred_check_branch
        %218 = sbr.rel (%p216) target = $region20
      $region19: #{_backbone_apply.5} parent=11 // pred_region
        _
      $region20: #{_backbone_apply.5} parent=11 // pred_fallthru
        _
    $region12: #{_backbone_apply.5} parent=5 // pred_fallthru
      _
    %p219 = scmp.lt.s32.totalorder %s12, 8
    // Predicated region
    $region21: #{_backbone_apply.5} parent=5 // pred_check
      %p220 = pneg %p219
    $region22: #{_backbone_apply.5} parent=5 // pred_check_branch
      %222 = sbr.rel (%p220) target = $region24
    $region23: #{_backbone_apply.5} parent=5 // pred_region
      // Predicated region
      $region25: #{_backbone_apply.5} parent=23 // pred_check
        %p223 = pneg %p44
      $region26: #{_backbone_apply.5} parent=23 // pred_check_branch
        %225 = sbr.rel (%p223) target = $region28
      $region27: #{_backbone_apply.5} parent=23 // pred_region
        %p226 = scmp.lt.s32.totalorder %s19, 1
        %s227 = scalar_select %p226, %s19, 1
        %s228 = smul.addr %s227, 5
        %s229 = smul.addr %s228, 4
        %s230 = scalar_lea.vmem %s0, %s229
      $region28: #{_backbone_apply.5} parent=23 // pred_fallthru
        _
      // Predicated region
      $region29: #{_backbone_apply.5} parent=23 // pred_check
        %p231 = pneg %p70
      $region30: #{_backbone_apply.5} parent=23 // pred_check_branch
        %233 = sbr.rel (%p231) target = $region32
      $region31: #{_backbone_apply.5} parent=23 // pred_region
        %p234 = scmp.lt.s32.totalorder %s19, 1
        %s235 = scalar_select %p234, %s19, 1
        %s236 = smul.addr %s235, 5
        %s237 = smul.addr %s236, 4
        %s238 = scalar_lea.vmem %s1, %s237
      $region32: #{_backbone_apply.5} parent=23 // pred_fallthru
        _
      // Predicated region
      $region33: #{_backbone_apply.5} parent=23 // pred_check
        %p239 = pneg %p96
      $region34: #{_backbone_apply.5} parent=23 // pred_check_branch
        %241 = sbr.rel (%p239) target = $region36
      $region35: #{_backbone_apply.5} parent=23 // pred_region
        %p242 = scmp.lt.s32.totalorder %s19, 1
        %s243 = scalar_select %p242, %s19, 1
        %s244 = smul.addr %s243, 5
        %s245 = smul.addr %s244, 4
        %s246 = scalar_lea.vmem %s2, %s245
      $region36: #{_backbone_apply.5} parent=23 // pred_fallthru
        _
      // Predicated region
      $region37: #{_backbone_apply.5} parent=23 // pred_check
        %p247 = pneg %p122
      $region38: #{_backbone_apply.5} parent=23 // pred_check_branch
        %249 = sbr.rel (%p247) target = $region40
      $region39: #{_backbone_apply.5} parent=23 // pred_region
        %p250 = scmp.lt.s32.totalorder %s19, 1
        %s251 = scalar_select %p250, %s19, 1
        %s252 = smul.addr %s251, 5
        %s253 = smul.addr %s252, 4
        %s254 = scalar_lea.vmem %s3, %s253
      $region40: #{_backbone_apply.5} parent=23 // pred_fallthru
        _
    $region24: #{_backbone_apply.5} parent=5 // pred_fallthru
      _
    %p255 = scmp.le.s32.totalorder 1, %s12
    %p256 = scmp.lt.s32.totalorder %s12, 9
    %p257 = pnand %p255, %p256
    %p258 = pneg %p257
    // Predicated region
    $region41: #{_backbone_apply.5} parent=5 // pred_check
      _
    $region42: #{_backbone_apply.5} parent=5 // pred_check_branch
      %260 = sbr.rel (%p257) target = $region44
    $region43: #{_backbone_apply.5} parent=5 // pred_region
      %s261 = ssub.s32 %s12, 1
      %p262 = scmp.lt.s32.totalorder %s21, 1
      %s263 = scalar_select %p262, %s21, 1
      %s264 = smul.addr %s263, 5
      %s265 = smul.addr %s264, 4
      %s266 = scalar_lea.vmem %s0, %s265
      %p267 = pneg %p50
      %p268 = pneg %p47
      %p269 = scmp.lt.s32.totalorder %s21, 1
      %s270 = scalar_select %p269, %s21, 1
      %s271 = smul.addr %s270, 5
      %s272 = smul.addr %s271, 4
      %s273 = scalar_lea.vmem %s1, %s272
      %p274 = pneg %p76
      %p275 = pneg %p73
      %p276 = scmp.lt.s32.totalorder %s21, 1
      %s277 = scalar_select %p276, %s21, 1
      %s278 = smul.addr %s277, 5
      %s279 = smul.addr %s278, 4
      %s280 = scalar_lea.vmem %s2, %s279
      %p281 = pneg %p102
      %p282 = pneg %p99
      %p283 = scmp.lt.s32.totalorder %s21, 1
      %s284 = scalar_select %p283, %s21, 1
      %s285 = smul.addr %s284, 5
      %s286 = smul.addr %s285, 4
      %s287 = scalar_lea.vmem %s3, %s286
      %p288 = pneg %p128
      %p289 = pneg %p125
      %p290 = pneg %p149
      %p291 = pneg %p146
      %p292 = pneg %p170
      %p293 = pneg %p167
      %p294 = pneg %p198
      %p295 = pneg %p195
      %p296 = scmp.lt.s32.totalorder %s21, 1
      %s297 = scalar_select %p296, %s21, 1
      %p298 = scmp.lt.s32.totalorder %s22, 3
      %s299 = scalar_select %p298, %s22, 3
      %s300 = smul.addr %s297, 4
      %s301 = sadd.s32 %s299, %s300
      %s302 = smul.addr %s301, 2
      %s303 = scalar_lea.vmem %s6, %s302
      %p304 = scmp.lt.s32.totalorder %s21, 1
      %s305 = scalar_select %p304, %s21, 1
      %s306 = smul.addr %s305, 5
      %s307 = smul.addr %s306, 4
      %s308 = scalar_lea.vmem %s0, %s307
      %p309 = scmp.lt.s32.totalorder %s21, 1
      %s310 = scalar_select %p309, %s21, 1
      %s311 = smul.addr %s310, 5
      %s312 = smul.addr %s311, 4
      %s313 = scalar_lea.vmem %s1, %s312
      %p314 = scmp.lt.s32.totalorder %s21, 1
      %s315 = scalar_select %p314, %s21, 1
      %s316 = smul.addr %s315, 5
      %s317 = smul.addr %s316, 4
      %s318 = scalar_lea.vmem %s2, %s317
      %p319 = scmp.lt.s32.totalorder %s21, 1
      %s320 = scalar_select %p319, %s21, 1
      %s321 = smul.addr %s320, 5
      %s322 = smul.addr %s321, 4
      %s323 = scalar_lea.vmem %s3, %s322
      %p324 = scmp.lt.s32.totalorder %s21, 1
      %s325 = scalar_select %p324, %s21, 1
      %p326 = scmp.lt.s32.totalorder %s22, 3
      %s327 = scalar_select %p326, %s22, 3
      %s328 = smul.addr %s325, 4
      %s329 = sadd.s32 %s327, %s328
      %s330 = smul.addr %s329, 2
      %s331 = scalar_lea.vmem %s6, %s330
      %s333 = smul.addr %s22, 4
      %s334 = scalar_lea.vmem %s308, %s333
      %v335 = vld [vmem:[%s334] sm:$0x7]
      %s336 = smul.addr %s22, 4
      %s337 = scalar_lea.vmem %s313, %s336
      %v338 = vld [vmem:[%s337] sm:$0x7]
      %s339 = sadd.s32 %s22, 1
      %s340 = smul.addr %s339, 4
      %s341 = scalar_lea.vmem %s308, %s340
      %v342 = vld [vmem:[%s341] sm:$0x7]
      %s343 = smul.addr %s339, 4
      %s344 = scalar_lea.vmem %s313, %s343
      %v345 = vld [vmem:[%s344] sm:$0x7]
      %s346 = smul.addr %s22, 4
      %s347 = scalar_lea.vmem %s318, %s346
      %v348 = vld [vmem:[%s347] sm:$0x7]
      %s349 = smul.addr %s22, 4
      %s350 = scalar_lea.vmem %s323, %s349
      %v351 = vld [vmem:[%s350] sm:$0x7]
      %v352 = vld [vmem:[%s4] sm:$0xf]
      %s353 = scalar_lea.vmem %s4, 4
      %v354 = vld [vmem:[%s353] sm:$0xf]
      %vm355 = vcmask 64512
      %v357 = vsel %vm355, %v338, 0
      %vm359 = vcmask 1043456
      %v361 = vsel %vm359, %v354, 0
      %363 = vmatprep.subr.bf16.mxu0 0
      %364 = vmatpush1.bf16.msra.mxu0 %v361
      %365 = vmatprep.subr.bf16.mxu0 0
      %366 = vmatpush1.bf16.msra.mxu0 0
      %367 = vmatprep.subr.bf16.mxu0 0
      %368 = vmatpush1.bf16.msra.mxu0 0
      %369 = vmatprep.subr.bf16.mxu0 0
      %370 = vmatpush1.bf16.msra.mxu0 0
      %371 = vmatprep.subr.bf16.mxu0 0
      %372 = vmatpush1.bf16.msra.mxu0 0
      %373 = vmatprep.subr.bf16.mxu0 0
      %374 = vmatpush1.bf16.msra.mxu0 0
      %375 = vmatprep.subr.bf16.mxu0 0
      %376 = vmatpush1.bf16.msra.mxu0 0
      %377 = vmatprep.subr.bf16.mxu0 0
      %378 = vmatpush1.bf16.msra.mxu0 0
      %379 = vmatprep.subr.bf16.mxu0 0
      %380 = vmatpush1.bf16.msra.mxu0 0
      %381 = vmatprep.subr.bf16.mxu0 0
      %382 = vmatpush1.bf16.msra.mxu0 0
      %383 = vmatprep.subr.bf16.mxu0 0
      %384 = vmatpush1.bf16.msra.mxu0 0
      %385 = vmatprep.subr.bf16.mxu0 0
      %386 = vmatpush1.bf16.msra.mxu0 0
      %387 = vmatprep.subr.bf16.mxu0 0
      %388 = vmatpush1.bf16.msra.mxu0 0
      %389 = vmatprep.subr.bf16.mxu0 0
      %390 = vmatpush1.bf16.msra.mxu0 0
      %391 = vmatprep.subr.bf16.mxu0 0
      %392 = vmatpush1.bf16.msra.mxu0 0
      %393 = vmatprep.subr.bf16.mxu0 0
      %394 = vmatpush1.bf16.msra.mxu0 0
      %395 = vmatprep.mubr.bf16.mxu0 0
      %396 = vmatmul.mubr.bf16.gmra.mrb[0].mxu0 %v357
      %v397 = vpop.f32.mrb[0].mxu0
      %v398 = vadd.f32 0.0, %v397
      %v399 = vpop.f32.mrb[0].mxu0
      %v400 = vpop.f32.mrb[0].mxu0
      %v401 = vpop.f32.mrb[0].mxu0
      %402 = vdwg.mxu0
      %v404 = vsel %vm355, %v335, 0
      %v407 = vsel %vm359, %v352, 0
      %409 = vmatprep.subr.bf16.mxu0 0
      %410 = vmatpush1.bf16.msra.mxu0 %v407
      %411 = vmatprep.subr.bf16.mxu0 0
      %412 = vmatpush1.bf16.msra.mxu0 0
      %413 = vmatprep.subr.bf16.mxu0 0
      %414 = vmatpush1.bf16.msra.mxu0 0
      %415 = vmatprep.subr.bf16.mxu0 0
      %416 = vmatpush1.bf16.msra.mxu0 0
      %417 = vmatprep.subr.bf16.mxu0 0
      %418 = vmatpush1.bf16.msra.mxu0 0
      %419 = vmatprep.subr.bf16.mxu0 0
      %420 = vmatpush1.bf16.msra.mxu0 0
      %421 = vmatprep.subr.bf16.mxu0 0
      %422 = vmatpush1.bf16.msra.mxu0 0
      %423 = vmatprep.subr.bf16.mxu0 0
      %424 = vmatpush1.bf16.msra.mxu0 0
      %425 = vmatprep.subr.bf16.mxu0 0
      %426 = vmatpush1.bf16.msra.mxu0 0
      %427 = vmatprep.subr.bf16.mxu0 0
      %428 = vmatpush1.bf16.msra.mxu0 0
      %429 = vmatprep.subr.bf16.mxu0 0
      %430 = vmatpush1.bf16.msra.mxu0 0
      %431 = vmatprep.subr.bf16.mxu0 0
      %432 = vmatpush1.bf16.msra.mxu0 0
      %433 = vmatprep.subr.bf16.mxu0 0
      %434 = vmatpush1.bf16.msra.mxu0 0
      %435 = vmatprep.subr.bf16.mxu0 0
      %436 = vmatpush1.bf16.msra.mxu0 0
      %437 = vmatprep.subr.bf16.mxu0 0
      %438 = vmatpush1.bf16.msra.mxu0 0
      %439 = vmatprep.subr.bf16.mxu0 0
      %440 = vmatpush1.bf16.msra.mxu0 0
      %441 = vmatprep.mubr.bf16.mxu0 0
      %442 = vmatmul.mubr.bf16.gmra.mrb[0].mxu0 %v404
      %v443 = vpop.f32.mrb[0].mxu0
      %v444 = vadd.f32 %v398, %v443
      %v445 = vpop.f32.mrb[0].mxu0
      %v446 = vpop.f32.mrb[0].mxu0
      %v447 = vpop.f32.mrb[0].mxu0
      %448 = vdwg.mxu0
      %s449 = scalar_lea.vmem %s4, 8
      %v450 = vld [vmem:[%s449] sm:$0xf]
      %v452 = vunpack.c.l.b16 %v335
      %v453 = vpack.c.b16 %v452, %v452
      %v455 = vshrl.u32 %v453, 16
      %v457 = vshll.u32 %v453, 16
      %v459 = vrot.slane %v457, 1
      %v460 = vor.u32 %v455, %v459
      %v462 = vsel %vm355, %v460, 0
      %v465 = vsel %vm359, %v450, 0
      %467 = vmatprep.subr.bf16.mxu0 0
      %468 = vmatpush1.bf16.msra.mxu0 %v465
      %469 = vmatprep.subr.bf16.mxu0 0
      %470 = vmatpush1.bf16.msra.mxu0 0
      %471 = vmatprep.subr.bf16.mxu0 0
      %472 = vmatpush1.bf16.msra.mxu0 0
      %473 = vmatprep.subr.bf16.mxu0 0
      %474 = vmatpush1.bf16.msra.mxu0 0
      %475 = vmatprep.subr.bf16.mxu0 0
      %476 = vmatpush1.bf16.msra.mxu0 0
      %477 = vmatprep.subr.bf16.mxu0 0
      %478 = vmatpush1.bf16.msra.mxu0 0
      %479 = vmatprep.subr.bf16.mxu0 0
      %480 = vmatpush1.bf16.msra.mxu0 0
      %481 = vmatprep.subr.bf16.mxu0 0
      %482 = vmatpush1.bf16.msra.mxu0 0
      %483 = vmatprep.subr.bf16.mxu0 0
      %484 = vmatpush1.bf16.msra.mxu0 0
      %485 = vmatprep.subr.bf16.mxu0 0
      %486 = vmatpush1.bf16.msra.mxu0 0
      %487 = vmatprep.subr.bf16.mxu0 0
      %488 = vmatpush1.bf16.msra.mxu0 0
      %489 = vmatprep.subr.bf16.mxu0 0
      %490 = vmatpush1.bf16.msra.mxu0 0
      %491 = vmatprep.subr.bf16.mxu0 0
      %492 = vmatpush1.bf16.msra.mxu0 0
      %493 = vmatprep.subr.bf16.mxu0 0
      %494 = vmatpush1.bf16.msra.mxu0 0
      %495 = vmatprep.subr.bf16.mxu0 0
      %496 = vmatpush1.bf16.msra.mxu0 0
      %497 = vmatprep.subr.bf16.mxu0 0
      %498 = vmatpush1.bf16.msra.mxu0 0
      %499 = vmatprep.mubr.bf16.mxu0 0
      %500 = vmatmul.mubr.bf16.gmra.mrb[0].mxu0 %v462
      %v501 = vpop.f32.mrb[0].mxu0
      %v502 = vadd.f32 0.0, %v501
      %v503 = vpop.f32.mrb[0].mxu0
      %v504 = vpop.f32.mrb[0].mxu0
      %v505 = vpop.f32.mrb[0].mxu0
      %506 = vdwg.mxu0
      %v507 = vadd.f32 %v444, %v502
      %s508 = scalar_lea.vmem %s4, 12
      %v509 = vld [vmem:[%s508] sm:$0xf]
      %v511 = vsel %vm355, %v348, 0
      %v514 = vsel %vm359, %v509, 0
      %516 = vmatprep.subr.bf16.mxu0 0
      %517 = vmatpush1.bf16.msra.mxu0 %v514
      %518 = vmatprep.subr.bf16.mxu0 0
      %519 = vmatpush1.bf16.msra.mxu0 0
      %520 = vmatprep.subr.bf16.mxu0 0
      %521 = vmatpush1.bf16.msra.mxu0 0
      %522 = vmatprep.subr.bf16.mxu0 0
      %523 = vmatpush1.bf16.msra.mxu0 0
      %524 = vmatprep.subr.bf16.mxu0 0
      %525 = vmatpush1.bf16.msra.mxu0 0
      %526 = vmatprep.subr.bf16.mxu0 0
      %527 = vmatpush1.bf16.msra.mxu0 0
      %528 = vmatprep.subr.bf16.mxu0 0
      %529 = vmatpush1.bf16.msra.mxu0 0
      %530 = vmatprep.subr.bf16.mxu0 0
      %531 = vmatpush1.bf16.msra.mxu0 0
      %532 = vmatprep.subr.bf16.mxu0 0
      %533 = vmatpush1.bf16.msra.mxu0 0
      %534 = vmatprep.subr.bf16.mxu0 0
      %535 = vmatpush1.bf16.msra.mxu0 0
      %536 = vmatprep.subr.bf16.mxu0 0
      %537 = vmatpush1.bf16.msra.mxu0 0
      %538 = vmatprep.subr.bf16.mxu0 0
      %539 = vmatpush1.bf16.msra.mxu0 0
      %540 = vmatprep.subr.bf16.mxu0 0
      %541 = vmatpush1.bf16.msra.mxu0 0
      %542 = vmatprep.subr.bf16.mxu0 0
      %543 = vmatpush1.bf16.msra.mxu0 0
      %544 = vmatprep.subr.bf16.mxu0 0
      %545 = vmatpush1.bf16.msra.mxu0 0
      %546 = vmatprep.subr.bf16.mxu0 0
      %547 = vmatpush1.bf16.msra.mxu0 0
      %548 = vmatprep.mubr.bf16.mxu0 0
      %549 = vmatmul.mubr.bf16.gmra.mrb[0].mxu0 %v511
      %v550 = vpop.f32.mrb[0].mxu0
      %v551 = vadd.f32 0.0, %v550
      %v552 = vpop.f32.mrb[0].mxu0
      %v553 = vpop.f32.mrb[0].mxu0
      %v554 = vpop.f32.mrb[0].mxu0
      %555 = vdwg.mxu0
      %v556 = vadd.f32 %v507, %v551
      %s557 = scalar_lea.vmem %s4, 16
      %v558 = vld [vmem:[%s557] sm:$0xf]
      %v560 = vsel %vm355, %v351, 0
      %v563 = vsel %vm359, %v558, 0
      %565 = vmatprep.subr.bf16.mxu0 0
      %566 = vmatpush1.bf16.msra.mxu0 %v563
      %567 = vmatprep.subr.bf16.mxu0 0
      %568 = vmatpush1.bf16.msra.mxu0 0
      %569 = vmatprep.subr.bf16.mxu0 0
      %570 = vmatpush1.bf16.msra.mxu0 0
      %571 = vmatprep.subr.bf16.mxu0 0
      %572 = vmatpush1.bf16.msra.mxu0 0
      %573 = vmatprep.subr.bf16.mxu0 0
      %574 = vmatpush1.bf16.msra.mxu0 0
      %575 = vmatprep.subr.bf16.mxu0 0
      %576 = vmatpush1.bf16.msra.mxu0 0
      %577 = vmatprep.subr.bf16.mxu0 0
      %578 = vmatpush1.bf16.msra.mxu0 0
      %579 = vmatprep.subr.bf16.mxu0 0
      %580 = vmatpush1.bf16.msra.mxu0 0
      %581 = vmatprep.subr.bf16.mxu0 0
      %582 = vmatpush1.bf16.msra.mxu0 0
      %583 = vmatprep.subr.bf16.mxu0 0
      %584 = vmatpush1.bf16.msra.mxu0 0
      %585 = vmatprep.subr.bf16.mxu0 0
      %586 = vmatpush1.bf16.msra.mxu0 0
      %587 = vmatprep.subr.bf16.mxu0 0
      %588 = vmatpush1.bf16.msra.mxu0 0
      %589 = vmatprep.subr.bf16.mxu0 0
      %590 = vmatpush1.bf16.msra.mxu0 0
      %591 = vmatprep.subr.bf16.mxu0 0
      %592 = vmatpush1.bf16.msra.mxu0 0
      %593 = vmatprep.subr.bf16.mxu0 0
      %594 = vmatpush1.bf16.msra.mxu0 0
      %595 = vmatprep.subr.bf16.mxu0 0
      %596 = vmatpush1.bf16.msra.mxu0 0
      %597 = vmatprep.mubr.bf16.mxu0 0
      %598 = vmatmul.mubr.bf16.gmra.mrb[0].mxu0 %v560
      %v599 = vpop.f32.mrb[0].mxu0
      %v600 = vadd.f32 0.0, %v599
      %v601 = vpop.f32.mrb[0].mxu0
      %v602 = vpop.f32.mrb[0].mxu0
      %v603 = vpop.f32.mrb[0].mxu0
      %604 = vdwg.mxu0
      %v605 = vadd.f32 %v556, %v600
      %s606 = scalar_lea.vmem %s4, 20
      %v607 = vld [vmem:[%s606] sm:$0xf]
      %v609 = vunpack.c.l.b16 %v348
      %v610 = vpack.c.b16 %v609, %v609
      %v612 = vshrl.u32 %v610, 16
      %v614 = vshll.u32 %v610, 16
      %v616 = vrot.slane %v614, 1
      %v617 = vor.u32 %v612, %v616
      %v619 = vsel %vm355, %v617, 0
      %v622 = vsel %vm359, %v607, 0
      %624 = vmatprep.subr.bf16.mxu0 0
      %625 = vmatpush1.bf16.msra.mxu0 %v622
      %626 = vmatprep.subr.bf16.mxu0 0
      %627 = vmatpush1.bf16.msra.mxu0 0
      %628 = vmatprep.subr.bf16.mxu0 0
      %629 = vmatpush1.bf16.msra.mxu0 0
      %630 = vmatprep.subr.bf16.mxu0 0
      %631 = vmatpush1.bf16.msra.mxu0 0
      %632 = vmatprep.subr.bf16.mxu0 0
      %633 = vmatpush1.bf16.msra.mxu0 0
      %634 = vmatprep.subr.bf16.mxu0 0
      %635 = vmatpush1.bf16.msra.mxu0 0
      %636 = vmatprep.subr.bf16.mxu0 0
      %637 = vmatpush1.bf16.msra.mxu0 0
      %638 = vmatprep.subr.bf16.mxu0 0
      %639 = vmatpush1.bf16.msra.mxu0 0
      %640 = vmatprep.subr.bf16.mxu0 0
      %641 = vmatpush1.bf16.msra.mxu0 0
      %642 = vmatprep.subr.bf16.mxu0 0
      %643 = vmatpush1.bf16.msra.mxu0 0
      %644 = vmatprep.subr.bf16.mxu0 0
      %645 = vmatpush1.bf16.msra.mxu0 0
      %646 = vmatprep.subr.bf16.mxu0 0
      %647 = vmatpush1.bf16.msra.mxu0 0
      %648 = vmatprep.subr.bf16.mxu0 0
      %649 = vmatpush1.bf16.msra.mxu0 0
      %650 = vmatprep.subr.bf16.mxu0 0
      %651 = vmatpush1.bf16.msra.mxu0 0
      %652 = vmatprep.subr.bf16.mxu0 0
      %653 = vmatpush1.bf16.msra.mxu0 0
      %654 = vmatprep.subr.bf16.mxu0 0
      %655 = vmatpush1.bf16.msra.mxu0 0
      %656 = vmatprep.mubr.bf16.mxu0 0
      %657 = vmatmul.mubr.bf16.gmra.mrb[0].mxu0 %v619
      %v658 = vpop.f32.mrb[0].mxu0
      %v659 = vadd.f32 0.0, %v658
      %v660 = vpop.f32.mrb[0].mxu0
      %v661 = vpop.f32.mrb[0].mxu0
      %v662 = vpop.f32.mrb[0].mxu0
      %663 = vdwg.mxu0
      %v664 = vadd.f32 %v605, %v659
      %s665 = scalar_lea.vmem %s4, 24
      %v666 = vld [vmem:[%s665] sm:$0xf]
      %v668 = vsel %vm355, %v342, 0
      %v671 = vsel %vm359, %v666, 0
      %673 = vmatprep.subr.bf16.mxu0 0
      %674 = vmatpush1.bf16.msra.mxu0 %v671
      %675 = vmatprep.subr.bf16.mxu0 0
      %676 = vmatpush1.bf16.msra.mxu0 0
      %677 = vmatprep.subr.bf16.mxu0 0
      %678 = vmatpush1.bf16.msra.mxu0 0
      %679 = vmatprep.subr.bf16.mxu0 0
      %680 = vmatpush1.bf16.msra.mxu0 0
      %681 = vmatprep.subr.bf16.mxu0 0
      %682 = vmatpush1.bf16.msra.mxu0 0
      %683 = vmatprep.subr.bf16.mxu0 0
      %684 = vmatpush1.bf16.msra.mxu0 0
      %685 = vmatprep.subr.bf16.mxu0 0
      %686 = vmatpush1.bf16.msra.mxu0 0
      %687 = vmatprep.subr.bf16.mxu0 0
      %688 = vmatpush1.bf16.msra.mxu0 0
      %689 = vmatprep.subr.bf16.mxu0 0
      %690 = vmatpush1.bf16.msra.mxu0 0
      %691 = vmatprep.subr.bf16.mxu0 0
      %692 = vmatpush1.bf16.msra.mxu0 0
      %693 = vmatprep.subr.bf16.mxu0 0
      %694 = vmatpush1.bf16.msra.mxu0 0
      %695 = vmatprep.subr.bf16.mxu0 0
      %696 = vmatpush1.bf16.msra.mxu0 0
      %697 = vmatprep.subr.bf16.mxu0 0
      %698 = vmatpush1.bf16.msra.mxu0 0
      %699 = vmatprep.subr.bf16.mxu0 0
      %700 = vmatpush1.bf16.msra.mxu0 0
      %701 = vmatprep.subr.bf16.mxu0 0
      %702 = vmatpush1.bf16.msra.mxu0 0
      %703 = vmatprep.subr.bf16.mxu0 0
      %704 = vmatpush1.bf16.msra.mxu0 0
      %705 = vmatprep.mubr.bf16.mxu0 0
      %706 = vmatmul.mubr.bf16.gmra.mrb[0].mxu0 %v668
      %v707 = vpop.f32.mrb[0].mxu0
      %v708 = vadd.f32 0.0, %v707
      %v709 = vpop.f32.mrb[0].mxu0
      %v710 = vpop.f32.mrb[0].mxu0
      %v711 = vpop.f32.mrb[0].mxu0
      %712 = vdwg.mxu0
      %v713 = vadd.f32 %v664, %v708
      %s714 = scalar_lea.vmem %s4, 28
      %v715 = vld [vmem:[%s714] sm:$0xf]
      %v717 = vsel %vm355, %v345, 0
      %v720 = vsel %vm359, %v715, 0
      %722 = vmatprep.subr.bf16.mxu0 0
      %723 = vmatpush1.bf16.msra.mxu0 %v720
      %724 = vmatprep.subr.bf16.mxu0 0
      %725 = vmatpush1.bf16.msra.mxu0 0
      %726 = vmatprep.subr.bf16.mxu0 0
      %727 = vmatpush1.bf16.msra.mxu0 0
      %728 = vmatprep.subr.bf16.mxu0 0
      %729 = vmatpush1.bf16.msra.mxu0 0
      %730 = vmatprep.subr.bf16.mxu0 0
      %731 = vmatpush1.bf16.msra.mxu0 0
      %732 = vmatprep.subr.bf16.mxu0 0
      %733 = vmatpush1.bf16.msra.mxu0 0
      %734 = vmatprep.subr.bf16.mxu0 0
      %735 = vmatpush1.bf16.msra.mxu0 0
      %736 = vmatprep.subr.bf16.mxu0 0
      %737 = vmatpush1.bf16.msra.mxu0 0
      %738 = vmatprep.subr.bf16.mxu0 0
      %739 = vmatpush1.bf16.msra.mxu0 0
      %740 = vmatprep.subr.bf16.mxu0 0
      %741 = vmatpush1.bf16.msra.mxu0 0
      %742 = vmatprep.subr.bf16.mxu0 0
      %743 = vmatpush1.bf16.msra.mxu0 0
      %744 = vmatprep.subr.bf16.mxu0 0
      %745 = vmatpush1.bf16.msra.mxu0 0
      %746 = vmatprep.subr.bf16.mxu0 0
      %747 = vmatpush1.bf16.msra.mxu0 0
      %748 = vmatprep.subr.bf16.mxu0 0
      %749 = vmatpush1.bf16.msra.mxu0 0
      %750 = vmatprep.subr.bf16.mxu0 0
      %751 = vmatpush1.bf16.msra.mxu0 0
      %752 = vmatprep.subr.bf16.mxu0 0
      %753 = vmatpush1.bf16.msra.mxu0 0
      %754 = vmatprep.mubr.bf16.mxu0 0
      %755 = vmatmul.mubr.bf16.gmra.mrb[0].mxu0 %v717
      %v756 = vpop.f32.mrb[0].mxu0
      %v757 = vadd.f32 0.0, %v756
      %v758 = vpop.f32.mrb[0].mxu0
      %v759 = vpop.f32.mrb[0].mxu0
      %v760 = vpop.f32.mrb[0].mxu0
      %761 = vdwg.mxu0
      %v762 = vadd.f32 %v713, %v757
      %s763 = scalar_lea.vmem %s4, 32
      %v764 = vld [vmem:[%s763] sm:$0xf]
      %v766 = vunpack.c.l.b16 %v342
      %v767 = vpack.c.b16 %v766, %v766
      %v769 = vshrl.u32 %v767, 16
      %v771 = vshll.u32 %v767, 16
      %v773 = vrot.slane %v771, 1
      %v774 = vor.u32 %v769, %v773
      %v776 = vsel %vm355, %v774, 0
      %v779 = vsel %vm359, %v764, 0
      %781 = vmatprep.subr.bf16.mxu0 0
      %782 = vmatpush1.bf16.msra.mxu0 %v779
      %783 = vmatprep.subr.bf16.mxu0 0
      %784 = vmatpush1.bf16.msra.mxu0 0
      %785 = vmatprep.subr.bf16.mxu0 0
      %786 = vmatpush1.bf16.msra.mxu0 0
      %787 = vmatprep.subr.bf16.mxu0 0
      %788 = vmatpush1.bf16.msra.mxu0 0
      %789 = vmatprep.subr.bf16.mxu0 0
      %790 = vmatpush1.bf16.msra.mxu0 0
      %791 = vmatprep.subr.bf16.mxu0 0
      %792 = vmatpush1.bf16.msra.mxu0 0
      %793 = vmatprep.subr.bf16.mxu0 0
      %794 = vmatpush1.bf16.msra.mxu0 0
      %795 = vmatprep.subr.bf16.mxu0 0
      %796 = vmatpush1.bf16.msra.mxu0 0
      %797 = vmatprep.subr.bf16.mxu0 0
      %798 = vmatpush1.bf16.msra.mxu0 0
      %799 = vmatprep.subr.bf16.mxu0 0
      %800 = vmatpush1.bf16.msra.mxu0 0
      %801 = vmatprep.subr.bf16.mxu0 0
      %802 = vmatpush1.bf16.msra.mxu0 0
      %803 = vmatprep.subr.bf16.mxu0 0
      %804 = vmatpush1.bf16.msra.mxu0 0
      %805 = vmatprep.subr.bf16.mxu0 0
      %806 = vmatpush1.bf16.msra.mxu0 0
      %807 = vmatprep.subr.bf16.mxu0 0
      %808 = vmatpush1.bf16.msra.mxu0 0
      %809 = vmatprep.subr.bf16.mxu0 0
      %810 = vmatpush1.bf16.msra.mxu0 0
      %811 = vmatprep.subr.bf16.mxu0 0
      %812 = vmatpush1.bf16.msra.mxu0 0
      %813 = vmatprep.mubr.bf16.mxu0 0
      %814 = vmatmul.mubr.bf16.gmra.mrb[0].mxu0 %v776
      %v815 = vpop.f32.mrb[0].mxu0
      %v816 = vadd.f32 0.0, %v815
      %v817 = vpop.f32.mrb[0].mxu0
      %v818 = vpop.f32.mrb[0].mxu0
      %v819 = vpop.f32.mrb[0].mxu0
      %820 = vdwg.mxu0
      %v821 = vadd.f32 %v762, %v816
      %v822 = vld [vmem:[%s5] sm:$0x1]
      %v824 = vlaneseq
      %v825 = vshrl.u32 %v824, 7
      %v826 = vsub.s32 0, %v825
      %v827 = vrot.slane %v822, %v826
      %v829 = vadd.f32 %v821, %v827
      %v830 = vmax.f32 %v829, 0.0
      %v831 = vpack.c.bf16 %v830, %v830
      %832 = vst [vmem:[%s331] sm:$0x3] %v831
      %p833 = scmp.lt.s32.totalorder %s21, 1
      %s834 = scalar_select %p833, %s21, 1
      %p835 = scmp.lt.s32.totalorder %s22, 3
      %s836 = scalar_select %p835, %s22, 3
      %s837 = smul.addr %s834, 4
      %s838 = sadd.s32 %s836, %s837
      %s839 = smul.addr %s838, 2
      %s840 = scalar_lea.vmem %s6, %s839
      // Predicated region
      $region45: #{_backbone_apply.5} parent=43 // pred_check
        %p841 = pneg %p195
      $region46: #{_backbone_apply.5} parent=43 // pred_check_branch
        %843 = sbr.rel (%p841) target = $region48
      $region47: #{_backbone_apply.5} parent=43 // pred_region
        _
      $region48: #{_backbone_apply.5} parent=43 // pred_fallthru
        _
    $region44: #{_backbone_apply.5} parent=5 // pred_fallthru
      _
    %p844 = scmp.le.s32.totalorder 2, %s12
    // Predicated region
    $region49: #{_backbone_apply.5} parent=5 // pred_check
      %p845 = pneg %p844
    $region50: #{_backbone_apply.5} parent=5 // pred_check_branch
      %847 = sbr.rel (%p845) target = $region52
    $region51: #{_backbone_apply.5} parent=5 // pred_region
      %s848 = ssub.s32 %s12, 2
      // Predicated region
      $region53: #{_backbone_apply.5} parent=51 // pred_check
        %p849 = pneg %p201
      $region54: #{_backbone_apply.5} parent=51 // pred_check_branch
        %851 = sbr.rel (%p849) target = $region56
      $region55: #{_backbone_apply.5} parent=51 // pred_region
        %p852 = scmp.lt.s32.totalorder %s23, 1
        %s853 = scalar_select %p852, %s23, 1
        %p854 = scmp.lt.s32.totalorder %s24, 3
        %s855 = scalar_select %p854, %s24, 3
        %s856 = smul.addr %s853, 4
        %s857 = sadd.s32 %s855, %s856
        %s858 = smul.addr %s857, 2
        %s859 = scalar_lea.vmem %s6, %s858
      $region56: #{_backbone_apply.5} parent=51 // pred_fallthru
        _
    $region52: #{_backbone_apply.5} parent=5 // pred_fallthru
      _
  $region6: #{_backbone_apply.5} parent=0 // loop_footer
    %s16 = sadd.s32 1, %s12
  $region7: #{_backbone_apply.5} parent=0 // loop_footer_branch
    %11 = sbr.rel target = $region3
  $region8: #{_backbone_apply.5} parent=0 // loop_exit
    _

// kernel: _backbone_apply.6
$region0: #{_backbone_apply.6}
  #allocation0 [shape = 'u32[]', space=smem, size = 0x4, offset = 0x4, fixed_abs, tag = 'smem constant byte address 0x4 - core index']
  #allocation1 [shape = 'u32[144,128]{1,0:T(1,128)}', space=vmem, size = 0x12000, scoped, tag = 'internal scratch']
  %s0 = inlined_call_operand.vmem [shape: bf16[2,3,3,16], index: 0, kind: input, shape index: {}]
  %s1 = inlined_call_operand.vmem [shape: bf16[2,3,3,16], index: 1, kind: input, shape index: {}]
  %s2 = inlined_call_operand.vmem [shape: bf16[2,3,3,16], index: 2, kind: input, shape index: {}]
  %s3 = inlined_call_operand.vmem [shape: bf16[2,3,3,16], index: 3, kind: input, shape index: {}]
  %s4 = inlined_call_operand.vmem [shape: bf16[9,16,128], index: 4, kind: input, shape index: {}]
  %s5 = inlined_call_operand.vmem [shape: f32[1,128], index: 5, kind: input, shape index: {}]
  %s6 = inlined_call_operand.vmem [shape: bf16[2,2,2,128], index: 6, kind: output, shape index: {}]
  %s7 = sld [smem:[#allocation0]]
  $region57: #{_backbone_apply.6} parent=0
    _
  %s9 = ssub.s32 1, %s7
  %s10 = scalar_select 0, %s9, %s7
  loop: start=0, step=1, limit=6
  $region2: #{_backbone_apply.6} parent=0 // loop_pre_header
    _
  $region3: #{_backbone_apply.6} parent=0 // loop_header
    %s12 = sphi 0, %s16
    %p13 = scmp.ge.s32.totalorder %s12, 6
    %s19 = sphi 0, %s31
    %s20 = sphi 0, %s27
    %s21 = sphi 0, %s19
    %s22 = sphi 0, %s20
    %s23 = sphi 0, %s21
    %s24 = sphi 0, %s22
    %s34 = sphi 0, %s36
    %s37 = sphi 0, %s34
    %s38 = sphi 0, %s37
    %s54 = sphi 0, %s38
    %s60 = sphi 0, %s62
    %s63 = sphi 0, %s60
    %s64 = sphi 0, %s63
    %s80 = sphi 0, %s64
    %s86 = sphi 0, %s88
    %s89 = sphi 0, %s86
    %s90 = sphi 0, %s89
    %s106 = sphi 0, %s90
    %s112 = sphi 0, %s114
    %s115 = sphi 0, %s112
    %s116 = sphi 0, %s115
    %s132 = sphi 0, %s116
    %s136 = sphi 0, %s136
    %s138 = sphi 0, %s136
    %s139 = sphi 0, %s138
    %s153 = sphi 0, %s139
    %s157 = sphi 0, %s157
    %s159 = sphi 0, %s157
    %s160 = sphi 0, %s159
    %s174 = sphi 0, %s160
    %s182 = sphi 0, %s184
    %s185 = sphi 0, %s182
    %s186 = sphi 0, %s185
    %s202 = sphi 0, %s186
  $region4: #{_backbone_apply.6} parent=0 // loop_header_branch
    %15 = sbr.rel (%p13) target = $region8
  $region5: #{_backbone_apply.6} parent=0 // loop_body
    %s17 = ssub.s32 %s12, 1
    %s18 = ssub.s32 %s12, 2
    %s25 = sadd.s32 1, %s20
    %p26 = scmp.ge.s32.totalorder %s25, 2
    %s27 = scalar_select %p26, 0, %s25
    %s28 = sadd.s32 1, %s19
    %s29 = scalar_select %p26, %s28, %s19
    %p30 = scmp.ge.s32.totalorder %s29, 2
    %s31 = scalar_select %p30, 0, %s29
    %s32 = ssub.s32 %s19, %s31
    %p33 = scmp.eq.s32.totalorder %s32, 0
    %s35 = sadd.s32 %s34, 1
    %s36 = scalar_select %p33, %s34, %s35
    %p39 = pneg %p33
    %p40 = scmp.eq.s32.totalorder %s12, 3
    %p41 = por %p39, %p40
    %p42 = scmp.ne.s32.totalorder %s34, %s37
    %p43 = scmp.eq.s32.totalorder %s12, 0
    %p44 = por %p42, %p43
    %p45 = scmp.ne.s32.totalorder %s34, %s37
    %p46 = scmp.eq.s32.totalorder %s17, 3
    %p47 = por %p45, %p46
    %p48 = scmp.ne.s32.totalorder %s37, %s38
    %p49 = scmp.eq.s32.totalorder %s17, 0
    %p50 = por %p48, %p49
    %p51 = scmp.ne.s32.totalorder %s37, %s38
    %p52 = scmp.eq.s32.totalorder %s18, 3
    %p53 = por %p51, %p52
    %p55 = scmp.ne.s32.totalorder %s38, %s54
    %p56 = scmp.eq.s32.totalorder %s18, 0
    %p57 = por %p55, %p56
    %s58 = ssub.s32 %s19, %s31
    %p59 = scmp.eq.s32.totalorder %s58, 0
    %s61 = sadd.s32 %s60, 1
    %s62 = scalar_select %p59, %s60, %s61
    %p65 = pneg %p59
    %p66 = scmp.eq.s32.totalorder %s12, 3
    %p67 = por %p65, %p66
    %p68 = scmp.ne.s32.totalorder %s60, %s63
    %p69 = scmp.eq.s32.totalorder %s12, 0
    %p70 = por %p68, %p69
    %p71 = scmp.ne.s32.totalorder %s60, %s63
    %p72 = scmp.eq.s32.totalorder %s17, 3
    %p73 = por %p71, %p72
    %p74 = scmp.ne.s32.totalorder %s63, %s64
    %p75 = scmp.eq.s32.totalorder %s17, 0
    %p76 = por %p74, %p75
    %p77 = scmp.ne.s32.totalorder %s63, %s64
    %p78 = scmp.eq.s32.totalorder %s18, 3
    %p79 = por %p77, %p78
    %p81 = scmp.ne.s32.totalorder %s64, %s80
    %p82 = scmp.eq.s32.totalorder %s18, 0
    %p83 = por %p81, %p82
    %s84 = ssub.s32 %s19, %s31
    %p85 = scmp.eq.s32.totalorder %s84, 0
    %s87 = sadd.s32 %s86, 1
    %s88 = scalar_select %p85, %s86, %s87
    %p91 = pneg %p85
    %p92 = scmp.eq.s32.totalorder %s12, 3
    %p93 = por %p91, %p92
    %p94 = scmp.ne.s32.totalorder %s86, %s89
    %p95 = scmp.eq.s32.totalorder %s12, 0
    %p96 = por %p94, %p95
    %p97 = scmp.ne.s32.totalorder %s86, %s89
    %p98 = scmp.eq.s32.totalorder %s17, 3
    %p99 = por %p97, %p98
    %p100 = scmp.ne.s32.totalorder %s89, %s90
    %p101 = scmp.eq.s32.totalorder %s17, 0
    %p102 = por %p100, %p101
    %p103 = scmp.ne.s32.totalorder %s89, %s90
    %p104 = scmp.eq.s32.totalorder %s18, 3
    %p105 = por %p103, %p104
    %p107 = scmp.ne.s32.totalorder %s90, %s106
    %p108 = scmp.eq.s32.totalorder %s18, 0
    %p109 = por %p107, %p108
    %s110 = ssub.s32 %s19, %s31
    %p111 = scmp.eq.s32.totalorder %s110, 0
    %s113 = sadd.s32 %s112, 1
    %s114 = scalar_select %p111, %s112, %s113
    %p117 = pneg %p111
    %p118 = scmp.eq.s32.totalorder %s12, 3
    %p119 = por %p117, %p118
    %p120 = scmp.ne.s32.totalorder %s112, %s115
    %p121 = scmp.eq.s32.totalorder %s12, 0
    %p122 = por %p120, %p121
    %p123 = scmp.ne.s32.totalorder %s112, %s115
    %p124 = scmp.eq.s32.totalorder %s17, 3
    %p125 = por %p123, %p124
    %p126 = scmp.ne.s32.totalorder %s115, %s116
    %p127 = scmp.eq.s32.totalorder %s17, 0
    %p128 = por %p126, %p127
    %p129 = scmp.ne.s32.totalorder %s115, %s116
    %p130 = scmp.eq.s32.totalorder %s18, 3
    %p131 = por %p129, %p130
    %p133 = scmp.ne.s32.totalorder %s116, %s132
    %p134 = scmp.eq.s32.totalorder %s18, 0
    %p135 = por %p133, %p134
    %s137 = sadd.s32 %s136, 1
    %p140 = scmp.eq.s32.totalorder %s12, 3
    %p141 = scmp.ne.s32.totalorder %s136, %s138
    %p142 = scmp.eq.s32.totalorder %s12, 0
    %p143 = por %p141, %p142
    %p144 = scmp.ne.s32.totalorder %s136, %s138
    %p145 = scmp.eq.s32.totalorder %s17, 3
    %p146 = por %p144, %p145
    %p147 = scmp.ne.s32.totalorder %s138, %s139
    %p148 = scmp.eq.s32.totalorder %s17, 0
    %p149 = por %p147, %p148
    %p150 = scmp.ne.s32.totalorder %s138, %s139
    %p151 = scmp.eq.s32.totalorder %s18, 3
    %p152 = por %p150, %p151
    %p154 = scmp.ne.s32.totalorder %s139, %s153
    %p155 = scmp.eq.s32.totalorder %s18, 0
    %p156 = por %p154, %p155
    %s158 = sadd.s32 %s157, 1
    %p161 = scmp.eq.s32.totalorder %s12, 3
    %p162 = scmp.ne.s32.totalorder %s157, %s159
    %p163 = scmp.eq.s32.totalorder %s12, 0
    %p164 = por %p162, %p163
    %p165 = scmp.ne.s32.totalorder %s157, %s159
    %p166 = scmp.eq.s32.totalorder %s17, 3
    %p167 = por %p165, %p166
    %p168 = scmp.ne.s32.totalorder %s159, %s160
    %p169 = scmp.eq.s32.totalorder %s17, 0
    %p170 = por %p168, %p169
    %p171 = scmp.ne.s32.totalorder %s159, %s160
    %p172 = scmp.eq.s32.totalorder %s18, 3
    %p173 = por %p171, %p172
    %p175 = scmp.ne.s32.totalorder %s160, %s174
    %p176 = scmp.eq.s32.totalorder %s18, 0
    %p177 = por %p175, %p176
    %s178 = ssub.s32 %s19, %s31
    %s179 = ssub.s32 %s20, %s27
    %s180 = sor.u32 %s178, %s179
    %p181 = scmp.eq.s32.totalorder %s180, 0
    %s183 = sadd.s32 %s182, 1
    %s184 = scalar_select %p181, %s182, %s183
    %p187 = pneg %p181
    %p188 = scmp.eq.s32.totalorder %s12, 3
    %p189 = por %p187, %p188
    %p190 = scmp.ne.s32.totalorder %s182, %s185
    %p191 = scmp.eq.s32.totalorder %s12, 0
    %p192 = por %p190, %p191
    %p193 = scmp.ne.s32.totalorder %s182, %s185
    %p194 = scmp.eq.s32.totalorder %s17, 3
    %p195 = por %p193, %p194
    %p196 = scmp.ne.s32.totalorder %s185, %s186
    %p197 = scmp.eq.s32.totalorder %s17, 0
    %p198 = por %p196, %p197
    %p199 = scmp.ne.s32.totalorder %s185, %s186
    %p200 = scmp.eq.s32.totalorder %s18, 3
    %p201 = por %p199, %p200
    %p203 = scmp.ne.s32.totalorder %s186, %s202
    %p204 = scmp.eq.s32.totalorder %s18, 0
    %p205 = por %p203, %p204
    %p206 = scmp.le.s32.totalorder 1, %s12
    %p207 = scmp.lt.s32.totalorder %s12, 5
    %p208 = pnand %p206, %p207
    %p209 = pneg %p208
    // Predicated region
    $region9: #{_backbone_apply.6} parent=5 // pred_check
      _
    $region10: #{_backbone_apply.6} parent=5 // pred_check_branch
      %211 = sbr.rel (%p208) target = $region12
    $region11: #{_backbone_apply.6} parent=5 // pred_region
      %s212 = ssub.s32 %s12, 1
      // Predicated region
      $region13: #{_backbone_apply.6} parent=11 // pred_check
        %p213 = pneg %p149
      $region14: #{_backbone_apply.6} parent=11 // pred_check_branch
        %215 = sbr.rel (%p213) target = $region16
      $region15: #{_backbone_apply.6} parent=11 // pred_region
        _
      $region16: #{_backbone_apply.6} parent=11 // pred_fallthru
        _
      // Predicated region
      $region17: #{_backbone_apply.6} parent=11 // pred_check
        %p216 = pneg %p170
      $region18: #{_backbone_apply.6} parent=11 // pred_check_branch
        %218 = sbr.rel (%p216) target = $region20
      $region19: #{_backbone_apply.6} parent=11 // pred_region
        _
      $region20: #{_backbone_apply.6} parent=11 // pred_fallthru
        _
    $region12: #{_backbone_apply.6} parent=5 // pred_fallthru
      _
    %p219 = scmp.lt.s32.totalorder %s12, 4
    // Predicated region
    $region21: #{_backbone_apply.6} parent=5 // pred_check
      %p220 = pneg %p219
    $region22: #{_backbone_apply.6} parent=5 // pred_check_branch
      %222 = sbr.rel (%p220) target = $region24
    $region23: #{_backbone_apply.6} parent=5 // pred_region
      // Predicated region
      $region25: #{_backbone_apply.6} parent=23 // pred_check
        %p223 = pneg %p44
      $region26: #{_backbone_apply.6} parent=23 // pred_check_branch
        %225 = sbr.rel (%p223) target = $region28
      $region27: #{_backbone_apply.6} parent=23 // pred_region
        %p226 = scmp.lt.s32.totalorder %s19, 1
        %s227 = scalar_select %p226, %s19, 1
        %s228 = smul.addr %s227, 3
        %s229 = smul.addr %s228, 2
        %s230 = scalar_lea.vmem %s0, %s229
      $region28: #{_backbone_apply.6} parent=23 // pred_fallthru
        _
      // Predicated region
      $region29: #{_backbone_apply.6} parent=23 // pred_check
        %p231 = pneg %p70
      $region30: #{_backbone_apply.6} parent=23 // pred_check_branch
        %233 = sbr.rel (%p231) target = $region32
      $region31: #{_backbone_apply.6} parent=23 // pred_region
        %p234 = scmp.lt.s32.totalorder %s19, 1
        %s235 = scalar_select %p234, %s19, 1
        %s236 = smul.addr %s235, 3
        %s237 = smul.addr %s236, 2
        %s238 = scalar_lea.vmem %s1, %s237
      $region32: #{_backbone_apply.6} parent=23 // pred_fallthru
        _
      // Predicated region
      $region33: #{_backbone_apply.6} parent=23 // pred_check
        %p239 = pneg %p96
      $region34: #{_backbone_apply.6} parent=23 // pred_check_branch
        %241 = sbr.rel (%p239) target = $region36
      $region35: #{_backbone_apply.6} parent=23 // pred_region
        %p242 = scmp.lt.s32.totalorder %s19, 1
        %s243 = scalar_select %p242, %s19, 1
        %s244 = smul.addr %s243, 3
        %s245 = smul.addr %s244, 2
        %s246 = scalar_lea.vmem %s2, %s245
      $region36: #{_backbone_apply.6} parent=23 // pred_fallthru
        _
      // Predicated region
      $region37: #{_backbone_apply.6} parent=23 // pred_check
        %p247 = pneg %p122
      $region38: #{_backbone_apply.6} parent=23 // pred_check_branch
        %249 = sbr.rel (%p247) target = $region40
      $region39: #{_backbone_apply.6} parent=23 // pred_region
        %p250 = scmp.lt.s32.totalorder %s19, 1
        %s251 = scalar_select %p250, %s19, 1
        %s252 = smul.addr %s251, 3
        %s253 = smul.addr %s252, 2
        %s254 = scalar_lea.vmem %s3, %s253
      $region40: #{_backbone_apply.6} parent=23 // pred_fallthru
        _
    $region24: #{_backbone_apply.6} parent=5 // pred_fallthru
      _
    %p255 = scmp.le.s32.totalorder 1, %s12
    %p256 = scmp.lt.s32.totalorder %s12, 5
    %p257 = pnand %p255, %p256
    %p258 = pneg %p257
    // Predicated region
    $region41: #{_backbone_apply.6} parent=5 // pred_check
      _
    $region42: #{_backbone_apply.6} parent=5 // pred_check_branch
      %260 = sbr.rel (%p257) target = $region44
    $region43: #{_backbone_apply.6} parent=5 // pred_region
      %s261 = ssub.s32 %s12, 1
      %p262 = scmp.lt.s32.totalorder %s21, 1
      %s263 = scalar_select %p262, %s21, 1
      %s264 = smul.addr %s263, 3
      %s265 = smul.addr %s264, 2
      %s266 = scalar_lea.vmem %s0, %s265
      %p267 = pneg %p50
      %p268 = pneg %p47
      %p269 = scmp.lt.s32.totalorder %s21, 1
      %s270 = scalar_select %p269, %s21, 1
      %s271 = smul.addr %s270, 3
      %s272 = smul.addr %s271, 2
      %s273 = scalar_lea.vmem %s1, %s272
      %p274 = pneg %p76
      %p275 = pneg %p73
      %p276 = scmp.lt.s32.totalorder %s21, 1
      %s277 = scalar_select %p276, %s21, 1
      %s278 = smul.addr %s277, 3
      %s279 = smul.addr %s278, 2
      %s280 = scalar_lea.vmem %s2, %s279
      %p281 = pneg %p102
      %p282 = pneg %p99
      %p283 = scmp.lt.s32.totalorder %s21, 1
      %s284 = scalar_select %p283, %s21, 1
      %s285 = smul.addr %s284, 3
      %s286 = smul.addr %s285, 2
      %s287 = scalar_lea.vmem %s3, %s286
      %p288 = pneg %p128
      %p289 = pneg %p125
      %p290 = pneg %p149
      %p291 = pneg %p146
      %p292 = pneg %p170
      %p293 = pneg %p167
      %p294 = pneg %p198
      %p295 = pneg %p195
      %p296 = scmp.lt.s32.totalorder %s21, 1
      %s297 = scalar_select %p296, %s21, 1
      %p298 = scmp.lt.s32.totalorder %s22, 1
      %s299 = scalar_select %p298, %s22, 1
      %s300 = smul.addr %s297, 2
      %s301 = sadd.s32 %s299, %s300
      %s302 = scalar_lea.vmem %s6, %s301
      %p303 = scmp.lt.s32.totalorder %s21, 1
      %s304 = scalar_select %p303, %s21, 1
      %s305 = smul.addr %s304, 3
      %s306 = smul.addr %s305, 2
      %s307 = scalar_lea.vmem %s0, %s306
      %p308 = scmp.lt.s32.totalorder %s21, 1
      %s309 = scalar_select %p308, %s21, 1
      %s310 = smul.addr %s309, 3
      %s311 = smul.addr %s310, 2
      %s312 = scalar_lea.vmem %s1, %s311
      %p313 = scmp.lt.s32.totalorder %s21, 1
      %s314 = scalar_select %p313, %s21, 1
      %s315 = smul.addr %s314, 3
      %s316 = smul.addr %s315, 2
      %s317 = scalar_lea.vmem %s2, %s316
      %p318 = scmp.lt.s32.totalorder %s21, 1
      %s319 = scalar_select %p318, %s21, 1
      %s320 = smul.addr %s319, 3
      %s321 = smul.addr %s320, 2
      %s322 = scalar_lea.vmem %s3, %s321
      %p323 = scmp.lt.s32.totalorder %s21, 1
      %s324 = scalar_select %p323, %s21, 1
      %p325 = scmp.lt.s32.totalorder %s22, 1
      %s326 = scalar_select %p325, %s22, 1
      %s327 = smul.addr %s324, 2
      %s328 = sadd.s32 %s326, %s327
      %s329 = scalar_lea.vmem %s6, %s328
      %s331 = smul.addr %s22, 2
      %s332 = scalar_lea.vmem %s307, %s331
      %v333 = vld [vmem:[%s332] sm:$0x3]
      %s334 = smul.addr %s22, 2
      %s335 = scalar_lea.vmem %s312, %s334
      %v336 = vld [vmem:[%s335] sm:$0x3]
      %s337 = sadd.s32 %s22, 1
      %s338 = smul.addr %s337, 2
      %s339 = scalar_lea.vmem %s307, %s338
      %v340 = vld [vmem:[%s339] sm:$0x3]
      %s341 = smul.addr %s337, 2
      %s342 = scalar_lea.vmem %s312, %s341
      %v343 = vld [vmem:[%s342] sm:$0x3]
      %s344 = smul.addr %s22, 2
      %s345 = scalar_lea.vmem %s317, %s344
      %v346 = vld [vmem:[%s345] sm:$0x3]
      %s347 = smul.addr %s22, 2
      %s348 = scalar_lea.vmem %s322, %s347
      %v349 = vld [vmem:[%s348] sm:$0x3]
      %v350 = vld [vmem:[%s4] sm:$0xf]
      %v351 = vld [vmem:[%s4 + $0x4] sm:$0xf]
      %s352 = scalar_lea.vmem %s4, 8
      %v353 = vld [vmem:[%s352] sm:$0xf]
      %v354 = vld [vmem:[%s352 + $0x4] sm:$0xf]
      %v357 = vunpack.c.l.b16 %v353
      %v358 = vunpack.c.l.b16 %v354
      %v359 = vpack.c.b16 %v358, %v357
      %vm361 = vcmask 130048
      %v363 = vsel %vm361, %v336, 0
      %365 = vmatprep.subr.bf16.mxu0 0
      %366 = vmatpush1.bf16.msra.mxu0 %v359
      %367 = vmatprep.subr.bf16.mxu0 0
      %368 = vmatpush1.bf16.msra.mxu0 0
      %369 = vmatprep.subr.bf16.mxu0 0
      %370 = vmatpush1.bf16.msra.mxu0 0
      %371 = vmatprep.subr.bf16.mxu0 0
      %372 = vmatpush1.bf16.msra.mxu0 0
      %373 = vmatprep.subr.bf16.mxu0 0
      %374 = vmatpush1.bf16.msra.mxu0 0
      %375 = vmatprep.subr.bf16.mxu0 0
      %376 = vmatpush1.bf16.msra.mxu0 0
      %377 = vmatprep.subr.bf16.mxu0 0
      %378 = vmatpush1.bf16.msra.mxu0 0
      %379 = vmatprep.subr.bf16.mxu0 0
      %380 = vmatpush1.bf16.msra.mxu0 0
      %381 = vmatprep.subr.bf16.mxu0 0
      %382 = vmatpush1.bf16.msra.mxu0 0
      %383 = vmatprep.subr.bf16.mxu0 0
      %384 = vmatpush1.bf16.msra.mxu0 0
      %385 = vmatprep.subr.bf16.mxu0 0
      %386 = vmatpush1.bf16.msra.mxu0 0
      %387 = vmatprep.subr.bf16.mxu0 0
      %388 = vmatpush1.bf16.msra.mxu0 0
      %389 = vmatprep.subr.bf16.mxu0 0
      %390 = vmatpush1.bf16.msra.mxu0 0
      %391 = vmatprep.subr.bf16.mxu0 0
      %392 = vmatpush1.bf16.msra.mxu0 0
      %393 = vmatprep.subr.bf16.mxu0 0
      %394 = vmatpush1.bf16.msra.mxu0 0
      %395 = vmatprep.subr.bf16.mxu0 0
      %396 = vmatpush1.bf16.msra.mxu0 0
      %397 = vmatprep.mubr.bf16.mxu0 0
      %398 = vmatmul.mubr.bf16.gmra.mrb[0].mxu0 %v363
      %v399 = vpop.f32.mrb[0].mxu0
      %v400 = vadd.f32 0.0, %v399
      %v401 = vpop.f32.mrb[0].mxu0
      %v402 = vpop.f32.mrb[0].mxu0
      %v403 = vpop.f32.mrb[0].mxu0
      %404 = vdwg.mxu0
      %v407 = vunpack.c.l.b16 %v350
      %v408 = vunpack.c.l.b16 %v351
      %v409 = vpack.c.b16 %v408, %v407
      %v412 = vsel %vm361, %v333, 0
      %414 = vmatprep.subr.bf16.mxu0 0
      %415 = vmatpush1.bf16.msra.mxu0 %v409
      %416 = vmatprep.subr.bf16.mxu0 0
      %417 = vmatpush1.bf16.msra.mxu0 0
      %418 = vmatprep.subr.bf16.mxu0 0
      %419 = vmatpush1.bf16.msra.mxu0 0
      %420 = vmatprep.subr.bf16.mxu0 0
      %421 = vmatpush1.bf16.msra.mxu0 0
      %422 = vmatprep.subr.bf16.mxu0 0
      %423 = vmatpush1.bf16.msra.mxu0 0
      %424 = vmatprep.subr.bf16.mxu0 0
      %425 = vmatpush1.bf16.msra.mxu0 0
      %426 = vmatprep.subr.bf16.mxu0 0
      %427 = vmatpush1.bf16.msra.mxu0 0
      %428 = vmatprep.subr.bf16.mxu0 0
      %429 = vmatpush1.bf16.msra.mxu0 0
      %430 = vmatprep.subr.bf16.mxu0 0
      %431 = vmatpush1.bf16.msra.mxu0 0
      %432 = vmatprep.subr.bf16.mxu0 0
      %433 = vmatpush1.bf16.msra.mxu0 0
      %434 = vmatprep.subr.bf16.mxu0 0
      %435 = vmatpush1.bf16.msra.mxu0 0
      %436 = vmatprep.subr.bf16.mxu0 0
      %437 = vmatpush1.bf16.msra.mxu0 0
      %438 = vmatprep.subr.bf16.mxu0 0
      %439 = vmatpush1.bf16.msra.mxu0 0
      %440 = vmatprep.subr.bf16.mxu0 0
      %441 = vmatpush1.bf16.msra.mxu0 0
      %442 = vmatprep.subr.bf16.mxu0 0
      %443 = vmatpush1.bf16.msra.mxu0 0
      %444 = vmatprep.subr.bf16.mxu0 0
      %445 = vmatpush1.bf16.msra.mxu0 0
      %446 = vmatprep.mubr.bf16.mxu0 0
      %447 = vmatmul.mubr.bf16.gmra.mrb[0].mxu0 %v412
      %v448 = vpop.f32.mrb[0].mxu0
      %v449 = vadd.f32 %v400, %v448
      %v450 = vpop.f32.mrb[0].mxu0
      %v451 = vpop.f32.mrb[0].mxu0
      %v452 = vpop.f32.mrb[0].mxu0
      %453 = vdwg.mxu0
      %s454 = scalar_lea.vmem %s4, 16
      %v455 = vld [vmem:[%s454] sm:$0xf]
      %v456 = vld [vmem:[%s454 + $0x4] sm:$0xf]
      %v459 = vunpack.c.l.s4 1983009808
      %v460 = vunpack.c.0.s8 %v459
      %v461 = vlaneseq
      %v462 = vshrl.u32 %v461, 7
      %v463 = vsub.s32 %v460, %v462
      %v464 = vrot.slane %v333, %v463
      %v466 = vshrl.u32 %v464, 16
      %v468 = vshll.u32 %v464, 16
      %v470 = vrot.slane %v468, 1
      %v471 = vor.u32 %v466, %v470
      %v474 = vunpack.c.l.b16 %v455
      %v475 = vunpack.c.l.b16 %v456
      %v476 = vpack.c.b16 %v475, %v474
      %v479 = vsel %vm361, %v471, 0
      %481 = vmatprep.subr.bf16.mxu0 0
      %482 = vmatpush1.bf16.msra.mxu0 %v476
      %483 = vmatprep.subr.bf16.mxu0 0
      %484 = vmatpush1.bf16.msra.mxu0 0
      %485 = vmatprep.subr.bf16.mxu0 0
      %486 = vmatpush1.bf16.msra.mxu0 0
      %487 = vmatprep.subr.bf16.mxu0 0
      %488 = vmatpush1.bf16.msra.mxu0 0
      %489 = vmatprep.subr.bf16.mxu0 0
      %490 = vmatpush1.bf16.msra.mxu0 0
      %491 = vmatprep.subr.bf16.mxu0 0
      %492 = vmatpush1.bf16.msra.mxu0 0
      %493 = vmatprep.subr.bf16.mxu0 0
      %494 = vmatpush1.bf16.msra.mxu0 0
      %495 = vmatprep.subr.bf16.mxu0 0
      %496 = vmatpush1.bf16.msra.mxu0 0
      %497 = vmatprep.subr.bf16.mxu0 0
      %498 = vmatpush1.bf16.msra.mxu0 0
      %499 = vmatprep.subr.bf16.mxu0 0
      %500 = vmatpush1.bf16.msra.mxu0 0
      %501 = vmatprep.subr.bf16.mxu0 0
      %502 = vmatpush1.bf16.msra.mxu0 0
      %503 = vmatprep.subr.bf16.mxu0 0
      %504 = vmatpush1.bf16.msra.mxu0 0
      %505 = vmatprep.subr.bf16.mxu0 0
      %506 = vmatpush1.bf16.msra.mxu0 0
      %507 = vmatprep.subr.bf16.mxu0 0
      %508 = vmatpush1.bf16.msra.mxu0 0
      %509 = vmatprep.subr.bf16.mxu0 0
      %510 = vmatpush1.bf16.msra.mxu0 0
      %511 = vmatprep.subr.bf16.mxu0 0
      %512 = vmatpush1.bf16.msra.mxu0 0
      %513 = vmatprep.mubr.bf16.mxu0 0
      %514 = vmatmul.mubr.bf16.gmra.mrb[0].mxu0 %v479
      %v515 = vpop.f32.mrb[0].mxu0
      %v516 = vadd.f32 0.0, %v515
      %v517 = vpop.f32.mrb[0].mxu0
      %v518 = vpop.f32.mrb[0].mxu0
      %v519 = vpop.f32.mrb[0].mxu0
      %520 = vdwg.mxu0
      %v521 = vadd.f32 %v449, %v516
      %s522 = scalar_lea.vmem %s4, 24
      %v523 = vld [vmem:[%s522] sm:$0xf]
      %v524 = vld [vmem:[%s522 + $0x4] sm:$0xf]
      %v527 = vunpack.c.l.b16 %v523
      %v528 = vunpack.c.l.b16 %v524
      %v529 = vpack.c.b16 %v528, %v527
      %v532 = vsel %vm361, %v346, 0
      %534 = vmatprep.subr.bf16.mxu0 0
      %535 = vmatpush1.bf16.msra.mxu0 %v529
      %536 = vmatprep.subr.bf16.mxu0 0
      %537 = vmatpush1.bf16.msra.mxu0 0
      %538 = vmatprep.subr.bf16.mxu0 0
      %539 = vmatpush1.bf16.msra.mxu0 0
      %540 = vmatprep.subr.bf16.mxu0 0
      %541 = vmatpush1.bf16.msra.mxu0 0
      %542 = vmatprep.subr.bf16.mxu0 0
      %543 = vmatpush1.bf16.msra.mxu0 0
      %544 = vmatprep.subr.bf16.mxu0 0
      %545 = vmatpush1.bf16.msra.mxu0 0
      %546 = vmatprep.subr.bf16.mxu0 0
      %547 = vmatpush1.bf16.msra.mxu0 0
      %548 = vmatprep.subr.bf16.mxu0 0
      %549 = vmatpush1.bf16.msra.mxu0 0
      %550 = vmatprep.subr.bf16.mxu0 0
      %551 = vmatpush1.bf16.msra.mxu0 0
      %552 = vmatprep.subr.bf16.mxu0 0
      %553 = vmatpush1.bf16.msra.mxu0 0
      %554 = vmatprep.subr.bf16.mxu0 0
      %555 = vmatpush1.bf16.msra.mxu0 0
      %556 = vmatprep.subr.bf16.mxu0 0
      %557 = vmatpush1.bf16.msra.mxu0 0
      %558 = vmatprep.subr.bf16.mxu0 0
      %559 = vmatpush1.bf16.msra.mxu0 0
      %560 = vmatprep.subr.bf16.mxu0 0
      %561 = vmatpush1.bf16.msra.mxu0 0
      %562 = vmatprep.subr.bf16.mxu0 0
      %563 = vmatpush1.bf16.msra.mxu0 0
      %564 = vmatprep.subr.bf16.mxu0 0
      %565 = vmatpush1.bf16.msra.mxu0 0
      %566 = vmatprep.mubr.bf16.mxu0 0
      %567 = vmatmul.mubr.bf16.gmra.mrb[0].mxu0 %v532
      %v568 = vpop.f32.mrb[0].mxu0
      %v569 = vadd.f32 0.0, %v568
      %v570 = vpop.f32.mrb[0].mxu0
      %v571 = vpop.f32.mrb[0].mxu0
      %v572 = vpop.f32.mrb[0].mxu0
      %573 = vdwg.mxu0
      %v574 = vadd.f32 %v521, %v569
      %s575 = scalar_lea.vmem %s4, 32
      %v576 = vld [vmem:[%s575] sm:$0xf]
      %v577 = vld [vmem:[%s575 + $0x4] sm:$0xf]
      %v580 = vunpack.c.l.b16 %v576
      %v581 = vunpack.c.l.b16 %v577
      %v582 = vpack.c.b16 %v581, %v580
      %v585 = vsel %vm361, %v349, 0
      %587 = vmatprep.subr.bf16.mxu0 0
      %588 = vmatpush1.bf16.msra.mxu0 %v582
      %589 = vmatprep.subr.bf16.mxu0 0
      %590 = vmatpush1.bf16.msra.mxu0 0
      %591 = vmatprep.subr.bf16.mxu0 0
      %592 = vmatpush1.bf16.msra.mxu0 0
      %593 = vmatprep.subr.bf16.mxu0 0
      %594 = vmatpush1.bf16.msra.mxu0 0
      %595 = vmatprep.subr.bf16.mxu0 0
      %596 = vmatpush1.bf16.msra.mxu0 0
      %597 = vmatprep.subr.bf16.mxu0 0
      %598 = vmatpush1.bf16.msra.mxu0 0
      %599 = vmatprep.subr.bf16.mxu0 0
      %600 = vmatpush1.bf16.msra.mxu0 0
      %601 = vmatprep.subr.bf16.mxu0 0
      %602 = vmatpush1.bf16.msra.mxu0 0
      %603 = vmatprep.subr.bf16.mxu0 0
      %604 = vmatpush1.bf16.msra.mxu0 0
      %605 = vmatprep.subr.bf16.mxu0 0
      %606 = vmatpush1.bf16.msra.mxu0 0
      %607 = vmatprep.subr.bf16.mxu0 0
      %608 = vmatpush1.bf16.msra.mxu0 0
      %609 = vmatprep.subr.bf16.mxu0 0
      %610 = vmatpush1.bf16.msra.mxu0 0
      %611 = vmatprep.subr.bf16.mxu0 0
      %612 = vmatpush1.bf16.msra.mxu0 0
      %613 = vmatprep.subr.bf16.mxu0 0
      %614 = vmatpush1.bf16.msra.mxu0 0
      %615 = vmatprep.subr.bf16.mxu0 0
      %616 = vmatpush1.bf16.msra.mxu0 0
      %617 = vmatprep.subr.bf16.mxu0 0
      %618 = vmatpush1.bf16.msra.mxu0 0
      %619 = vmatprep.mubr.bf16.mxu0 0
      %620 = vmatmul.mubr.bf16.gmra.mrb[0].mxu0 %v585
      %v621 = vpop.f32.mrb[0].mxu0
      %v622 = vadd.f32 0.0, %v621
      %v623 = vpop.f32.mrb[0].mxu0
      %v624 = vpop.f32.mrb[0].mxu0
      %v625 = vpop.f32.mrb[0].mxu0
      %626 = vdwg.mxu0
      %v627 = vadd.f32 %v574, %v622
      %s628 = scalar_lea.vmem %s4, 40
      %v629 = vld [vmem:[%s628] sm:$0xf]
      %v630 = vld [vmem:[%s628 + $0x4] sm:$0xf]
      %v633 = vunpack.c.l.s4 1983009808
      %v634 = vunpack.c.0.s8 %v633
      %v635 = vlaneseq
      %v636 = vshrl.u32 %v635, 7
      %v637 = vsub.s32 %v634, %v636
      %v638 = vrot.slane %v346, %v637
      %v640 = vshrl.u32 %v638, 16
      %v642 = vshll.u32 %v638, 16
      %v644 = vrot.slane %v642, 1
      %v645 = vor.u32 %v640, %v644
      %v648 = vunpack.c.l.b16 %v629
      %v649 = vunpack.c.l.b16 %v630
      %v650 = vpack.c.b16 %v649, %v648
      %v653 = vsel %vm361, %v645, 0
      %655 = vmatprep.subr.bf16.mxu0 0
      %656 = vmatpush1.bf16.msra.mxu0 %v650
      %657 = vmatprep.subr.bf16.mxu0 0
      %658 = vmatpush1.bf16.msra.mxu0 0
      %659 = vmatprep.subr.bf16.mxu0 0
      %660 = vmatpush1.bf16.msra.mxu0 0
      %661 = vmatprep.subr.bf16.mxu0 0
      %662 = vmatpush1.bf16.msra.mxu0 0
      %663 = vmatprep.subr.bf16.mxu0 0
      %664 = vmatpush1.bf16.msra.mxu0 0
      %665 = vmatprep.subr.bf16.mxu0 0
      %666 = vmatpush1.bf16.msra.mxu0 0
      %667 = vmatprep.subr.bf16.mxu0 0
      %668 = vmatpush1.bf16.msra.mxu0 0
      %669 = vmatprep.subr.bf16.mxu0 0
      %670 = vmatpush1.bf16.msra.mxu0 0
      %671 = vmatprep.subr.bf16.mxu0 0
      %672 = vmatpush1.bf16.msra.mxu0 0
      %673 = vmatprep.subr.bf16.mxu0 0
      %674 = vmatpush1.bf16.msra.mxu0 0
      %675 = vmatprep.subr.bf16.mxu0 0
      %676 = vmatpush1.bf16.msra.mxu0 0
      %677 = vmatprep.subr.bf16.mxu0 0
      %678 = vmatpush1.bf16.msra.mxu0 0
      %679 = vmatprep.subr.bf16.mxu0 0
      %680 = vmatpush1.bf16.msra.mxu0 0
      %681 = vmatprep.subr.bf16.mxu0 0
      %682 = vmatpush1.bf16.msra.mxu0 0
      %683 = vmatprep.subr.bf16.mxu0 0
      %684 = vmatpush1.bf16.msra.mxu0 0
      %685 = vmatprep.subr.bf16.mxu0 0
      %686 = vmatpush1.bf16.msra.mxu0 0
      %687 = vmatprep.mubr.bf16.mxu0 0
      %688 = vmatmul.mubr.bf16.gmra.mrb[0].mxu0 %v653
      %v689 = vpop.f32.mrb[0].mxu0
      %v690 = vadd.f32 0.0, %v689
      %v691 = vpop.f32.mrb[0].mxu0
      %v692 = vpop.f32.mrb[0].mxu0
      %v693 = vpop.f32.mrb[0].mxu0
      %694 = vdwg.mxu0
      %v695 = vadd.f32 %v627, %v690
      %s696 = scalar_lea.vmem %s4, 48
      %v697 = vld [vmem:[%s696] sm:$0xf]
      %v698 = vld [vmem:[%s696 + $0x4] sm:$0xf]
      %v701 = vunpack.c.l.b16 %v697
      %v702 = vunpack.c.l.b16 %v698
      %v703 = vpack.c.b16 %v702, %v701
      %v706 = vsel %vm361, %v340, 0
      %708 = vmatprep.subr.bf16.mxu0 0
      %709 = vmatpush1.bf16.msra.mxu0 %v703
      %710 = vmatprep.subr.bf16.mxu0 0
      %711 = vmatpush1.bf16.msra.mxu0 0
      %712 = vmatprep.subr.bf16.mxu0 0
      %713 = vmatpush1.bf16.msra.mxu0 0
      %714 = vmatprep.subr.bf16.mxu0 0
      %715 = vmatpush1.bf16.msra.mxu0 0
      %716 = vmatprep.subr.bf16.mxu0 0
      %717 = vmatpush1.bf16.msra.mxu0 0
      %718 = vmatprep.subr.bf16.mxu0 0
      %719 = vmatpush1.bf16.msra.mxu0 0
      %720 = vmatprep.subr.bf16.mxu0 0
      %721 = vmatpush1.bf16.msra.mxu0 0
      %722 = vmatprep.subr.bf16.mxu0 0
      %723 = vmatpush1.bf16.msra.mxu0 0
      %724 = vmatprep.subr.bf16.mxu0 0
      %725 = vmatpush1.bf16.msra.mxu0 0
      %726 = vmatprep.subr.bf16.mxu0 0
      %727 = vmatpush1.bf16.msra.mxu0 0
      %728 = vmatprep.subr.bf16.mxu0 0
      %729 = vmatpush1.bf16.msra.mxu0 0
      %730 = vmatprep.subr.bf16.mxu0 0
      %731 = vmatpush1.bf16.msra.mxu0 0
      %732 = vmatprep.subr.bf16.mxu0 0
      %733 = vmatpush1.bf16.msra.mxu0 0
      %734 = vmatprep.subr.bf16.mxu0 0
      %735 = vmatpush1.bf16.msra.mxu0 0
      %736 = vmatprep.subr.bf16.mxu0 0
      %737 = vmatpush1.bf16.msra.mxu0 0
      %738 = vmatprep.subr.bf16.mxu0 0
      %739 = vmatpush1.bf16.msra.mxu0 0
      %740 = vmatprep.mubr.bf16.mxu0 0
      %741 = vmatmul.mubr.bf16.gmra.mrb[0].mxu0 %v706
      %v742 = vpop.f32.mrb[0].mxu0
      %v743 = vadd.f32 0.0, %v742
      %v744 = vpop.f32.mrb[0].mxu0
      %v745 = vpop.f32.mrb[0].mxu0
      %v746 = vpop.f32.mrb[0].mxu0
      %747 = vdwg.mxu0
      %v748 = vadd.f32 %v695, %v743
      %s749 = scalar_lea.vmem %s4, 56
      %v750 = vld [vmem:[%s749] sm:$0xf]
      %v751 = vld [vmem:[%s749 + $0x4] sm:$0xf]
      %v754 = vunpack.c.l.b16 %v750
      %v755 = vunpack.c.l.b16 %v751
      %v756 = vpack.c.b16 %v755, %v754
      %v759 = vsel %vm361, %v343, 0
      %761 = vmatprep.subr.bf16.mxu0 0
      %762 = vmatpush1.bf16.msra.mxu0 %v756
      %763 = vmatprep.subr.bf16.mxu0 0
      %764 = vmatpush1.bf16.msra.mxu0 0
      %765 = vmatprep.subr.bf16.mxu0 0
      %766 = vmatpush1.bf16.msra.mxu0 0
      %767 = vmatprep.subr.bf16.mxu0 0
      %768 = vmatpush1.bf16.msra.mxu0 0
      %769 = vmatprep.subr.bf16.mxu0 0
      %770 = vmatpush1.bf16.msra.mxu0 0
      %771 = vmatprep.subr.bf16.mxu0 0
      %772 = vmatpush1.bf16.msra.mxu0 0
      %773 = vmatprep.subr.bf16.mxu0 0
      %774 = vmatpush1.bf16.msra.mxu0 0
      %775 = vmatprep.subr.bf16.mxu0 0
      %776 = vmatpush1.bf16.msra.mxu0 0
      %777 = vmatprep.subr.bf16.mxu0 0
      %778 = vmatpush1.bf16.msra.mxu0 0
      %779 = vmatprep.subr.bf16.mxu0 0
      %780 = vmatpush1.bf16.msra.mxu0 0
      %781 = vmatprep.subr.bf16.mxu0 0
      %782 = vmatpush1.bf16.msra.mxu0 0
      %783 = vmatprep.subr.bf16.mxu0 0
      %784 = vmatpush1.bf16.msra.mxu0 0
      %785 = vmatprep.subr.bf16.mxu0 0
      %786 = vmatpush1.bf16.msra.mxu0 0
      %787 = vmatprep.subr.bf16.mxu0 0
      %788 = vmatpush1.bf16.msra.mxu0 0
      %789 = vmatprep.subr.bf16.mxu0 0
      %790 = vmatpush1.bf16.msra.mxu0 0
      %791 = vmatprep.subr.bf16.mxu0 0
      %792 = vmatpush1.bf16.msra.mxu0 0
      %793 = vmatprep.mubr.bf16.mxu0 0
      %794 = vmatmul.mubr.bf16.gmra.mrb[0].mxu0 %v759
      %v795 = vpop.f32.mrb[0].mxu0
      %v796 = vadd.f32 0.0, %v795
      %v797 = vpop.f32.mrb[0].mxu0
      %v798 = vpop.f32.mrb[0].mxu0
      %v799 = vpop.f32.mrb[0].mxu0
      %800 = vdwg.mxu0
      %v801 = vadd.f32 %v748, %v796
      %s802 = scalar_lea.vmem %s4, 64
      %v803 = vld [vmem:[%s802] sm:$0xf]
      %v804 = vld [vmem:[%s802 + $0x4] sm:$0xf]
      %v807 = vunpack.c.l.s4 1983009808
      %v808 = vunpack.c.0.s8 %v807
      %v809 = vlaneseq
      %v810 = vshrl.u32 %v809, 7
      %v811 = vsub.s32 %v808, %v810
      %v812 = vrot.slane %v340, %v811
      %v814 = vshrl.u32 %v812, 16
      %v816 = vshll.u32 %v812, 16
      %v818 = vrot.slane %v816, 1
      %v819 = vor.u32 %v814, %v818
      %v822 = vunpack.c.l.b16 %v803
      %v823 = vunpack.c.l.b16 %v804
      %v824 = vpack.c.b16 %v823, %v822
      %v827 = vsel %vm361, %v819, 0
      %829 = vmatprep.subr.bf16.mxu0 0
      %830 = vmatpush1.bf16.msra.mxu0 %v824
      %831 = vmatprep.subr.bf16.mxu0 0
      %832 = vmatpush1.bf16.msra.mxu0 0
      %833 = vmatprep.subr.bf16.mxu0 0
      %834 = vmatpush1.bf16.msra.mxu0 0
      %835 = vmatprep.subr.bf16.mxu0 0
      %836 = vmatpush1.bf16.msra.mxu0 0
      %837 = vmatprep.subr.bf16.mxu0 0
      %838 = vmatpush1.bf16.msra.mxu0 0
      %839 = vmatprep.subr.bf16.mxu0 0
      %840 = vmatpush1.bf16.msra.mxu0 0
      %841 = vmatprep.subr.bf16.mxu0 0
      %842 = vmatpush1.bf16.msra.mxu0 0
      %843 = vmatprep.subr.bf16.mxu0 0
      %844 = vmatpush1.bf16.msra.mxu0 0
      %845 = vmatprep.subr.bf16.mxu0 0
      %846 = vmatpush1.bf16.msra.mxu0 0
      %847 = vmatprep.subr.bf16.mxu0 0
      %848 = vmatpush1.bf16.msra.mxu0 0
      %849 = vmatprep.subr.bf16.mxu0 0
      %850 = vmatpush1.bf16.msra.mxu0 0
      %851 = vmatprep.subr.bf16.mxu0 0
      %852 = vmatpush1.bf16.msra.mxu0 0
      %853 = vmatprep.subr.bf16.mxu0 0
      %854 = vmatpush1.bf16.msra.mxu0 0
      %855 = vmatprep.subr.bf16.mxu0 0
      %856 = vmatpush1.bf16.msra.mxu0 0
      %857 = vmatprep.subr.bf16.mxu0 0
      %858 = vmatpush1.bf16.msra.mxu0 0
      %859 = vmatprep.subr.bf16.mxu0 0
      %860 = vmatpush1.bf16.msra.mxu0 0
      %861 = vmatprep.mubr.bf16.mxu0 0
      %862 = vmatmul.mubr.bf16.gmra.mrb[0].mxu0 %v827
      %v863 = vpop.f32.mrb[0].mxu0
      %v864 = vadd.f32 0.0, %v863
      %v865 = vpop.f32.mrb[0].mxu0
      %v866 = vpop.f32.mrb[0].mxu0
      %v867 = vpop.f32.mrb[0].mxu0
      %868 = vdwg.mxu0
      %v869 = vadd.f32 %v801, %v864
      %v870 = vld [vmem:[%s5] sm:$0x1]
      %v872 = vlaneseq
      %v873 = vshrl.u32 %v872, 7
      %v874 = vsub.s32 0, %v873
      %v875 = vrot.slane %v870, %v874
      %v877 = vadd.f32 %v869, %v875
      %v878 = vmax.f32 %v877, 0.0
      %v879 = vpack.c.bf16 %v878, %v878
      %880 = vst [vmem:[%s329] sm:$0x1] %v879
      %p881 = scmp.lt.s32.totalorder %s21, 1
      %s882 = scalar_select %p881, %s21, 1
      %p883 = scmp.lt.s32.totalorder %s22, 1
      %s884 = scalar_select %p883, %s22, 1
      %s885 = smul.addr %s882, 2
      %s886 = sadd.s32 %s884, %s885
      %s887 = scalar_lea.vmem %s6, %s886
      // Predicated region
      $region45: #{_backbone_apply.6} parent=43 // pred_check
        %p888 = pneg %p195
      $region46: #{_backbone_apply.6} parent=43 // pred_check_branch
        %890 = sbr.rel (%p888) target = $region48
      $region47: #{_backbone_apply.6} parent=43 // pred_region
        _
      $region48: #{_backbone_apply.6} parent=43 // pred_fallthru
        _
    $region44: #{_backbone_apply.6} parent=5 // pred_fallthru
      _
    %p891 = scmp.le.s32.totalorder 2, %s12
    // Predicated region
    $region49: #{_backbone_apply.6} parent=5 // pred_check
      %p892 = pneg %p891
    $region50: #{_backbone_apply.6} parent=5 // pred_check_branch
      %894 = sbr.rel (%p892) target = $region52
    $region51: #{_backbone_apply.6} parent=5 // pred_region
      %s895 = ssub.s32 %s12, 2
      // Predicated region
      $region53: #{_backbone_apply.6} parent=51 // pred_check
        %p896 = pneg %p201
      $region54: #{_backbone_apply.6} parent=51 // pred_check_branch
        %898 = sbr.rel (%p896) target = $region56
      $region55: #{_backbone_apply.6} parent=51 // pred_region
        %p899 = scmp.lt.s32.totalorder %s23, 1
        %s900 = scalar_select %p899, %s23, 1
        %p901 = scmp.lt.s32.totalorder %s24, 1
        %s902 = scalar_select %p901, %s24, 1
        %s903 = smul.addr %s900, 2
        %s904 = sadd.s32 %s902, %s903
        %s905 = scalar_lea.vmem %s6, %s904
      $region56: #{_backbone_apply.6} parent=51 // pred_fallthru
        _
    $region52: #{_backbone_apply.6} parent=5 // pred_fallthru
      _
  $region6: #{_backbone_apply.6} parent=0 // loop_footer
    %s16 = sadd.s32 1, %s12
  $region7: #{_backbone_apply.6} parent=0 // loop_footer_branch
    %11 = sbr.rel target = $region3
  $region8: #{_backbone_apply.6} parent=0 // loop_exit
    _

// kernel: _backbone_apply.7
$region0: #{_backbone_apply.7}
  #allocation0 [shape = 'u32[]', space=smem, size = 0x4, offset = 0x4, fixed_abs, tag = 'smem constant byte address 0x4 - core index']
  #allocation1 [shape = 'u32[144,128]{1,0:T(1,128)}', space=vmem, size = 0x12000, scoped, tag = 'internal scratch']
  %s0 = inlined_call_operand.vmem [shape: bf16[2,2,2,32], index: 0, kind: input, shape index: {}]
  %s1 = inlined_call_operand.vmem [shape: bf16[2,2,2,32], index: 1, kind: input, shape index: {}]
  %s2 = inlined_call_operand.vmem [shape: bf16[2,2,2,32], index: 2, kind: input, shape index: {}]
  %s3 = inlined_call_operand.vmem [shape: bf16[2,2,2,32], index: 3, kind: input, shape index: {}]
  %s4 = inlined_call_operand.vmem [shape: bf16[9,32,128], index: 4, kind: input, shape index: {}]
  %s5 = inlined_call_operand.vmem [shape: f32[1,128], index: 5, kind: input, shape index: {}]
  %s6 = inlined_call_operand.vmem [shape: bf16[2,1,1,128], index: 6, kind: output, shape index: {}]
  %s7 = sld [smem:[#allocation0]]
  $region57: #{_backbone_apply.7} parent=0
    _
  %s9 = ssub.s32 1, %s7
  %s10 = scalar_select 0, %s9, %s7
  loop: start=0, step=1, limit=4
  $region2: #{_backbone_apply.7} parent=0 // loop_pre_header
    _
  $region3: #{_backbone_apply.7} parent=0 // loop_header
    %s12 = sphi 0, %s16
    %p13 = scmp.ge.s32.totalorder %s12, 4
    %s19 = sphi 0, %s31
    %s20 = sphi 0, %s27
    %s21 = sphi 0, %s19
    %s22 = sphi 0, %s20
    %s23 = sphi 0, %s21
    %s24 = sphi 0, %s22
    %s34 = sphi 0, %s36
    %s37 = sphi 0, %s34
    %s38 = sphi 0, %s37
    %s54 = sphi 0, %s38
    %s60 = sphi 0, %s62
    %s63 = sphi 0, %s60
    %s64 = sphi 0, %s63
    %s80 = sphi 0, %s64
    %s86 = sphi 0, %s88
    %s89 = sphi 0, %s86
    %s90 = sphi 0, %s89
    %s106 = sphi 0, %s90
    %s112 = sphi 0, %s114
    %s115 = sphi 0, %s112
    %s116 = sphi 0, %s115
    %s132 = sphi 0, %s116
    %s136 = sphi 0, %s136
    %s138 = sphi 0, %s136
    %s139 = sphi 0, %s138
    %s153 = sphi 0, %s139
    %s157 = sphi 0, %s157
    %s159 = sphi 0, %s157
    %s160 = sphi 0, %s159
    %s174 = sphi 0, %s160
    %s182 = sphi 0, %s184
    %s185 = sphi 0, %s182
    %s186 = sphi 0, %s185
    %s202 = sphi 0, %s186
  $region4: #{_backbone_apply.7} parent=0 // loop_header_branch
    %15 = sbr.rel (%p13) target = $region8
  $region5: #{_backbone_apply.7} parent=0 // loop_body
    %s17 = ssub.s32 %s12, 1
    %s18 = ssub.s32 %s12, 2
    %s25 = sadd.s32 1, %s20
    %p26 = scmp.ge.s32.totalorder %s25, 1
    %s27 = scalar_select %p26, 0, %s25
    %s28 = sadd.s32 1, %s19
    %s29 = scalar_select %p26, %s28, %s19
    %p30 = scmp.ge.s32.totalorder %s29, 2
    %s31 = scalar_select %p30, 0, %s29
    %s32 = ssub.s32 %s19, %s31
    %p33 = scmp.eq.s32.totalorder %s32, 0
    %s35 = sadd.s32 %s34, 1
    %s36 = scalar_select %p33, %s34, %s35
    %p39 = pneg %p33
    %p40 = scmp.eq.s32.totalorder %s12, 1
    %p41 = por %p39, %p40
    %p42 = scmp.ne.s32.totalorder %s34, %s37
    %p43 = scmp.eq.s32.totalorder %s12, 0
    %p44 = por %p42, %p43
    %p45 = scmp.ne.s32.totalorder %s34, %s37
    %p46 = scmp.eq.s32.totalorder %s17, 1
    %p47 = por %p45, %p46
    %p48 = scmp.ne.s32.totalorder %s37, %s38
    %p49 = scmp.eq.s32.totalorder %s17, 0
    %p50 = por %p48, %p49
    %p51 = scmp.ne.s32.totalorder %s37, %s38
    %p52 = scmp.eq.s32.totalorder %s18, 1
    %p53 = por %p51, %p52
    %p55 = scmp.ne.s32.totalorder %s38, %s54
    %p56 = scmp.eq.s32.totalorder %s18, 0
    %p57 = por %p55, %p56
    %s58 = ssub.s32 %s19, %s31
    %p59 = scmp.eq.s32.totalorder %s58, 0
    %s61 = sadd.s32 %s60, 1
    %s62 = scalar_select %p59, %s60, %s61
    %p65 = pneg %p59
    %p66 = scmp.eq.s32.totalorder %s12, 1
    %p67 = por %p65, %p66
    %p68 = scmp.ne.s32.totalorder %s60, %s63
    %p69 = scmp.eq.s32.totalorder %s12, 0
    %p70 = por %p68, %p69
    %p71 = scmp.ne.s32.totalorder %s60, %s63
    %p72 = scmp.eq.s32.totalorder %s17, 1
    %p73 = por %p71, %p72
    %p74 = scmp.ne.s32.totalorder %s63, %s64
    %p75 = scmp.eq.s32.totalorder %s17, 0
    %p76 = por %p74, %p75
    %p77 = scmp.ne.s32.totalorder %s63, %s64
    %p78 = scmp.eq.s32.totalorder %s18, 1
    %p79 = por %p77, %p78
    %p81 = scmp.ne.s32.totalorder %s64, %s80
    %p82 = scmp.eq.s32.totalorder %s18, 0
    %p83 = por %p81, %p82
    %s84 = ssub.s32 %s19, %s31
    %p85 = scmp.eq.s32.totalorder %s84, 0
    %s87 = sadd.s32 %s86, 1
    %s88 = scalar_select %p85, %s86, %s87
    %p91 = pneg %p85
    %p92 = scmp.eq.s32.totalorder %s12, 1
    %p93 = por %p91, %p92
    %p94 = scmp.ne.s32.totalorder %s86, %s89
    %p95 = scmp.eq.s32.totalorder %s12, 0
    %p96 = por %p94, %p95
    %p97 = scmp.ne.s32.totalorder %s86, %s89
    %p98 = scmp.eq.s32.totalorder %s17, 1
    %p99 = por %p97, %p98
    %p100 = scmp.ne.s32.totalorder %s89, %s90
    %p101 = scmp.eq.s32.totalorder %s17, 0
    %p102 = por %p100, %p101
    %p103 = scmp.ne.s32.totalorder %s89, %s90
    %p104 = scmp.eq.s32.totalorder %s18, 1
    %p105 = por %p103, %p104
    %p107 = scmp.ne.s32.totalorder %s90, %s106
    %p108 = scmp.eq.s32.totalorder %s18, 0
    %p109 = por %p107, %p108
    %s110 = ssub.s32 %s19, %s31
    %p111 = scmp.eq.s32.totalorder %s110, 0
    %s113 = sadd.s32 %s112, 1
    %s114 = scalar_select %p111, %s112, %s113
    %p117 = pneg %p111
    %p118 = scmp.eq.s32.totalorder %s12, 1
    %p119 = por %p117, %p118
    %p120 = scmp.ne.s32.totalorder %s112, %s115
    %p121 = scmp.eq.s32.totalorder %s12, 0
    %p122 = por %p120, %p121
    %p123 = scmp.ne.s32.totalorder %s112, %s115
    %p124 = scmp.eq.s32.totalorder %s17, 1
    %p125 = por %p123, %p124
    %p126 = scmp.ne.s32.totalorder %s115, %s116
    %p127 = scmp.eq.s32.totalorder %s17, 0
    %p128 = por %p126, %p127
    %p129 = scmp.ne.s32.totalorder %s115, %s116
    %p130 = scmp.eq.s32.totalorder %s18, 1
    %p131 = por %p129, %p130
    %p133 = scmp.ne.s32.totalorder %s116, %s132
    %p134 = scmp.eq.s32.totalorder %s18, 0
    %p135 = por %p133, %p134
    %s137 = sadd.s32 %s136, 1
    %p140 = scmp.eq.s32.totalorder %s12, 1
    %p141 = scmp.ne.s32.totalorder %s136, %s138
    %p142 = scmp.eq.s32.totalorder %s12, 0
    %p143 = por %p141, %p142
    %p144 = scmp.ne.s32.totalorder %s136, %s138
    %p145 = scmp.eq.s32.totalorder %s17, 1
    %p146 = por %p144, %p145
    %p147 = scmp.ne.s32.totalorder %s138, %s139
    %p148 = scmp.eq.s32.totalorder %s17, 0
    %p149 = por %p147, %p148
    %p150 = scmp.ne.s32.totalorder %s138, %s139
    %p151 = scmp.eq.s32.totalorder %s18, 1
    %p152 = por %p150, %p151
    %p154 = scmp.ne.s32.totalorder %s139, %s153
    %p155 = scmp.eq.s32.totalorder %s18, 0
    %p156 = por %p154, %p155
    %s158 = sadd.s32 %s157, 1
    %p161 = scmp.eq.s32.totalorder %s12, 1
    %p162 = scmp.ne.s32.totalorder %s157, %s159
    %p163 = scmp.eq.s32.totalorder %s12, 0
    %p164 = por %p162, %p163
    %p165 = scmp.ne.s32.totalorder %s157, %s159
    %p166 = scmp.eq.s32.totalorder %s17, 1
    %p167 = por %p165, %p166
    %p168 = scmp.ne.s32.totalorder %s159, %s160
    %p169 = scmp.eq.s32.totalorder %s17, 0
    %p170 = por %p168, %p169
    %p171 = scmp.ne.s32.totalorder %s159, %s160
    %p172 = scmp.eq.s32.totalorder %s18, 1
    %p173 = por %p171, %p172
    %p175 = scmp.ne.s32.totalorder %s160, %s174
    %p176 = scmp.eq.s32.totalorder %s18, 0
    %p177 = por %p175, %p176
    %s178 = ssub.s32 %s19, %s31
    %s179 = ssub.s32 %s20, %s27
    %s180 = sor.u32 %s178, %s179
    %p181 = scmp.eq.s32.totalorder %s180, 0
    %s183 = sadd.s32 %s182, 1
    %s184 = scalar_select %p181, %s182, %s183
    %p187 = pneg %p181
    %p188 = scmp.eq.s32.totalorder %s12, 1
    %p189 = por %p187, %p188
    %p190 = scmp.ne.s32.totalorder %s182, %s185
    %p191 = scmp.eq.s32.totalorder %s12, 0
    %p192 = por %p190, %p191
    %p193 = scmp.ne.s32.totalorder %s182, %s185
    %p194 = scmp.eq.s32.totalorder %s17, 1
    %p195 = por %p193, %p194
    %p196 = scmp.ne.s32.totalorder %s185, %s186
    %p197 = scmp.eq.s32.totalorder %s17, 0
    %p198 = por %p196, %p197
    %p199 = scmp.ne.s32.totalorder %s185, %s186
    %p200 = scmp.eq.s32.totalorder %s18, 1
    %p201 = por %p199, %p200
    %p203 = scmp.ne.s32.totalorder %s186, %s202
    %p204 = scmp.eq.s32.totalorder %s18, 0
    %p205 = por %p203, %p204
    %p206 = scmp.le.s32.totalorder 1, %s12
    %p207 = scmp.lt.s32.totalorder %s12, 3
    %p208 = pnand %p206, %p207
    %p209 = pneg %p208
    // Predicated region
    $region9: #{_backbone_apply.7} parent=5 // pred_check
      _
    $region10: #{_backbone_apply.7} parent=5 // pred_check_branch
      %211 = sbr.rel (%p208) target = $region12
    $region11: #{_backbone_apply.7} parent=5 // pred_region
      %s212 = ssub.s32 %s12, 1
      // Predicated region
      $region13: #{_backbone_apply.7} parent=11 // pred_check
        %p213 = pneg %p149
      $region14: #{_backbone_apply.7} parent=11 // pred_check_branch
        %215 = sbr.rel (%p213) target = $region16
      $region15: #{_backbone_apply.7} parent=11 // pred_region
        _
      $region16: #{_backbone_apply.7} parent=11 // pred_fallthru
        _
      // Predicated region
      $region17: #{_backbone_apply.7} parent=11 // pred_check
        %p216 = pneg %p170
      $region18: #{_backbone_apply.7} parent=11 // pred_check_branch
        %218 = sbr.rel (%p216) target = $region20
      $region19: #{_backbone_apply.7} parent=11 // pred_region
        _
      $region20: #{_backbone_apply.7} parent=11 // pred_fallthru
        _
    $region12: #{_backbone_apply.7} parent=5 // pred_fallthru
      _
    %p219 = scmp.lt.s32.totalorder %s12, 2
    // Predicated region
    $region21: #{_backbone_apply.7} parent=5 // pred_check
      %p220 = pneg %p219
    $region22: #{_backbone_apply.7} parent=5 // pred_check_branch
      %222 = sbr.rel (%p220) target = $region24
    $region23: #{_backbone_apply.7} parent=5 // pred_region
      // Predicated region
      $region25: #{_backbone_apply.7} parent=23 // pred_check
        %p223 = pneg %p44
      $region26: #{_backbone_apply.7} parent=23 // pred_check_branch
        %225 = sbr.rel (%p223) target = $region28
      $region27: #{_backbone_apply.7} parent=23 // pred_region
        %p226 = scmp.lt.s32.totalorder %s19, 1
        %s227 = scalar_select %p226, %s19, 1
        %s228 = smul.addr %s227, 2
        %s229 = scalar_lea.vmem %s0, %s228
      $region28: #{_backbone_apply.7} parent=23 // pred_fallthru
        _
      // Predicated region
      $region29: #{_backbone_apply.7} parent=23 // pred_check
        %p230 = pneg %p70
      $region30: #{_backbone_apply.7} parent=23 // pred_check_branch
        %232 = sbr.rel (%p230) target = $region32
      $region31: #{_backbone_apply.7} parent=23 // pred_region
        %p233 = scmp.lt.s32.totalorder %s19, 1
        %s234 = scalar_select %p233, %s19, 1
        %s235 = smul.addr %s234, 2
        %s236 = scalar_lea.vmem %s1, %s235
      $region32: #{_backbone_apply.7} parent=23 // pred_fallthru
        _
      // Predicated region
      $region33: #{_backbone_apply.7} parent=23 // pred_check
        %p237 = pneg %p96
      $region34: #{_backbone_apply.7} parent=23 // pred_check_branch
        %239 = sbr.rel (%p237) target = $region36
      $region35: #{_backbone_apply.7} parent=23 // pred_region
        %p240 = scmp.lt.s32.totalorder %s19, 1
        %s241 = scalar_select %p240, %s19, 1
        %s242 = smul.addr %s241, 2
        %s243 = scalar_lea.vmem %s2, %s242
      $region36: #{_backbone_apply.7} parent=23 // pred_fallthru
        _
      // Predicated region
      $region37: #{_backbone_apply.7} parent=23 // pred_check
        %p244 = pneg %p122
      $region38: #{_backbone_apply.7} parent=23 // pred_check_branch
        %246 = sbr.rel (%p244) target = $region40
      $region39: #{_backbone_apply.7} parent=23 // pred_region
        %p247 = scmp.lt.s32.totalorder %s19, 1
        %s248 = scalar_select %p247, %s19, 1
        %s249 = smul.addr %s248, 2
        %s250 = scalar_lea.vmem %s3, %s249
      $region40: #{_backbone_apply.7} parent=23 // pred_fallthru
        _
    $region24: #{_backbone_apply.7} parent=5 // pred_fallthru
      _
    %p251 = scmp.le.s32.totalorder 1, %s12
    %p252 = scmp.lt.s32.totalorder %s12, 3
    %p253 = pnand %p251, %p252
    %p254 = pneg %p253
    // Predicated region
    $region41: #{_backbone_apply.7} parent=5 // pred_check
      _
    $region42: #{_backbone_apply.7} parent=5 // pred_check_branch
      %256 = sbr.rel (%p253) target = $region44
    $region43: #{_backbone_apply.7} parent=5 // pred_region
      %s257 = ssub.s32 %s12, 1
      %p258 = scmp.lt.s32.totalorder %s21, 1
      %s259 = scalar_select %p258, %s21, 1
      %s260 = smul.addr %s259, 2
      %s261 = scalar_lea.vmem %s0, %s260
      %p262 = pneg %p50
      %p263 = pneg %p47
      %p264 = scmp.lt.s32.totalorder %s21, 1
      %s265 = scalar_select %p264, %s21, 1
      %s266 = smul.addr %s265, 2
      %s267 = scalar_lea.vmem %s1, %s266
      %p268 = pneg %p76
      %p269 = pneg %p73
      %p270 = scmp.lt.s32.totalorder %s21, 1
      %s271 = scalar_select %p270, %s21, 1
      %s272 = smul.addr %s271, 2
      %s273 = scalar_lea.vmem %s2, %s272
      %p274 = pneg %p102
      %p275 = pneg %p99
      %p276 = scmp.lt.s32.totalorder %s21, 1
      %s277 = scalar_select %p276, %s21, 1
      %s278 = smul.addr %s277, 2
      %s279 = scalar_lea.vmem %s3, %s278
      %p280 = pneg %p128
      %p281 = pneg %p125
      %p282 = pneg %p149
      %p283 = pneg %p146
      %p284 = pneg %p170
      %p285 = pneg %p167
      %p286 = pneg %p198
      %p287 = pneg %p195
      %p288 = scmp.lt.s32.totalorder %s21, 1
      %s289 = scalar_select %p288, %s21, 1
      %p290 = scmp.lt.s32.totalorder %s22, 0
      %s291 = scalar_select %p290, %s22, 0
      %s292 = sadd.s32 %s291, %s289
      %s293 = scalar_lea.vmem %s6, %s292
      %p294 = scmp.lt.s32.totalorder %s21, 1
      %s295 = scalar_select %p294, %s21, 1
      %s296 = smul.addr %s295, 2
      %s297 = scalar_lea.vmem %s0, %s296
      %p298 = scmp.lt.s32.totalorder %s21, 1
      %s299 = scalar_select %p298, %s21, 1
      %s300 = smul.addr %s299, 2
      %s301 = scalar_lea.vmem %s1, %s300
      %p302 = scmp.lt.s32.totalorder %s21, 1
      %s303 = scalar_select %p302, %s21, 1
      %s304 = smul.addr %s303, 2
      %s305 = scalar_lea.vmem %s2, %s304
      %p306 = scmp.lt.s32.totalorder %s21, 1
      %s307 = scalar_select %p306, %s21, 1
      %s308 = smul.addr %s307, 2
      %s309 = scalar_lea.vmem %s3, %s308
      %p310 = scmp.lt.s32.totalorder %s21, 1
      %s311 = scalar_select %p310, %s21, 1
      %p312 = scmp.lt.s32.totalorder %s22, 0
      %s313 = scalar_select %p312, %s22, 0
      %s314 = sadd.s32 %s313, %s311
      %s315 = scalar_lea.vmem %s6, %s314
      %s317 = scalar_lea.vmem %s297, %s22
      %v318 = vld [vmem:[%s317] sm:$0x1]
      %s319 = scalar_lea.vmem %s301, %s22
      %v320 = vld [vmem:[%s319] sm:$0x1]
      %s321 = sadd.s32 %s22, 1
      %s322 = scalar_lea.vmem %s297, %s321
      %v323 = vld [vmem:[%s322] sm:$0x1]
      %s324 = scalar_lea.vmem %s301, %s321
      %v325 = vld [vmem:[%s324] sm:$0x1]
      %s326 = scalar_lea.vmem %s305, %s22
      %v327 = vld [vmem:[%s326] sm:$0x1]
      %s328 = scalar_lea.vmem %s309, %s22
      %v329 = vld [vmem:[%s328] sm:$0x1]
      %v330 = vld [vmem:[%s4] sm:$0xf]
      %v331 = vld [vmem:[%s4 + $0x4] sm:$0xf]
      %v332 = vld [vmem:[%s4 + $0x8] sm:$0xf]
      %v333 = vld [vmem:[%s4 + $0xc] sm:$0xf]
      %s334 = scalar_lea.vmem %s4, 16
      %v335 = vld [vmem:[%s334] sm:$0xf]
      %v336 = vld [vmem:[%s334 + $0x4] sm:$0xf]
      %v337 = vld [vmem:[%s334 + $0x8] sm:$0xf]
      %v338 = vld [vmem:[%s334 + $0xc] sm:$0xf]
      %v343 = vunpack.c.l.b16 %v335
      %v344 = vunpack.c.l.b16 %v336
      %v345 = vunpack.c.l.b16 %v337
      %v346 = vunpack.c.l.b16 %v338
      %v347 = vpack.c.b16 %v344, %v343
      %v348 = vpack.c.b16 %v346, %v345
      %vm351 = vcmask 261120
      %v353 = vsel %vm351, %v320, 0
      %355 = vmatprep.subr.bf16.mxu0 0
      %356 = vmatpush1.bf16.msra.mxu0 %v347
      %357 = vmatprep.subr.bf16.mxu0 0
      %358 = vmatpush1.bf16.msra.mxu0 %v348
      %359 = vmatprep.subr.bf16.mxu0 0
      %360 = vmatpush1.bf16.msra.mxu0 0
      %361 = vmatprep.subr.bf16.mxu0 0
      %362 = vmatpush1.bf16.msra.mxu0 0
      %363 = vmatprep.subr.bf16.mxu0 0
      %364 = vmatpush1.bf16.msra.mxu0 0
      %365 = vmatprep.subr.bf16.mxu0 0
      %366 = vmatpush1.bf16.msra.mxu0 0
      %367 = vmatprep.subr.bf16.mxu0 0
      %368 = vmatpush1.bf16.msra.mxu0 0
      %369 = vmatprep.subr.bf16.mxu0 0
      %370 = vmatpush1.bf16.msra.mxu0 0
      %371 = vmatprep.subr.bf16.mxu0 0
      %372 = vmatpush1.bf16.msra.mxu0 0
      %373 = vmatprep.subr.bf16.mxu0 0
      %374 = vmatpush1.bf16.msra.mxu0 0
      %375 = vmatprep.subr.bf16.mxu0 0
      %376 = vmatpush1.bf16.msra.mxu0 0
      %377 = vmatprep.subr.bf16.mxu0 0
      %378 = vmatpush1.bf16.msra.mxu0 0
      %379 = vmatprep.subr.bf16.mxu0 0
      %380 = vmatpush1.bf16.msra.mxu0 0
      %381 = vmatprep.subr.bf16.mxu0 0
      %382 = vmatpush1.bf16.msra.mxu0 0
      %383 = vmatprep.subr.bf16.mxu0 0
      %384 = vmatpush1.bf16.msra.mxu0 0
      %385 = vmatprep.subr.bf16.mxu0 0
      %386 = vmatpush1.bf16.msra.mxu0 0
      %387 = vmatprep.mubr.bf16.mxu0 0
      %388 = vmatmul.mubr.bf16.gmra.mrb[0].mxu0 %v353
      %v389 = vpop.f32.mrb[0].mxu0
      %v390 = vadd.f32 0.0, %v389
      %v391 = vpop.f32.mrb[0].mxu0
      %v392 = vpop.f32.mrb[0].mxu0
      %v393 = vpop.f32.mrb[0].mxu0
      %394 = vdwg.mxu0
      %v399 = vunpack.c.l.b16 %v330
      %v400 = vunpack.c.l.b16 %v331
      %v401 = vunpack.c.l.b16 %v332
      %v402 = vunpack.c.l.b16 %v333
      %v403 = vpack.c.b16 %v400, %v399
      %v404 = vpack.c.b16 %v402, %v401
      %v408 = vsel %vm351, %v318, 0
      %410 = vmatprep.subr.bf16.mxu0 0
      %411 = vmatpush1.bf16.msra.mxu0 %v403
      %412 = vmatprep.subr.bf16.mxu0 0
      %413 = vmatpush1.bf16.msra.mxu0 %v404
      %414 = vmatprep.subr.bf16.mxu0 0
      %415 = vmatpush1.bf16.msra.mxu0 0
      %416 = vmatprep.subr.bf16.mxu0 0
      %417 = vmatpush1.bf16.msra.mxu0 0
      %418 = vmatprep.subr.bf16.mxu0 0
      %419 = vmatpush1.bf16.msra.mxu0 0
      %420 = vmatprep.subr.bf16.mxu0 0
      %421 = vmatpush1.bf16.msra.mxu0 0
      %422 = vmatprep.subr.bf16.mxu0 0
      %423 = vmatpush1.bf16.msra.mxu0 0
      %424 = vmatprep.subr.bf16.mxu0 0
      %425 = vmatpush1.bf16.msra.mxu0 0
      %426 = vmatprep.subr.bf16.mxu0 0
      %427 = vmatpush1.bf16.msra.mxu0 0
      %428 = vmatprep.subr.bf16.mxu0 0
      %429 = vmatpush1.bf16.msra.mxu0 0
      %430 = vmatprep.subr.bf16.mxu0 0
      %431 = vmatpush1.bf16.msra.mxu0 0
      %432 = vmatprep.subr.bf16.mxu0 0
      %433 = vmatpush1.bf16.msra.mxu0 0
      %434 = vmatprep.subr.bf16.mxu0 0
      %435 = vmatpush1.bf16.msra.mxu0 0
      %436 = vmatprep.subr.bf16.mxu0 0
      %437 = vmatpush1.bf16.msra.mxu0 0
      %438 = vmatprep.subr.bf16.mxu0 0
      %439 = vmatpush1.bf16.msra.mxu0 0
      %440 = vmatprep.subr.bf16.mxu0 0
      %441 = vmatpush1.bf16.msra.mxu0 0
      %442 = vmatprep.mubr.bf16.mxu0 0
      %443 = vmatmul.mubr.bf16.gmra.mrb[0].mxu0 %v408
      %v444 = vpop.f32.mrb[0].mxu0
      %v445 = vadd.f32 %v390, %v444
      %v446 = vpop.f32.mrb[0].mxu0
      %v447 = vpop.f32.mrb[0].mxu0
      %v448 = vpop.f32.mrb[0].mxu0
      %449 = vdwg.mxu0
      %s450 = scalar_lea.vmem %s4, 32
      %v451 = vld [vmem:[%s450] sm:$0xf]
      %v452 = vld [vmem:[%s450 + $0x4] sm:$0xf]
      %v453 = vld [vmem:[%s450 + $0x8] sm:$0xf]
      %v454 = vld [vmem:[%s450 + $0xc] sm:$0xf]
      %v457 = vunpack.c.l.s4 1966171168
      %v458 = vunpack.c.0.s8 %v457
      %v459 = vlaneseq
      %v460 = vshrl.u32 %v459, 7
      %v461 = vsub.s32 %v458, %v460
      %v462 = vrot.slane %v318, %v461
      %v464 = vunpack.c.l.s4 1966171168
      %v465 = vunpack.c.0.s8 %v464
      %v466 = vlaneseq
      %v467 = vshrl.u32 %v466, 7
      %v468 = vsub.s32 %v465, %v467
      %v469 = vrot.slane %v462, %v468
      %v471 = vshrl.u32 %v469, 16
      %v477 = vunpack.c.l.b16 %v451
      %v478 = vunpack.c.l.b16 %v452
      %v479 = vunpack.c.l.b16 %v453
      %v480 = vunpack.c.l.b16 %v454
      %v481 = vpack.c.b16 %v478, %v477
      %v482 = vpack.c.b16 %v480, %v479
      %v486 = vsel %vm351, %v471, 0
      %488 = vmatprep.subr.bf16.mxu0 0
      %489 = vmatpush1.bf16.msra.mxu0 %v481
      %490 = vmatprep.subr.bf16.mxu0 0
      %491 = vmatpush1.bf16.msra.mxu0 %v482
      %492 = vmatprep.subr.bf16.mxu0 0
      %493 = vmatpush1.bf16.msra.mxu0 0
      %494 = vmatprep.subr.bf16.mxu0 0
      %495 = vmatpush1.bf16.msra.mxu0 0
      %496 = vmatprep.subr.bf16.mxu0 0
      %497 = vmatpush1.bf16.msra.mxu0 0
      %498 = vmatprep.subr.bf16.mxu0 0
      %499 = vmatpush1.bf16.msra.mxu0 0
      %500 = vmatprep.subr.bf16.mxu0 0
      %501 = vmatpush1.bf16.msra.mxu0 0
      %502 = vmatprep.subr.bf16.mxu0 0
      %503 = vmatpush1.bf16.msra.mxu0 0
      %504 = vmatprep.subr.bf16.mxu0 0
      %505 = vmatpush1.bf16.msra.mxu0 0
      %506 = vmatprep.subr.bf16.mxu0 0
      %507 = vmatpush1.bf16.msra.mxu0 0
      %508 = vmatprep.subr.bf16.mxu0 0
      %509 = vmatpush1.bf16.msra.mxu0 0
      %510 = vmatprep.subr.bf16.mxu0 0
      %511 = vmatpush1.bf16.msra.mxu0 0
      %512 = vmatprep.subr.bf16.mxu0 0
      %513 = vmatpush1.bf16.msra.mxu0 0
      %514 = vmatprep.subr.bf16.mxu0 0
      %515 = vmatpush1.bf16.msra.mxu0 0
      %516 = vmatprep.subr.bf16.mxu0 0
      %517 = vmatpush1.bf16.msra.mxu0 0
      %518 = vmatprep.subr.bf16.mxu0 0
      %519 = vmatpush1.bf16.msra.mxu0 0
      %520 = vmatprep.mubr.bf16.mxu0 0
      %521 = vmatmul.mubr.bf16.gmra.mrb[0].mxu0 %v486
      %v522 = vpop.f32.mrb[0].mxu0
      %v523 = vadd.f32 0.0, %v522
      %v524 = vpop.f32.mrb[0].mxu0
      %v525 = vpop.f32.mrb[0].mxu0
      %v526 = vpop.f32.mrb[0].mxu0
      %527 = vdwg.mxu0
      %v528 = vadd.f32 %v445, %v523
      %s529 = scalar_lea.vmem %s4, 48
      %v530 = vld [vmem:[%s529] sm:$0xf]
      %v531 = vld [vmem:[%s529 + $0x4] sm:$0xf]
      %v532 = vld [vmem:[%s529 + $0x8] sm:$0xf]
      %v533 = vld [vmem:[%s529 + $0xc] sm:$0xf]
      %v538 = vunpack.c.l.b16 %v530
      %v539 = vunpack.c.l.b16 %v531
      %v540 = vunpack.c.l.b16 %v532
      %v541 = vunpack.c.l.b16 %v533
      %v542 = vpack.c.b16 %v539, %v538
      %v543 = vpack.c.b16 %v541, %v540
      %v547 = vsel %vm351, %v327, 0
      %549 = vmatprep.subr.bf16.mxu0 0
      %550 = vmatpush1.bf16.msra.mxu0 %v542
      %551 = vmatprep.subr.bf16.mxu0 0
      %552 = vmatpush1.bf16.msra.mxu0 %v543
      %553 = vmatprep.subr.bf16.mxu0 0
      %554 = vmatpush1.bf16.msra.mxu0 0
      %555 = vmatprep.subr.bf16.mxu0 0
      %556 = vmatpush1.bf16.msra.mxu0 0
      %557 = vmatprep.subr.bf16.mxu0 0
      %558 = vmatpush1.bf16.msra.mxu0 0
      %559 = vmatprep.subr.bf16.mxu0 0
      %560 = vmatpush1.bf16.msra.mxu0 0
      %561 = vmatprep.subr.bf16.mxu0 0
      %562 = vmatpush1.bf16.msra.mxu0 0
      %563 = vmatprep.subr.bf16.mxu0 0
      %564 = vmatpush1.bf16.msra.mxu0 0
      %565 = vmatprep.subr.bf16.mxu0 0
      %566 = vmatpush1.bf16.msra.mxu0 0
      %567 = vmatprep.subr.bf16.mxu0 0
      %568 = vmatpush1.bf16.msra.mxu0 0
      %569 = vmatprep.subr.bf16.mxu0 0
      %570 = vmatpush1.bf16.msra.mxu0 0
      %571 = vmatprep.subr.bf16.mxu0 0
      %572 = vmatpush1.bf16.msra.mxu0 0
      %573 = vmatprep.subr.bf16.mxu0 0
      %574 = vmatpush1.bf16.msra.mxu0 0
      %575 = vmatprep.subr.bf16.mxu0 0
      %576 = vmatpush1.bf16.msra.mxu0 0
      %577 = vmatprep.subr.bf16.mxu0 0
      %578 = vmatpush1.bf16.msra.mxu0 0
      %579 = vmatprep.subr.bf16.mxu0 0
      %580 = vmatpush1.bf16.msra.mxu0 0
      %581 = vmatprep.mubr.bf16.mxu0 0
      %582 = vmatmul.mubr.bf16.gmra.mrb[0].mxu0 %v547
      %v583 = vpop.f32.mrb[0].mxu0
      %v584 = vadd.f32 0.0, %v583
      %v585 = vpop.f32.mrb[0].mxu0
      %v586 = vpop.f32.mrb[0].mxu0
      %v587 = vpop.f32.mrb[0].mxu0
      %588 = vdwg.mxu0
      %v589 = vadd.f32 %v528, %v584
      %s590 = scalar_lea.vmem %s4, 64
      %v591 = vld [vmem:[%s590] sm:$0xf]
      %v592 = vld [vmem:[%s590 + $0x4] sm:$0xf]
      %v593 = vld [vmem:[%s590 + $0x8] sm:$0xf]
      %v594 = vld [vmem:[%s590 + $0xc] sm:$0xf]
      %v599 = vunpack.c.l.b16 %v591
      %v600 = vunpack.c.l.b16 %v592
      %v601 = vunpack.c.l.b16 %v593
      %v602 = vunpack.c.l.b16 %v594
      %v603 = vpack.c.b16 %v600, %v599
      %v604 = vpack.c.b16 %v602, %v601
      %v608 = vsel %vm351, %v329, 0
      %610 = vmatprep.subr.bf16.mxu0 0
      %611 = vmatpush1.bf16.msra.mxu0 %v603
      %612 = vmatprep.subr.bf16.mxu0 0
      %613 = vmatpush1.bf16.msra.mxu0 %v604
      %614 = vmatprep.subr.bf16.mxu0 0
      %615 = vmatpush1.bf16.msra.mxu0 0
      %616 = vmatprep.subr.bf16.mxu0 0
      %617 = vmatpush1.bf16.msra.mxu0 0
      %618 = vmatprep.subr.bf16.mxu0 0
      %619 = vmatpush1.bf16.msra.mxu0 0
      %620 = vmatprep.subr.bf16.mxu0 0
      %621 = vmatpush1.bf16.msra.mxu0 0
      %622 = vmatprep.subr.bf16.mxu0 0
      %623 = vmatpush1.bf16.msra.mxu0 0
      %624 = vmatprep.subr.bf16.mxu0 0
      %625 = vmatpush1.bf16.msra.mxu0 0
      %626 = vmatprep.subr.bf16.mxu0 0
      %627 = vmatpush1.bf16.msra.mxu0 0
      %628 = vmatprep.subr.bf16.mxu0 0
      %629 = vmatpush1.bf16.msra.mxu0 0
      %630 = vmatprep.subr.bf16.mxu0 0
      %631 = vmatpush1.bf16.msra.mxu0 0
      %632 = vmatprep.subr.bf16.mxu0 0
      %633 = vmatpush1.bf16.msra.mxu0 0
      %634 = vmatprep.subr.bf16.mxu0 0
      %635 = vmatpush1.bf16.msra.mxu0 0
      %636 = vmatprep.subr.bf16.mxu0 0
      %637 = vmatpush1.bf16.msra.mxu0 0
      %638 = vmatprep.subr.bf16.mxu0 0
      %639 = vmatpush1.bf16.msra.mxu0 0
      %640 = vmatprep.subr.bf16.mxu0 0
      %641 = vmatpush1.bf16.msra.mxu0 0
      %642 = vmatprep.mubr.bf16.mxu0 0
      %643 = vmatmul.mubr.bf16.gmra.mrb[0].mxu0 %v608
      %v644 = vpop.f32.mrb[0].mxu0
      %v645 = vadd.f32 0.0, %v644
      %v646 = vpop.f32.mrb[0].mxu0
      %v647 = vpop.f32.mrb[0].mxu0
      %v648 = vpop.f32.mrb[0].mxu0
      %649 = vdwg.mxu0
      %v650 = vadd.f32 %v589, %v645
      %s651 = scalar_lea.vmem %s4, 80
      %v652 = vld [vmem:[%s651] sm:$0xf]
      %v653 = vld [vmem:[%s651 + $0x4] sm:$0xf]
      %v654 = vld [vmem:[%s651 + $0x8] sm:$0xf]
      %v655 = vld [vmem:[%s651 + $0xc] sm:$0xf]
      %v658 = vunpack.c.l.s4 1966171168
      %v659 = vunpack.c.0.s8 %v658
      %v660 = vlaneseq
      %v661 = vshrl.u32 %v660, 7
      %v662 = vsub.s32 %v659, %v661
      %v663 = vrot.slane %v327, %v662
      %v665 = vunpack.c.l.s4 1966171168
      %v666 = vunpack.c.0.s8 %v665
      %v667 = vlaneseq
      %v668 = vshrl.u32 %v667, 7
      %v669 = vsub.s32 %v666, %v668
      %v670 = vrot.slane %v663, %v669
      %v672 = vshrl.u32 %v670, 16
      %v678 = vunpack.c.l.b16 %v652
      %v679 = vunpack.c.l.b16 %v653
      %v680 = vunpack.c.l.b16 %v654
      %v681 = vunpack.c.l.b16 %v655
      %v682 = vpack.c.b16 %v679, %v678
      %v683 = vpack.c.b16 %v681, %v680
      %v687 = vsel %vm351, %v672, 0
      %689 = vmatprep.subr.bf16.mxu0 0
      %690 = vmatpush1.bf16.msra.mxu0 %v682
      %691 = vmatprep.subr.bf16.mxu0 0
      %692 = vmatpush1.bf16.msra.mxu0 %v683
      %693 = vmatprep.subr.bf16.mxu0 0
      %694 = vmatpush1.bf16.msra.mxu0 0
      %695 = vmatprep.subr.bf16.mxu0 0
      %696 = vmatpush1.bf16.msra.mxu0 0
      %697 = vmatprep.subr.bf16.mxu0 0
      %698 = vmatpush1.bf16.msra.mxu0 0
      %699 = vmatprep.subr.bf16.mxu0 0
      %700 = vmatpush1.bf16.msra.mxu0 0
      %701 = vmatprep.subr.bf16.mxu0 0
      %702 = vmatpush1.bf16.msra.mxu0 0
      %703 = vmatprep.subr.bf16.mxu0 0
      %704 = vmatpush1.bf16.msra.mxu0 0
      %705 = vmatprep.subr.bf16.mxu0 0
      %706 = vmatpush1.bf16.msra.mxu0 0
      %707 = vmatprep.subr.bf16.mxu0 0
      %708 = vmatpush1.bf16.msra.mxu0 0
      %709 = vmatprep.subr.bf16.mxu0 0
      %710 = vmatpush1.bf16.msra.mxu0 0
      %711 = vmatprep.subr.bf16.mxu0 0
      %712 = vmatpush1.bf16.msra.mxu0 0
      %713 = vmatprep.subr.bf16.mxu0 0
      %714 = vmatpush1.bf16.msra.mxu0 0
      %715 = vmatprep.subr.bf16.mxu0 0
      %716 = vmatpush1.bf16.msra.mxu0 0
      %717 = vmatprep.subr.bf16.mxu0 0
      %718 = vmatpush1.bf16.msra.mxu0 0
      %719 = vmatprep.subr.bf16.mxu0 0
      %720 = vmatpush1.bf16.msra.mxu0 0
      %721 = vmatprep.mubr.bf16.mxu0 0
      %722 = vmatmul.mubr.bf16.gmra.mrb[0].mxu0 %v687
      %v723 = vpop.f32.mrb[0].mxu0
      %v724 = vadd.f32 0.0, %v723
      %v725 = vpop.f32.mrb[0].mxu0
      %v726 = vpop.f32.mrb[0].mxu0
      %v727 = vpop.f32.mrb[0].mxu0
      %728 = vdwg.mxu0
      %v729 = vadd.f32 %v650, %v724
      %s730 = scalar_lea.vmem %s4, 96
      %v731 = vld [vmem:[%s730] sm:$0xf]
      %v732 = vld [vmem:[%s730 + $0x4] sm:$0xf]
      %v733 = vld [vmem:[%s730 + $0x8] sm:$0xf]
      %v734 = vld [vmem:[%s730 + $0xc] sm:$0xf]
      %v739 = vunpack.c.l.b16 %v731
      %v740 = vunpack.c.l.b16 %v732
      %v741 = vunpack.c.l.b16 %v733
      %v742 = vunpack.c.l.b16 %v734
      %v743 = vpack.c.b16 %v740, %v739
      %v744 = vpack.c.b16 %v742, %v741
      %v748 = vsel %vm351, %v323, 0
      %750 = vmatprep.subr.bf16.mxu0 0
      %751 = vmatpush1.bf16.msra.mxu0 %v743
      %752 = vmatprep.subr.bf16.mxu0 0
      %753 = vmatpush1.bf16.msra.mxu0 %v744
      %754 = vmatprep.subr.bf16.mxu0 0
      %755 = vmatpush1.bf16.msra.mxu0 0
      %756 = vmatprep.subr.bf16.mxu0 0
      %757 = vmatpush1.bf16.msra.mxu0 0
      %758 = vmatprep.subr.bf16.mxu0 0
      %759 = vmatpush1.bf16.msra.mxu0 0
      %760 = vmatprep.subr.bf16.mxu0 0
      %761 = vmatpush1.bf16.msra.mxu0 0
      %762 = vmatprep.subr.bf16.mxu0 0
      %763 = vmatpush1.bf16.msra.mxu0 0
      %764 = vmatprep.subr.bf16.mxu0 0
      %765 = vmatpush1.bf16.msra.mxu0 0
      %766 = vmatprep.subr.bf16.mxu0 0
      %767 = vmatpush1.bf16.msra.mxu0 0
      %768 = vmatprep.subr.bf16.mxu0 0
      %769 = vmatpush1.bf16.msra.mxu0 0
      %770 = vmatprep.subr.bf16.mxu0 0
      %771 = vmatpush1.bf16.msra.mxu0 0
      %772 = vmatprep.subr.bf16.mxu0 0
      %773 = vmatpush1.bf16.msra.mxu0 0
      %774 = vmatprep.subr.bf16.mxu0 0
      %775 = vmatpush1.bf16.msra.mxu0 0
      %776 = vmatprep.subr.bf16.mxu0 0
      %777 = vmatpush1.bf16.msra.mxu0 0
      %778 = vmatprep.subr.bf16.mxu0 0
      %779 = vmatpush1.bf16.msra.mxu0 0
      %780 = vmatprep.subr.bf16.mxu0 0
      %781 = vmatpush1.bf16.msra.mxu0 0
      %782 = vmatprep.mubr.bf16.mxu0 0
      %783 = vmatmul.mubr.bf16.gmra.mrb[0].mxu0 %v748
      %v784 = vpop.f32.mrb[0].mxu0
      %v785 = vadd.f32 0.0, %v784
      %v786 = vpop.f32.mrb[0].mxu0
      %v787 = vpop.f32.mrb[0].mxu0
      %v788 = vpop.f32.mrb[0].mxu0
      %789 = vdwg.mxu0
      %v790 = vadd.f32 %v729, %v785
      %s791 = scalar_lea.vmem %s4, 112
      %v792 = vld [vmem:[%s791] sm:$0xf]
      %v793 = vld [vmem:[%s791 + $0x4] sm:$0xf]
      %v794 = vld [vmem:[%s791 + $0x8] sm:$0xf]
      %v795 = vld [vmem:[%s791 + $0xc] sm:$0xf]
      %v800 = vunpack.c.l.b16 %v792
      %v801 = vunpack.c.l.b16 %v793
      %v802 = vunpack.c.l.b16 %v794
      %v803 = vunpack.c.l.b16 %v795
      %v804 = vpack.c.b16 %v801, %v800
      %v805 = vpack.c.b16 %v803, %v802
      %v809 = vsel %vm351, %v325, 0
      %811 = vmatprep.subr.bf16.mxu0 0
      %812 = vmatpush1.bf16.msra.mxu0 %v804
      %813 = vmatprep.subr.bf16.mxu0 0
      %814 = vmatpush1.bf16.msra.mxu0 %v805
      %815 = vmatprep.subr.bf16.mxu0 0
      %816 = vmatpush1.bf16.msra.mxu0 0
      %817 = vmatprep.subr.bf16.mxu0 0
      %818 = vmatpush1.bf16.msra.mxu0 0
      %819 = vmatprep.subr.bf16.mxu0 0
      %820 = vmatpush1.bf16.msra.mxu0 0
      %821 = vmatprep.subr.bf16.mxu0 0
      %822 = vmatpush1.bf16.msra.mxu0 0
      %823 = vmatprep.subr.bf16.mxu0 0
      %824 = vmatpush1.bf16.msra.mxu0 0
      %825 = vmatprep.subr.bf16.mxu0 0
      %826 = vmatpush1.bf16.msra.mxu0 0
      %827 = vmatprep.subr.bf16.mxu0 0
      %828 = vmatpush1.bf16.msra.mxu0 0
      %829 = vmatprep.subr.bf16.mxu0 0
      %830 = vmatpush1.bf16.msra.mxu0 0
      %831 = vmatprep.subr.bf16.mxu0 0
      %832 = vmatpush1.bf16.msra.mxu0 0
      %833 = vmatprep.subr.bf16.mxu0 0
      %834 = vmatpush1.bf16.msra.mxu0 0
      %835 = vmatprep.subr.bf16.mxu0 0
      %836 = vmatpush1.bf16.msra.mxu0 0
      %837 = vmatprep.subr.bf16.mxu0 0
      %838 = vmatpush1.bf16.msra.mxu0 0
      %839 = vmatprep.subr.bf16.mxu0 0
      %840 = vmatpush1.bf16.msra.mxu0 0
      %841 = vmatprep.subr.bf16.mxu0 0
      %842 = vmatpush1.bf16.msra.mxu0 0
      %843 = vmatprep.mubr.bf16.mxu0 0
      %844 = vmatmul.mubr.bf16.gmra.mrb[0].mxu0 %v809
      %v845 = vpop.f32.mrb[0].mxu0
      %v846 = vadd.f32 0.0, %v845
      %v847 = vpop.f32.mrb[0].mxu0
      %v848 = vpop.f32.mrb[0].mxu0
      %v849 = vpop.f32.mrb[0].mxu0
      %850 = vdwg.mxu0
      %v851 = vadd.f32 %v790, %v846
      %s852 = scalar_lea.vmem %s4, 128
      %v853 = vld [vmem:[%s852] sm:$0xf]
      %v854 = vld [vmem:[%s852 + $0x4] sm:$0xf]
      %v855 = vld [vmem:[%s852 + $0x8] sm:$0xf]
      %v856 = vld [vmem:[%s852 + $0xc] sm:$0xf]
      %v859 = vunpack.c.l.s4 1966171168
      %v860 = vunpack.c.0.s8 %v859
      %v861 = vlaneseq
      %v862 = vshrl.u32 %v861, 7
      %v863 = vsub.s32 %v860, %v862
      %v864 = vrot.slane %v323, %v863
      %v866 = vunpack.c.l.s4 1966171168
      %v867 = vunpack.c.0.s8 %v866
      %v868 = vlaneseq
      %v869 = vshrl.u32 %v868, 7
      %v870 = vsub.s32 %v867, %v869
      %v871 = vrot.slane %v864, %v870
      %v873 = vshrl.u32 %v871, 16
      %v879 = vunpack.c.l.b16 %v853
      %v880 = vunpack.c.l.b16 %v854
      %v881 = vunpack.c.l.b16 %v855
      %v882 = vunpack.c.l.b16 %v856
      %v883 = vpack.c.b16 %v880, %v879
      %v884 = vpack.c.b16 %v882, %v881
      %v888 = vsel %vm351, %v873, 0
      %890 = vmatprep.subr.bf16.mxu0 0
      %891 = vmatpush1.bf16.msra.mxu0 %v883
      %892 = vmatprep.subr.bf16.mxu0 0
      %893 = vmatpush1.bf16.msra.mxu0 %v884
      %894 = vmatprep.subr.bf16.mxu0 0
      %895 = vmatpush1.bf16.msra.mxu0 0
      %896 = vmatprep.subr.bf16.mxu0 0
      %897 = vmatpush1.bf16.msra.mxu0 0
      %898 = vmatprep.subr.bf16.mxu0 0
      %899 = vmatpush1.bf16.msra.mxu0 0
      %900 = vmatprep.subr.bf16.mxu0 0
      %901 = vmatpush1.bf16.msra.mxu0 0
      %902 = vmatprep.subr.bf16.mxu0 0
      %903 = vmatpush1.bf16.msra.mxu0 0
      %904 = vmatprep.subr.bf16.mxu0 0
      %905 = vmatpush1.bf16.msra.mxu0 0
      %906 = vmatprep.subr.bf16.mxu0 0
      %907 = vmatpush1.bf16.msra.mxu0 0
      %908 = vmatprep.subr.bf16.mxu0 0
      %909 = vmatpush1.bf16.msra.mxu0 0
      %910 = vmatprep.subr.bf16.mxu0 0
      %911 = vmatpush1.bf16.msra.mxu0 0
      %912 = vmatprep.subr.bf16.mxu0 0
      %913 = vmatpush1.bf16.msra.mxu0 0
      %914 = vmatprep.subr.bf16.mxu0 0
      %915 = vmatpush1.bf16.msra.mxu0 0
      %916 = vmatprep.subr.bf16.mxu0 0
      %917 = vmatpush1.bf16.msra.mxu0 0
      %918 = vmatprep.subr.bf16.mxu0 0
      %919 = vmatpush1.bf16.msra.mxu0 0
      %920 = vmatprep.subr.bf16.mxu0 0
      %921 = vmatpush1.bf16.msra.mxu0 0
      %922 = vmatprep.mubr.bf16.mxu0 0
      %923 = vmatmul.mubr.bf16.gmra.mrb[0].mxu0 %v888
      %v924 = vpop.f32.mrb[0].mxu0
      %v925 = vadd.f32 0.0, %v924
      %v926 = vpop.f32.mrb[0].mxu0
      %v927 = vpop.f32.mrb[0].mxu0
      %v928 = vpop.f32.mrb[0].mxu0
      %929 = vdwg.mxu0
      %v930 = vadd.f32 %v851, %v925
      %v931 = vld [vmem:[%s5] sm:$0x1]
      %v932 = vadd.f32 %v930, %v931
      %v933 = vmax.f32 %v932, 0.0
      %v934 = vpack.c.bf16 %v933, %v933
      %vm935 = vcmask 1040384
      %vm936 = vsmask.f32 256
      %vm937 = vmand %vm935, %vm936
      %v938 = vld [vmem:[%s315] sm:$0x1]
      %v939 = vsel %vm937, %v934, %v938
      %940 = vst [vmem:[%s315] sm:$0x1] %v939
      %p941 = scmp.lt.s32.totalorder %s21, 1
      %s942 = scalar_select %p941, %s21, 1
      %p943 = scmp.lt.s32.totalorder %s22, 0
      %s944 = scalar_select %p943, %s22, 0
      %s945 = sadd.s32 %s944, %s942
      %s946 = scalar_lea.vmem %s6, %s945
      // Predicated region
      $region45: #{_backbone_apply.7} parent=43 // pred_check
        %p947 = pneg %p195
      $region46: #{_backbone_apply.7} parent=43 // pred_check_branch
        %949 = sbr.rel (%p947) target = $region48
      $region47: #{_backbone_apply.7} parent=43 // pred_region
        _
      $region48: #{_backbone_apply.7} parent=43 // pred_fallthru
        _
    $region44: #{_backbone_apply.7} parent=5 // pred_fallthru
      _
    %p950 = scmp.le.s32.totalorder 2, %s12
    // Predicated region
    $region49: #{_backbone_apply.7} parent=5 // pred_check
      %p951 = pneg %p950
    $region50: #{_backbone_apply.7} parent=5 // pred_check_branch
      %953 = sbr.rel (%p951) target = $region52
    $region51: #{_backbone_apply.7} parent=5 // pred_region
      %s954 = ssub.s32 %s12, 2
      // Predicated region
      $region53: #{_backbone_apply.7} parent=51 // pred_check
        %p955 = pneg %p201
      $region54: #{_backbone_apply.7} parent=51 // pred_check_branch
        %957 = sbr.rel (%p955) target = $region56
      $region55: #{_backbone_apply.7} parent=51 // pred_region
        %p958 = scmp.lt.s32.totalorder %s23, 1
        %s959 = scalar_select %p958, %s23, 1
        %p960 = scmp.lt.s32.totalorder %s24, 0
        %s961 = scalar_select %p960, %s24, 0
        %s962 = sadd.s32 %s961, %s959
        %s963 = scalar_lea.vmem %s6, %s962
      $region56: #{_backbone_apply.7} parent=51 // pred_fallthru
        _
    $region52: #{_backbone_apply.7} parent=5 // pred_fallthru
      _
  $region6: #{_backbone_apply.7} parent=0 // loop_footer
    %s16 = sadd.s32 1, %s12
  $region7: #{_backbone_apply.7} parent=0 // loop_footer_branch
    %11 = sbr.rel target = $region3
  $region8: #{_backbone_apply.7} parent=0 // loop_exit
    _

</llo_original>
